<compile_context>
chip_gen: v6e
topology: v6e:2x2x1
jax: 0.10.0
libtpu: 0.0.40
codegen_flags: <defaults>
</compile_context>

<pallas_src>
import math

import jax
import jax.numpy as jnp
from jax.experimental import pallas as pl
from jax.experimental.pallas import tpu as pltpu

HIDDEN = 512
NEG_SLOPE = 0.01   # PyTorch F.leaky_relu default
ACTION_PAD = 8     # pad the tiny action K-dim to one sublane group


def _round_up(x, m):
    return ((x + m - 1) // m) * m


def _leaky(x):
    # Exactly equivalent to where(x > 0, x, slope*x) for 0 < slope < 1
    # (NaN propagation matches); one fewer VALU op per vreg.
    return jnp.maximum(x, NEG_SLOPE * x)


def _choose_tile_b(batch):
    """Batch tile: amortize the ~600-cycle grid-step overhead, cap at 512 rows
    (v5e scoped-VMEM / spill friendly), and keep >=2 grid steps for larger
    batches so v7x's two TensorCores both get work."""
    b8 = _round_up(batch, 8)
    if b8 < 256:
        return b8                                   # whole batch in one tile
    return min(512, _round_up((b8 + 1) // 2, 8))    # >=2 steps, <=512 rows


def critic_kernel(state_ref, action_ref,
                  w1_ref, b1_ref,
                  w2s_ref, w2a_ref, b2_ref,
                  w3_ref, b3_ref,
                  w4_ref, b4_ref,
                  out_ref):
    # ---- layer 1: xs = leaky_relu(state @ W1 + b1)   (bf16 MXU, f32 acc) ----
    xs = _leaky(
        jnp.dot(state_ref[...].astype(jnp.bfloat16), w1_ref[...],
                preferred_element_type=jnp.float32) + b1_ref[...]
    ).astype(jnp.bfloat16)            # bf16 store: halves spill ld/st bytes

    # ---- layer 2: x = leaky_relu(cat(xs, action) @ W2 + b2) ----
    # concat folded into split weights: cat(xs, a) @ W2 == xs @ W2s + a @ W2a.
    # The tiny-K action dot rides the (otherwise idle) MXU, not the VPU.
    acc = jnp.dot(xs, w2s_ref[...], preferred_element_type=jnp.float32)
    acc = acc + jnp.dot(action_ref[...].astype(jnp.bfloat16), w2a_ref[...],
                        preferred_element_type=jnp.float32)
    x = _leaky(acc + b2_ref[...]).astype(jnp.bfloat16)

    # ---- layer 3: x = leaky_relu(x @ W3 + b3) ----
    x = _leaky(jnp.dot(x, w3_ref[...], preferred_element_type=jnp.float32)
               + b3_ref[...])

    # ---- layer 4: out = x @ W4 + b4 as a VPU multiply + lane reduction ----
    out_ref[...] = (jnp.sum(x * w4_ref[...], axis=-1, keepdims=True)
                    + b4_ref[...])


def critic_forward(state, action, params, *, tile_b=None):
    B, S = state.shape
    A = action.shape[1]
    H = HIDDEN
    A_pad = params["w2a"].shape[0]

    if tile_b is None:
        tile_b = _choose_tile_b(B)

    # Pad batch up to a multiple of the tile (padded rows discarded) and pad
    # the action K-dim with zero columns to match the zero-padded w2a rows.
    Bp = _round_up(B, tile_b)
    state = jnp.pad(state, ((0, Bp - B), (0, 0)))
    action = jnp.pad(action, ((0, Bp - B), (0, A_pad - A)))

    args = (state, action,
            params["w1"], params["b1"],
            params["w2s"], params["w2a"], params["b2"],
            params["w3"], params["b3"],
            params["w4"], params["b4"])

    def const_spec(shape):
        # Weight-resident block: same block every grid step -> DMA'd once.
        return pl.BlockSpec(shape, lambda i: (0,) * len(shape))

    in_specs = [
        pl.BlockSpec((tile_b, S), lambda i: (i, 0)),       # state tile
        pl.BlockSpec((tile_b, A_pad), lambda i: (i, 0)),   # action tile (padded)
        const_spec((S, H)), const_spec((1, H)),            # w1 (bf16), b1
        const_spec((H, H)), const_spec((A_pad, H)),        # w2s, w2a (bf16)
        const_spec((1, H)),                                # b2
        const_spec((H, H)), const_spec((1, H)),            # w3 (bf16), b3
        const_spec((1, H)), const_spec((1, 1)),            # w4 row, b4
    ]
    out_specs = pl.BlockSpec((tile_b, 1), lambda i: (i, 0))

    flops = 2 * Bp * (S * H + H * H + A_pad * H + H * H + H)
    bytes_accessed = sum(int(a.size) * a.dtype.itemsize for a in args) + Bp * 4

    out = pl.pallas_call(
        critic_kernel,
        out_shape=jax.ShapeDtypeStruct((Bp, 1), jnp.float32),
        grid=(Bp // tile_b,),
        in_specs=in_specs,
        out_specs=out_specs,
        compiler_params=pltpu.CompilerParams(
            dimension_semantics=("parallel",)),   # v7x: shard tiles over both TCs
        cost_estimate=pl.CostEstimate(
            flops=int(flops), transcendentals=0,
            bytes_accessed=int(bytes_accessed)),
    )(*args)
    return out[:B]


def init_params(key, state_size, action_size):
    """Deterministic init mirroring Critic.reset_parameters shapes.

    PyTorch Linear weight is (out, in); we store the transpose (in, out).
    hidden_init uses weight.size(0) (== out_features) for the limit, which we
    reproduce faithfully; biases keep PyTorch's default U(-1/sqrt(in), 1/sqrt(in)).
    Big matmul weights are stored as bf16 (kernel accumulates in f32).
    """
    ks = jax.random.split(key, 8)

    def u(k, shape, lim):
        return jax.random.uniform(k, shape, jnp.float32, -lim, lim)

    lim_h = 1.0 / math.sqrt(HIDDEN)   # hidden_init limit (== out dim)

    w1 = u(ks[0], (state_size, HIDDEN), lim_h).astype(jnp.bfloat16)
    b1 = u(ks[1], (1, HIDDEN), 1.0 / math.sqrt(state_size))

    w2 = u(ks[2], (HIDDEN + action_size, HIDDEN), lim_h)
    b2 = u(ks[3], (1, HIDDEN), 1.0 / math.sqrt(HIDDEN + action_size))
    w2s = w2[:HIDDEN, :].astype(jnp.bfloat16)        # column split of fc2 (cat trick)
    w2a = jnp.pad(w2[HIDDEN:, :],                    # (A, H) -> (ACTION_PAD, H)
                  ((0, ACTION_PAD - action_size), (0, 0))).astype(jnp.bfloat16)

    w3 = u(ks[4], (HIDDEN, HIDDEN), lim_h).astype(jnp.bfloat16)
    b3 = u(ks[5], (1, HIDDEN), 1.0 / math.sqrt(HIDDEN))

    w4 = u(ks[6], (1, HIDDEN), 0.003)                # row vector (lane-dense VPU reduce)
    b4 = u(ks[7], (1, 1), 1.0 / math.sqrt(HIDDEN))

    return {"w1": w1, "b1": b1, "w2s": w2s, "w2a": w2a, "b2": b2,
            "w3": w3, "b3": b3, "w4": w4, "b4": b4}


def critic_reference(state, action, p):
    """Pure-JAX f32 reference of the PyTorch forward for verification."""
    A = action.shape[1]
    w1 = p["w1"].astype(jnp.float32)
    w2 = jnp.concatenate([p["w2s"].astype(jnp.float32),
                          p["w2a"].astype(jnp.float32)[:A]], axis=0)
    w3 = p["w3"].astype(jnp.float32)
    w4 = p["w4"].astype(jnp.float32)
    leaky = lambda x: jnp.where(x > 0, x, NEG_SLOPE * x)
    xs = leaky(state @ w1 + p["b1"])
    x = jnp.concatenate([xs, action], axis=1)
    x = leaky(x @ w2 + p["b2"])
    x = leaky(x @ w3 + p["b3"])
    return x @ w4.T + p["b4"]


if __name__ == "__main__":
    # Reacher env dims; batch chosen so the grid has 2 steps and needs padding.
    state_size, action_size, batch = 33, 4, 600

    key = jax.random.PRNGKey(0)
    kp, ks, ka = jax.random.split(key, 3)
    params = init_params(kp, state_size, action_size)
    state = jax.random.normal(ks, (batch, state_size), jnp.float32)
    action = jax.random.uniform(ka, (batch, action_size), jnp.float32, -1.0, 1.0)

    out = jax.block_until_ready(critic_forward(state, action, params))

    ref = critic_reference(state, action, params)
    assert out.shape == (batch, 1)
    # bf16 matmul inputs / bf16-stored activations (f32 accumulation) -> loosen
    # vs the pure-f32 reference.
    assert jnp.allclose(out, ref, atol=1e-2, rtol=1e-2), "mismatch vs JAX reference"

    print("KERNEL_OK")
</pallas_src>

<mosaic_0001>
module attributes {stable_mosaic.version = 11 : i64} {
  func.func @critic_kernel(%arg0: i32, %arg1: memref<304x33xf32, #tpu.memory_space<vmem>>, %arg2: memref<304x8xf32, #tpu.memory_space<vmem>>, %arg3: memref<33x512xbf16, #tpu.memory_space<vmem>>, %arg4: memref<1x512xf32, #tpu.memory_space<vmem>>, %arg5: memref<512x512xbf16, #tpu.memory_space<vmem>>, %arg6: memref<8x512xbf16, #tpu.memory_space<vmem>>, %arg7: memref<1x512xf32, #tpu.memory_space<vmem>>, %arg8: memref<512x512xbf16, #tpu.memory_space<vmem>>, %arg9: memref<1x512xf32, #tpu.memory_space<vmem>>, %arg10: memref<1x512xf32, #tpu.memory_space<vmem>>, %arg11: memref<1x1xf32, #tpu.memory_space<vmem>>, %arg12: memref<304x1xf32, #tpu.memory_space<vmem>>) attributes {dimension_semantics = [#tpu.dimension_semantics<parallel>], iteration_bounds = array<i64: 2>, scalar_prefetch = 0 : i64, scratch_operands = 0 : i64, tpu.core_type = #tpu.core_type<tc>, window_params = [{transform_indices = @transform_0, window_bounds = array<i64: 304, 33>}, {transform_indices = @transform_1, window_bounds = array<i64: 304, 8>}, {pipeline_mode = #tpu.pipeline_mode<synchronous>, transform_indices = @transform_2, window_bounds = array<i64: 33, 512>}, {pipeline_mode = #tpu.pipeline_mode<synchronous>, transform_indices = @transform_3, window_bounds = array<i64: 1, 512>}, {pipeline_mode = #tpu.pipeline_mode<synchronous>, transform_indices = @transform_4, window_bounds = array<i64: 512, 512>}, {pipeline_mode = #tpu.pipeline_mode<synchronous>, transform_indices = @transform_5, window_bounds = array<i64: 8, 512>}, {pipeline_mode = #tpu.pipeline_mode<synchronous>, transform_indices = @transform_6, window_bounds = array<i64: 1, 512>}, {pipeline_mode = #tpu.pipeline_mode<synchronous>, transform_indices = @transform_7, window_bounds = array<i64: 512, 512>}, {pipeline_mode = #tpu.pipeline_mode<synchronous>, transform_indices = @transform_8, window_bounds = array<i64: 1, 512>}, {pipeline_mode = #tpu.pipeline_mode<synchronous>, transform_indices = @transform_9, window_bounds = array<i64: 1, 512>}, {pipeline_mode = #tpu.pipeline_mode<synchronous>, transform_indices = @transform_10, window_bounds = array<i64: 1, 1>}, {transform_indices = @transform_11, window_bounds = array<i64: 304, 1>}]} {
    %c0 = arith.constant 0 : index
    %c0_0 = arith.constant 0 : index
    %0 = vector.load %arg1[%c0, %c0_0] : memref<304x33xf32, #tpu.memory_space<vmem>>, vector<304x33xf32>
    %1 = arith.truncf %0 : vector<304x33xf32> to vector<304x33xbf16>
    %c0_1 = arith.constant 0 : index
    %c0_2 = arith.constant 0 : index
    %2 = vector.load %arg3[%c0_1, %c0_2] : memref<33x512xbf16, #tpu.memory_space<vmem>>, vector<33x512xbf16>
    %cst = arith.constant dense<0.000000e+00> : vector<304x512xf32>
    %3 = tpu.matmul %1, %2, %cst {dimension_numbers = #tpu.dot_dimension_numbers<[1], [0], [0], [1], [0, 0, 1, 1], [], []>} : vector<304x33xbf16>, vector<33x512xbf16>, vector<304x512xf32> -> vector<304x512xf32>
    %c0_3 = arith.constant 0 : index
    %c0_4 = arith.constant 0 : index
    %4 = vector.load %arg4[%c0_3, %c0_4] : memref<1x512xf32, #tpu.memory_space<vmem>>, vector<1x512xf32>
    %5 = vector.broadcast %4 : vector<1x512xf32> to vector<304x512xf32>
    %6 = arith.addf %3, %5 : vector<304x512xf32>
    %cst_5 = arith.constant 0.00999999977 : f32
    %7 = vector.broadcast %cst_5 : f32 to vector<304x512xf32>
    %8 = arith.mulf %7, %6 : vector<304x512xf32>
    %9 = arith.maximumf %6, %8 : vector<304x512xf32>
    %10 = arith.truncf %9 : vector<304x512xf32> to vector<304x512xbf16>
    %c0_6 = arith.constant 0 : index
    %c0_7 = arith.constant 0 : index
    %11 = vector.load %arg5[%c0_6, %c0_7] : memref<512x512xbf16, #tpu.memory_space<vmem>>, vector<512x512xbf16>
    %cst_8 = arith.constant dense<0.000000e+00> : vector<304x512xf32>
    %12 = tpu.matmul %10, %11, %cst_8 {dimension_numbers = #tpu.dot_dimension_numbers<[1], [0], [0], [1], [0, 0, 1, 1], [], []>} : vector<304x512xbf16>, vector<512x512xbf16>, vector<304x512xf32> -> vector<304x512xf32>
    %c0_9 = arith.constant 0 : index
    %c0_10 = arith.constant 0 : index
    %13 = vector.load %arg2[%c0_9, %c0_10] : memref<304x8xf32, #tpu.memory_space<vmem>>, vector<304x8xf32>
    %14 = arith.truncf %13 : vector<304x8xf32> to vector<304x8xbf16>
    %c0_11 = arith.constant 0 : index
    %c0_12 = arith.constant 0 : index
    %15 = vector.load %arg6[%c0_11, %c0_12] : memref<8x512xbf16, #tpu.memory_space<vmem>>, vector<8x512xbf16>
    %cst_13 = arith.constant dense<0.000000e+00> : vector<304x512xf32>
    %16 = tpu.matmul %14, %15, %cst_13 {dimension_numbers = #tpu.dot_dimension_numbers<[1], [0], [0], [1], [0, 0, 1, 1], [], []>} : vector<304x8xbf16>, vector<8x512xbf16>, vector<304x512xf32> -> vector<304x512xf32>
    %17 = arith.addf %12, %16 : vector<304x512xf32>
    %c0_14 = arith.constant 0 : index
    %c0_15 = arith.constant 0 : index
    %18 = vector.load %arg7[%c0_14, %c0_15] : memref<1x512xf32, #tpu.memory_space<vmem>>, vector<1x512xf32>
    %19 = vector.broadcast %18 : vector<1x512xf32> to vector<304x512xf32>
    %20 = arith.addf %17, %19 : vector<304x512xf32>
    %cst_16 = arith.constant 0.00999999977 : f32
    %21 = vector.broadcast %cst_16 : f32 to vector<304x512xf32>
    %22 = arith.mulf %21, %20 : vector<304x512xf32>
    %23 = arith.maximumf %20, %22 : vector<304x512xf32>
    %24 = arith.truncf %23 : vector<304x512xf32> to vector<304x512xbf16>
    %c0_17 = arith.constant 0 : index
    %c0_18 = arith.constant 0 : index
    %25 = vector.load %arg8[%c0_17, %c0_18] : memref<512x512xbf16, #tpu.memory_space<vmem>>, vector<512x512xbf16>
    %cst_19 = arith.constant dense<0.000000e+00> : vector<304x512xf32>
    %26 = tpu.matmul %24, %25, %cst_19 {dimension_numbers = #tpu.dot_dimension_numbers<[1], [0], [0], [1], [0, 0, 1, 1], [], []>} : vector<304x512xbf16>, vector<512x512xbf16>, vector<304x512xf32> -> vector<304x512xf32>
    %c0_20 = arith.constant 0 : index
    %c0_21 = arith.constant 0 : index
    %27 = vector.load %arg9[%c0_20, %c0_21] : memref<1x512xf32, #tpu.memory_space<vmem>>, vector<1x512xf32>
    %28 = vector.broadcast %27 : vector<1x512xf32> to vector<304x512xf32>
    %29 = arith.addf %26, %28 : vector<304x512xf32>
    %cst_22 = arith.constant 0.00999999977 : f32
    %30 = vector.broadcast %cst_22 : f32 to vector<304x512xf32>
    %31 = arith.mulf %30, %29 : vector<304x512xf32>
    %32 = arith.maximumf %29, %31 : vector<304x512xf32>
    %c0_23 = arith.constant 0 : index
    %c0_24 = arith.constant 0 : index
    %33 = vector.load %arg10[%c0_23, %c0_24] : memref<1x512xf32, #tpu.memory_space<vmem>>, vector<1x512xf32>
    %34 = vector.broadcast %33 : vector<1x512xf32> to vector<304x512xf32>
    %35 = arith.mulf %32, %34 : vector<304x512xf32>
    %cst_25 = arith.constant dense<0.000000e+00> : vector<304xf32>
    %36 = vector.multi_reduction <add>, %35, %cst_25 [1] : vector<304x512xf32> to vector<304xf32>
    %37 = vector.shape_cast %36 : vector<304xf32> to vector<304x1xf32>
    %c0_26 = arith.constant 0 : index
    %c0_27 = arith.constant 0 : index
    %38 = vector.load %arg11[%c0_26, %c0_27] : memref<1x1xf32, #tpu.memory_space<vmem>>, vector<1x1xf32>
    %39 = vector.broadcast %38 : vector<1x1xf32> to vector<304x1xf32>
    %40 = arith.addf %37, %39 : vector<304x1xf32>
    %c0_28 = arith.constant 0 : index
    %c0_29 = arith.constant 0 : index
    %41 = vector.load %arg12[%c0_28, %c0_29] : memref<304x1xf32, #tpu.memory_space<vmem>>, vector<304x1xf32>
    tpu.vector_store %arg12[%c0_28, %c0_29], %40 {strides = array<i32>} : memref<304x1xf32, #tpu.memory_space<vmem>>, vector<304x1xf32>,
    return
  }
  func.func @transform_0(%arg0: i32) -> (i32, i32) {
    %c0_i32 = arith.constant 0 : i32
    %c0_i32_0 = arith.constant 0 : i32
    return %arg0, %c0_i32 : i32, i32
  }
  func.func @transform_1(%arg0: i32) -> (i32, i32) {
    %c0_i32 = arith.constant 0 : i32
    %c0_i32_0 = arith.constant 0 : i32
    return %arg0, %c0_i32 : i32, i32
  }
  func.func @transform_2(%arg0: i32) -> (i32, i32) {
    %c0_i32 = arith.constant 0 : i32
    %c0_i32_0 = arith.constant 0 : i32
    %c0_i32_1 = arith.constant 0 : i32
    return %c0_i32, %c0_i32_0 : i32, i32
  }
  func.func @transform_3(%arg0: i32) -> (i32, i32) {
    %c0_i32 = arith.constant 0 : i32
    %c0_i32_0 = arith.constant 0 : i32
    %c0_i32_1 = arith.constant 0 : i32
    return %c0_i32, %c0_i32_0 : i32, i32
  }
  func.func @transform_4(%arg0: i32) -> (i32, i32) {
    %c0_i32 = arith.constant 0 : i32
    %c0_i32_0 = arith.constant 0 : i32
    %c0_i32_1 = arith.constant 0 : i32
    return %c0_i32, %c0_i32_0 : i32, i32
  }
  func.func @transform_5(%arg0: i32) -> (i32, i32) {
    %c0_i32 = arith.constant 0 : i32
    %c0_i32_0 = arith.constant 0 : i32
    %c0_i32_1 = arith.constant 0 : i32
    return %c0_i32, %c0_i32_0 : i32, i32
  }
  func.func @transform_6(%arg0: i32) -> (i32, i32) {
    %c0_i32 = arith.constant 0 : i32
    %c0_i32_0 = arith.constant 0 : i32
    %c0_i32_1 = arith.constant 0 : i32
    return %c0_i32, %c0_i32_0 : i32, i32
  }
  func.func @transform_7(%arg0: i32) -> (i32, i32) {
    %c0_i32 = arith.constant 0 : i32
    %c0_i32_0 = arith.constant 0 : i32
    %c0_i32_1 = arith.constant 0 : i32
    return %c0_i32, %c0_i32_0 : i32, i32
  }
  func.func @transform_8(%arg0: i32) -> (i32, i32) {
    %c0_i32 = arith.constant 0 : i32
    %c0_i32_0 = arith.constant 0 : i32
    %c0_i32_1 = arith.constant 0 : i32
    return %c0_i32, %c0_i32_0 : i32, i32
  }
  func.func @transform_9(%arg0: i32) -> (i32, i32) {
    %c0_i32 = arith.constant 0 : i32
    %c0_i32_0 = arith.constant 0 : i32
    %c0_i32_1 = arith.constant 0 : i32
    return %c0_i32, %c0_i32_0 : i32, i32
  }
  func.func @transform_10(%arg0: i32) -> (i32, i32) {
    %c0_i32 = arith.constant 0 : i32
    %c0_i32_0 = arith.constant 0 : i32
    %c0_i32_1 = arith.constant 0 : i32
    return %c0_i32, %c0_i32_0 : i32, i32
  }
  func.func @transform_11(%arg0: i32) -> (i32, i32) {
    %c0_i32 = arith.constant 0 : i32
    %c0_i32_0 = arith.constant 0 : i32
    return %arg0, %c0_i32 : i32, i32
  }
}

</mosaic_0001>

<llo_original>
// kernel: tpu_custom_call.1
$region0: #{tpu_custom_call.1}
  #allocation0 [shape = 'u32[]', space=smem, size = 0x4, offset = 0x4, fixed_abs, tag = 'smem constant byte address 0x4 - core index']
  #allocation1 [shape = 'u32[144,128]{1,0:T(1,128)}', space=vmem, size = 0x12000, scoped, tag = 'internal scratch']
  #allocation2 [shape = 'f32[1,1]{1,0:T(1,128)S(1)}', space=vmem, size = 0x200, scoped, tag = 'scoped memory for tpu_custom_call.1']
  %s0 = inlined_call_operand.vmem [shape: f32[608,33], index: 0, kind: input, shape index: {}]
  %s1 = inlined_call_operand.vmem [shape: f32[608,8], index: 1, kind: input, shape index: {}]
  %s2 = inlined_call_operand.vmem [shape: bf16[33,512], index: 2, kind: input, shape index: {}]
  %s3 = inlined_call_operand.vmem [shape: f32[1,512], index: 3, kind: input, shape index: {}]
  %s4 = inlined_call_operand.vmem [shape: bf16[512,512], index: 4, kind: input, shape index: {}]
  %s5 = inlined_call_operand.vmem [shape: bf16[8,512], index: 5, kind: input, shape index: {}]
  %s6 = inlined_call_operand.vmem [shape: f32[1,512], index: 6, kind: input, shape index: {}]
  %s7 = inlined_call_operand.hbm [shape: bf16[512,512], index: 7, kind: input, shape index: {}]
  %s8 = inlined_call_operand.vmem [shape: f32[1,512], index: 8, kind: input, shape index: {}]
  %s9 = inlined_call_operand.vmem [shape: f32[1,512], index: 9, kind: input, shape index: {}]
  %s10 = inlined_call_operand.<no memory space> [shape: f32[1,1], index: 10, kind: input, shape index: {}]
  %s11 = inlined_call_operand.vmem [shape: f32[608,1], index: 11, kind: output, shape index: {}]
  %s12 = sld [smem:[#allocation0]]
  $region81: #{tpu_custom_call.1} parent=0
    _
  %s14 = ssub.s32 1, %s12
  %s15 = scalar_select 0, %s14, %s12
  %v16 = vstv %s10
  %17 = vst [vmem:[#allocation2] sm:$0x1] %v16
  $region1: #{tpu_custom_call.1} parent=0
    #allocation3 [shape = 'u8[524288]{0}', space=vmem, size = 0x80000, scoped, tag = 'input window, operand 7, single buffered']
    #allocation4 [shape = 's32[2]{0}', space=sflag, size = 0x8, scoped, tag = 'scoped memory for tpu_custom_call.1']
    %18 = vsyncpa [#allocation4], 0
    loop: start=0, step=1, limit=4
    $region2: #{tpu_custom_call.1} parent=1 // loop_pre_header
      _
    $region3: #{tpu_custom_call.1} parent=1 // loop_header
      %s20 = sphi 0, %s24
      %p21 = scmp.ge.s32.totalorder %s20, 4
      %s30 = sphi 0, %s32
      %s33 = sphi 0, %s30
      %s34 = sphi 0, %s33
      %s50 = sphi 0, %s34
      %s56 = sphi 0, %s58
      %s59 = sphi 0, %s56
      %s60 = sphi 0, %s59
      %s76 = sphi 0, %s60
      %s80 = sphi 0, %s80
      %s82 = sphi 0, %s80
      %s83 = sphi 0, %s82
      %s97 = sphi 0, %s83
      %s101 = sphi 0, %s101
      %s103 = sphi 0, %s101
      %s104 = sphi 0, %s103
      %s118 = sphi 0, %s104
      %s122 = sphi 0, %s122
      %s124 = sphi 0, %s122
      %s125 = sphi 0, %s124
      %s139 = sphi 0, %s125
      %s143 = sphi 0, %s143
      %s145 = sphi 0, %s143
      %s146 = sphi 0, %s145
      %s160 = sphi 0, %s146
      %s164 = sphi 0, %s164
      %s166 = sphi 0, %s164
      %s167 = sphi 0, %s166
      %s181 = sphi 0, %s167
      %s185 = sphi 0, %s185
      %s187 = sphi 0, %s185
      %s188 = sphi 0, %s187
      %s202 = sphi 0, %s188
      %s206 = sphi 0, %s206
      %s208 = sphi 0, %s206
      %s209 = sphi 0, %s208
      %s223 = sphi 0, %s209
      %s227 = sphi 0, %s227
      %s229 = sphi 0, %s227
      %s230 = sphi 0, %s229
      %s244 = sphi 0, %s230
      %s248 = sphi 0, %s248
      %s250 = sphi 0, %s248
      %s251 = sphi 0, %s250
      %s265 = sphi 0, %s251
      %s271 = sphi 0, %s273
      %s274 = sphi 0, %s271
      %s275 = sphi 0, %s274
      %s291 = sphi 0, %s275
    $region4: #{tpu_custom_call.1} parent=1 // loop_header_branch
      %23 = sbr.rel (%p21) target = $region8
    $region5: #{tpu_custom_call.1} parent=1 // loop_body
      %s25 = ssub.s32 %s20, 1
      %s26 = ssub.s32 %s20, 2
      %s27 = sadd.s32 %s20, 1
      %s28 = ssub.s32 %s20, %s27
      %p29 = scmp.eq.s32.totalorder %s28, 0
      %s31 = sadd.s32 %s30, 1
      %s32 = scalar_select %p29, %s30, %s31
      %p35 = pneg %p29
      %p36 = scmp.eq.s32.totalorder %s20, 1
      %p37 = por %p35, %p36
      %p38 = scmp.ne.s32.totalorder %s30, %s33
      %p39 = scmp.eq.s32.totalorder %s20, 0
      %p40 = por %p38, %p39
      %p41 = scmp.ne.s32.totalorder %s30, %s33
      %p42 = scmp.eq.s32.totalorder %s25, 1
      %p43 = por %p41, %p42
      %p44 = scmp.ne.s32.totalorder %s33, %s34
      %p45 = scmp.eq.s32.totalorder %s25, 0
      %p46 = por %p44, %p45
      %p47 = scmp.ne.s32.totalorder %s33, %s34
      %p48 = scmp.eq.s32.totalorder %s26, 1
      %p49 = por %p47, %p48
      %p51 = scmp.ne.s32.totalorder %s34, %s50
      %p52 = scmp.eq.s32.totalorder %s26, 0
      %p53 = por %p51, %p52
      %s54 = ssub.s32 %s20, %s27
      %p55 = scmp.eq.s32.totalorder %s54, 0
      %s57 = sadd.s32 %s56, 1
      %s58 = scalar_select %p55, %s56, %s57
      %p61 = pneg %p55
      %p62 = scmp.eq.s32.totalorder %s20, 1
      %p63 = por %p61, %p62
      %p64 = scmp.ne.s32.totalorder %s56, %s59
      %p65 = scmp.eq.s32.totalorder %s20, 0
      %p66 = por %p64, %p65
      %p67 = scmp.ne.s32.totalorder %s56, %s59
      %p68 = scmp.eq.s32.totalorder %s25, 1
      %p69 = por %p67, %p68
      %p70 = scmp.ne.s32.totalorder %s59, %s60
      %p71 = scmp.eq.s32.totalorder %s25, 0
      %p72 = por %p70, %p71
      %p73 = scmp.ne.s32.totalorder %s59, %s60
      %p74 = scmp.eq.s32.totalorder %s26, 1
      %p75 = por %p73, %p74
      %p77 = scmp.ne.s32.totalorder %s60, %s76
      %p78 = scmp.eq.s32.totalorder %s26, 0
      %p79 = por %p77, %p78
      %s81 = sadd.s32 %s80, 1
      %p84 = scmp.eq.s32.totalorder %s20, 1
      %p85 = scmp.ne.s32.totalorder %s80, %s82
      %p86 = scmp.eq.s32.totalorder %s20, 0
      %p87 = por %p85, %p86
      %p88 = scmp.ne.s32.totalorder %s80, %s82
      %p89 = scmp.eq.s32.totalorder %s25, 1
      %p90 = por %p88, %p89
      %p91 = scmp.ne.s32.totalorder %s82, %s83
      %p92 = scmp.eq.s32.totalorder %s25, 0
      %p93 = por %p91, %p92
      %p94 = scmp.ne.s32.totalorder %s82, %s83
      %p95 = scmp.eq.s32.totalorder %s26, 1
      %p96 = por %p94, %p95
      %p98 = scmp.ne.s32.totalorder %s83, %s97
      %p99 = scmp.eq.s32.totalorder %s26, 0
      %p100 = por %p98, %p99
      %s102 = sadd.s32 %s101, 1
      %p105 = scmp.eq.s32.totalorder %s20, 1
      %p106 = scmp.ne.s32.totalorder %s101, %s103
      %p107 = scmp.eq.s32.totalorder %s20, 0
      %p108 = por %p106, %p107
      %p109 = scmp.ne.s32.totalorder %s101, %s103
      %p110 = scmp.eq.s32.totalorder %s25, 1
      %p111 = por %p109, %p110
      %p112 = scmp.ne.s32.totalorder %s103, %s104
      %p113 = scmp.eq.s32.totalorder %s25, 0
      %p114 = por %p112, %p113
      %p115 = scmp.ne.s32.totalorder %s103, %s104
      %p116 = scmp.eq.s32.totalorder %s26, 1
      %p117 = por %p115, %p116
      %p119 = scmp.ne.s32.totalorder %s104, %s118
      %p120 = scmp.eq.s32.totalorder %s26, 0
      %p121 = por %p119, %p120
      %s123 = sadd.s32 %s122, 1
      %p126 = scmp.eq.s32.totalorder %s20, 1
      %p127 = scmp.ne.s32.totalorder %s122, %s124
      %p128 = scmp.eq.s32.totalorder %s20, 0
      %p129 = por %p127, %p128
      %p130 = scmp.ne.s32.totalorder %s122, %s124
      %p131 = scmp.eq.s32.totalorder %s25, 1
      %p132 = por %p130, %p131
      %p133 = scmp.ne.s32.totalorder %s124, %s125
      %p134 = scmp.eq.s32.totalorder %s25, 0
      %p135 = por %p133, %p134
      %p136 = scmp.ne.s32.totalorder %s124, %s125
      %p137 = scmp.eq.s32.totalorder %s26, 1
      %p138 = por %p136, %p137
      %p140 = scmp.ne.s32.totalorder %s125, %s139
      %p141 = scmp.eq.s32.totalorder %s26, 0
      %p142 = por %p140, %p141
      %s144 = sadd.s32 %s143, 1
      %p147 = scmp.eq.s32.totalorder %s20, 1
      %p148 = scmp.ne.s32.totalorder %s143, %s145
      %p149 = scmp.eq.s32.totalorder %s20, 0
      %p150 = por %p148, %p149
      %p151 = scmp.ne.s32.totalorder %s143, %s145
      %p152 = scmp.eq.s32.totalorder %s25, 1
      %p153 = por %p151, %p152
      %p154 = scmp.ne.s32.totalorder %s145, %s146
      %p155 = scmp.eq.s32.totalorder %s25, 0
      %p156 = por %p154, %p155
      %p157 = scmp.ne.s32.totalorder %s145, %s146
      %p158 = scmp.eq.s32.totalorder %s26, 1
      %p159 = por %p157, %p158
      %p161 = scmp.ne.s32.totalorder %s146, %s160
      %p162 = scmp.eq.s32.totalorder %s26, 0
      %p163 = por %p161, %p162
      %s165 = sadd.s32 %s164, 1
      %p168 = scmp.eq.s32.totalorder %s20, 1
      %p169 = scmp.ne.s32.totalorder %s164, %s166
      %p170 = scmp.eq.s32.totalorder %s20, 0
      %p171 = por %p169, %p170
      %p172 = scmp.ne.s32.totalorder %s164, %s166
      %p173 = scmp.eq.s32.totalorder %s25, 1
      %p174 = por %p172, %p173
      %p175 = scmp.ne.s32.totalorder %s166, %s167
      %p176 = scmp.eq.s32.totalorder %s25, 0
      %p177 = por %p175, %p176
      %p178 = scmp.ne.s32.totalorder %s166, %s167
      %p179 = scmp.eq.s32.totalorder %s26, 1
      %p180 = por %p178, %p179
      %p182 = scmp.ne.s32.totalorder %s167, %s181
      %p183 = scmp.eq.s32.totalorder %s26, 0
      %p184 = por %p182, %p183
      %s186 = sadd.s32 %s185, 1
      %p189 = scmp.eq.s32.totalorder %s20, 1
      %p190 = scmp.ne.s32.totalorder %s185, %s187
      %p191 = scmp.eq.s32.totalorder %s20, 0
      %p192 = por %p190, %p191
      %p193 = scmp.ne.s32.totalorder %s185, %s187
      %p194 = scmp.eq.s32.totalorder %s25, 1
      %p195 = por %p193, %p194
      %p196 = scmp.ne.s32.totalorder %s187, %s188
      %p197 = scmp.eq.s32.totalorder %s25, 0
      %p198 = por %p196, %p197
      %p199 = scmp.ne.s32.totalorder %s187, %s188
      %p200 = scmp.eq.s32.totalorder %s26, 1
      %p201 = por %p199, %p200
      %p203 = scmp.ne.s32.totalorder %s188, %s202
      %p204 = scmp.eq.s32.totalorder %s26, 0
      %p205 = por %p203, %p204
      %s207 = sadd.s32 %s206, 1
      %p210 = scmp.eq.s32.totalorder %s20, 1
      %p211 = scmp.ne.s32.totalorder %s206, %s208
      %p212 = scmp.eq.s32.totalorder %s20, 0
      %p213 = por %p211, %p212
      %p214 = scmp.ne.s32.totalorder %s206, %s208
      %p215 = scmp.eq.s32.totalorder %s25, 1
      %p216 = por %p214, %p215
      %p217 = scmp.ne.s32.totalorder %s208, %s209
      %p218 = scmp.eq.s32.totalorder %s25, 0
      %p219 = por %p217, %p218
      %p220 = scmp.ne.s32.totalorder %s208, %s209
      %p221 = scmp.eq.s32.totalorder %s26, 1
      %p222 = por %p220, %p221
      %p224 = scmp.ne.s32.totalorder %s209, %s223
      %p225 = scmp.eq.s32.totalorder %s26, 0
      %p226 = por %p224, %p225
      %s228 = sadd.s32 %s227, 1
      %p231 = scmp.eq.s32.totalorder %s20, 1
      %p232 = scmp.ne.s32.totalorder %s227, %s229
      %p233 = scmp.eq.s32.totalorder %s20, 0
      %p234 = por %p232, %p233
      %p235 = scmp.ne.s32.totalorder %s227, %s229
      %p236 = scmp.eq.s32.totalorder %s25, 1
      %p237 = por %p235, %p236
      %p238 = scmp.ne.s32.totalorder %s229, %s230
      %p239 = scmp.eq.s32.totalorder %s25, 0
      %p240 = por %p238, %p239
      %p241 = scmp.ne.s32.totalorder %s229, %s230
      %p242 = scmp.eq.s32.totalorder %s26, 1
      %p243 = por %p241, %p242
      %p245 = scmp.ne.s32.totalorder %s230, %s244
      %p246 = scmp.eq.s32.totalorder %s26, 0
      %p247 = por %p245, %p246
      %s249 = sadd.s32 %s248, 1
      %p252 = scmp.eq.s32.totalorder %s20, 1
      %p253 = scmp.ne.s32.totalorder %s248, %s250
      %p254 = scmp.eq.s32.totalorder %s20, 0
      %p255 = por %p253, %p254
      %p256 = scmp.ne.s32.totalorder %s248, %s250
      %p257 = scmp.eq.s32.totalorder %s25, 1
      %p258 = por %p256, %p257
      %p259 = scmp.ne.s32.totalorder %s250, %s251
      %p260 = scmp.eq.s32.totalorder %s25, 0
      %p261 = por %p259, %p260
      %p262 = scmp.ne.s32.totalorder %s250, %s251
      %p263 = scmp.eq.s32.totalorder %s26, 1
      %p264 = por %p262, %p263
      %p266 = scmp.ne.s32.totalorder %s251, %s265
      %p267 = scmp.eq.s32.totalorder %s26, 0
      %p268 = por %p266, %p267
      %s269 = ssub.s32 %s20, %s27
      %p270 = scmp.eq.s32.totalorder %s269, 0
      %s272 = sadd.s32 %s271, 1
      %s273 = scalar_select %p270, %s271, %s272
      %p276 = pneg %p270
      %p277 = scmp.eq.s32.totalorder %s20, 1
      %p278 = por %p276, %p277
      %p279 = scmp.ne.s32.totalorder %s271, %s274
      %p280 = scmp.eq.s32.totalorder %s20, 0
      %p281 = por %p279, %p280
      %p282 = scmp.ne.s32.totalorder %s271, %s274
      %p283 = scmp.eq.s32.totalorder %s25, 1
      %p284 = por %p282, %p283
      %p285 = scmp.ne.s32.totalorder %s274, %s275
      %p286 = scmp.eq.s32.totalorder %s25, 0
      %p287 = por %p285, %p286
      %p288 = scmp.ne.s32.totalorder %s274, %s275
      %p289 = scmp.eq.s32.totalorder %s26, 1
      %p290 = por %p288, %p289
      %p292 = scmp.ne.s32.totalorder %s275, %s291
      %p293 = scmp.eq.s32.totalorder %s26, 0
      %p294 = por %p292, %p293
      %p295 = scmp.le.s32.totalorder 1, %s20
      %p296 = scmp.lt.s32.totalorder %s20, 3
      %p297 = pnand %p295, %p296
      %p298 = pneg %p297
      // Predicated region
      $region9: #{tpu_custom_call.1} parent=5 // pred_check
        _
      $region10: #{tpu_custom_call.1} parent=5 // pred_check_branch
        %300 = sbr.rel (%p297) target = $region12
      $region11: #{tpu_custom_call.1} parent=5 // pred_region
        %s301 = ssub.s32 %s20, 1
        // Predicated region
        $region13: #{tpu_custom_call.1} parent=11 // pred_check
          %p302 = pneg %p93
        $region14: #{tpu_custom_call.1} parent=11 // pred_check_branch
          %304 = sbr.rel (%p302) target = $region16
        $region15: #{tpu_custom_call.1} parent=11 // pred_region
          _
        $region16: #{tpu_custom_call.1} parent=11 // pred_fallthru
          _
        // Predicated region
        $region17: #{tpu_custom_call.1} parent=11 // pred_check
          %p305 = pneg %p114
        $region18: #{tpu_custom_call.1} parent=11 // pred_check_branch
          %307 = sbr.rel (%p305) target = $region20
        $region19: #{tpu_custom_call.1} parent=11 // pred_region
          _
        $region20: #{tpu_custom_call.1} parent=11 // pred_fallthru
          _
        // Predicated region
        $region21: #{tpu_custom_call.1} parent=11 // pred_check
          %p308 = pneg %p135
        $region22: #{tpu_custom_call.1} parent=11 // pred_check_branch
          %310 = sbr.rel (%p308) target = $region24
        $region23: #{tpu_custom_call.1} parent=11 // pred_region
          _
        $region24: #{tpu_custom_call.1} parent=11 // pred_fallthru
          _
        // Predicated region
        $region25: #{tpu_custom_call.1} parent=11 // pred_check
          %p311 = pneg %p156
        $region26: #{tpu_custom_call.1} parent=11 // pred_check_branch
          %313 = sbr.rel (%p311) target = $region28
        $region27: #{tpu_custom_call.1} parent=11 // pred_region
          _
        $region28: #{tpu_custom_call.1} parent=11 // pred_fallthru
          _
        // Predicated region
        $region29: #{tpu_custom_call.1} parent=11 // pred_check
          %p314 = pneg %p177
        $region30: #{tpu_custom_call.1} parent=11 // pred_check_branch
          %316 = sbr.rel (%p314) target = $region32
        $region31: #{tpu_custom_call.1} parent=11 // pred_region
          _
        $region32: #{tpu_custom_call.1} parent=11 // pred_fallthru
          _
        // Predicated region
        $region33: #{tpu_custom_call.1} parent=11 // pred_check
          %p317 = pneg %p198
        $region34: #{tpu_custom_call.1} parent=11 // pred_check_branch
          %319 = sbr.rel (%p317) target = $region36
        $region35: #{tpu_custom_call.1} parent=11 // pred_region
          %s321 = ssub.s32 16384, 16384
          %322 = vsyncadd [#allocation4], %s321
          %s323 = sshll.u32 [#allocation3], 4
          %s324 = int_to_ptr.vmem [resolvable:$true] %s323
          %329 = dma.hbm_to_vmem [thread:$0]  %s7, 16384, %s324, [#allocation4], 256, 256, 16
        $region36: #{tpu_custom_call.1} parent=11 // pred_fallthru
          _
        // Predicated region
        $region37: #{tpu_custom_call.1} parent=11 // pred_check
          %p330 = pneg %p219
        $region38: #{tpu_custom_call.1} parent=11 // pred_check_branch
          %332 = sbr.rel (%p330) target = $region40
        $region39: #{tpu_custom_call.1} parent=11 // pred_region
          _
        $region40: #{tpu_custom_call.1} parent=11 // pred_fallthru
          _
        // Predicated region
        $region41: #{tpu_custom_call.1} parent=11 // pred_check
          %p333 = pneg %p240
        $region42: #{tpu_custom_call.1} parent=11 // pred_check_branch
          %335 = sbr.rel (%p333) target = $region44
        $region43: #{tpu_custom_call.1} parent=11 // pred_region
          _
        $region44: #{tpu_custom_call.1} parent=11 // pred_fallthru
          _
        // Predicated region
        $region45: #{tpu_custom_call.1} parent=11 // pred_check
          %p336 = pneg %p261
        $region46: #{tpu_custom_call.1} parent=11 // pred_check_branch
          %338 = sbr.rel (%p336) target = $region48
        $region47: #{tpu_custom_call.1} parent=11 // pred_region
          _
        $region48: #{tpu_custom_call.1} parent=11 // pred_fallthru
          _
      $region12: #{tpu_custom_call.1} parent=5 // pred_fallthru
        _
      %p339 = scmp.lt.s32.totalorder %s20, 2
      // Predicated region
      $region49: #{tpu_custom_call.1} parent=5 // pred_check
        %p340 = pneg %p339
      $region50: #{tpu_custom_call.1} parent=5 // pred_check_branch
        %342 = sbr.rel (%p340) target = $region52
      $region51: #{tpu_custom_call.1} parent=5 // pred_region
        // Predicated region
        $region53: #{tpu_custom_call.1} parent=51 // pred_check
          %p343 = pneg %p40
        $region54: #{tpu_custom_call.1} parent=51 // pred_check_branch
          %345 = sbr.rel (%p343) target = $region56
        $region55: #{tpu_custom_call.1} parent=51 // pred_region
          %s346 = smul.u32 38, %s20
          %p347 = scmp.lt.s32.totalorder %s346, 75
          %s348 = scalar_select %p347, %s346, 75
          %s349 = smul.addr %s348, 8
          %s350 = scalar_lea.vmem %s0, %s349
          %s351 = smul.u32 38, %s20
        $region56: #{tpu_custom_call.1} parent=51 // pred_fallthru
          _
        // Predicated region
        $region57: #{tpu_custom_call.1} parent=51 // pred_check
          %p352 = pneg %p66
        $region58: #{tpu_custom_call.1} parent=51 // pred_check_branch
          %354 = sbr.rel (%p352) target = $region60
        $region59: #{tpu_custom_call.1} parent=51 // pred_region
          %s355 = smul.u32 38, %s20
          %p356 = scmp.lt.s32.totalorder %s355, 75
          %s357 = scalar_select %p356, %s355, 75
          %s358 = smul.addr %s357, 8
          %s359 = scalar_lea.vmem %s1, %s358
          %s360 = smul.u32 38, %s20
        $region60: #{tpu_custom_call.1} parent=51 // pred_fallthru
          _
      $region52: #{tpu_custom_call.1} parent=5 // pred_fallthru
        _
      %p361 = scmp.le.s32.totalorder 1, %s20
      %p362 = scmp.lt.s32.totalorder %s20, 3
      %p363 = pnand %p361, %p362
      %p364 = pneg %p363
      // Predicated region
      $region61: #{tpu_custom_call.1} parent=5 // pred_check
        _
      $region62: #{tpu_custom_call.1} parent=5 // pred_check_branch
        %366 = sbr.rel (%p363) target = $region64
      $region63: #{tpu_custom_call.1} parent=5 // pred_region
        %s367 = ssub.s32 %s20, 1
        // Predicated region
        $region65: #{tpu_custom_call.1} parent=63 // pred_check
          %p368 = pneg %p198
        $region66: #{tpu_custom_call.1} parent=63 // pred_check_branch
          %370 = sbr.rel (%p368) target = $region68
        $region67: #{tpu_custom_call.1} parent=63 // pred_region
          %371 = dma.done [#allocation4], 16384
        $region68: #{tpu_custom_call.1} parent=63 // pred_fallthru
          _
        %s372 = smul.u32 38, %s25
        %p373 = scmp.lt.s32.totalorder %s372, 75
        %s374 = scalar_select %p373, %s372, 75
        %s375 = smul.addr %s374, 8
        %s376 = scalar_lea.vmem %s0, %s375
        %p377 = pneg %p46
        %p378 = pneg %p43
        %s379 = smul.u32 38, %s25
        %p380 = scmp.lt.s32.totalorder %s379, 75
        %s381 = scalar_select %p380, %s379, 75
        %s382 = smul.addr %s381, 8
        %s383 = scalar_lea.vmem %s1, %s382
        %p384 = pneg %p72
        %p385 = pneg %p69
        %p386 = pneg %p93
        %p387 = pneg %p90
        %p388 = pneg %p114
        %p389 = pneg %p111
        %p390 = pneg %p135
        %p391 = pneg %p132
        %p392 = pneg %p156
        %p393 = pneg %p153
        %p394 = pneg %p177
        %p395 = pneg %p174
        %p396 = pneg %p198
        %p397 = pneg %p195
        %p398 = pneg %p219
        %p399 = pneg %p216
        %p400 = pneg %p240
        %p401 = pneg %p237
        %p402 = pneg %p261
        %p403 = pneg %p258
        %p404 = pneg %p287
        %p405 = pneg %p284
        %s406 = smul.u32 38, %s25
        %p407 = scmp.lt.s32.totalorder %s406, 75
        %s408 = scalar_select %p407, %s406, 75
        %s409 = smul.addr %s408, 8
        %s410 = scalar_lea.vmem %s11, %s409
        %s411 = smul.u32 38, %s25
        %p412 = scmp.lt.s32.totalorder %s411, 75
        %s413 = scalar_select %p412, %s411, 75
        %s414 = smul.addr %s413, 8
        %s415 = scalar_lea.vmem %s0, %s414
        %s416 = smul.u32 38, %s25
        %s417 = smul.u32 38, %s25
        %p418 = scmp.lt.s32.totalorder %s417, 75
        %s419 = scalar_select %p418, %s417, 75
        %s420 = smul.addr %s419, 8
        %s421 = scalar_lea.vmem %s1, %s420
        %s422 = smul.u32 38, %s25
        %s423 = smul.u32 38, %s25
        %p424 = scmp.lt.s32.totalorder %s423, 75
        %s425 = scalar_select %p424, %s423, 75
        %s426 = smul.addr %s425, 8
        %s427 = scalar_lea.vmem %s11, %s426
        %s428 = smul.u32 38, %s25
        %v430 = vld [vmem:[%s415] sm:$0xff]
        %v431 = vld [vmem:[%s415 + $0x8] sm:$0xff]
        %v432 = vld [vmem:[%s415 + $0x10] sm:$0xff]
        %v433 = vld [vmem:[%s415 + $0x18] sm:$0xff]
        %v434 = vld [vmem:[%s415 + $0x20] sm:$0xff]
        %v435 = vld [vmem:[%s415 + $0x28] sm:$0xff]
        %v436 = vld [vmem:[%s415 + $0x30] sm:$0xff]
        %v437 = vld [vmem:[%s415 + $0x38] sm:$0xff]
        %v438 = vld [vmem:[%s415 + $0x40] sm:$0xff]
        %v439 = vld [vmem:[%s415 + $0x48] sm:$0xff]
        %v440 = vld [vmem:[%s415 + $0x50] sm:$0xff]
        %v441 = vld [vmem:[%s415 + $0x58] sm:$0xff]
        %v442 = vld [vmem:[%s415 + $0x60] sm:$0xff]
        %v443 = vld [vmem:[%s415 + $0x68] sm:$0xff]
        %v444 = vld [vmem:[%s415 + $0x70] sm:$0xff]
        %v445 = vld [vmem:[%s415 + $0x78] sm:$0xff]
        %v446 = vld [vmem:[%s415 + $0x80] sm:$0xff]
        %v447 = vld [vmem:[%s415 + $0x88] sm:$0xff]
        %v448 = vld [vmem:[%s415 + $0x90] sm:$0xff]
        %v449 = vld [vmem:[%s415 + $0x98] sm:$0xff]
        %v450 = vld [vmem:[%s415 + $0xa0] sm:$0xff]
        %v451 = vld [vmem:[%s415 + $0xa8] sm:$0xff]
        %v452 = vld [vmem:[%s415 + $0xb0] sm:$0xff]
        %v453 = vld [vmem:[%s415 + $0xb8] sm:$0xff]
        %v454 = vld [vmem:[%s415 + $0xc0] sm:$0xff]
        %v455 = vld [vmem:[%s415 + $0xc8] sm:$0xff]
        %v456 = vld [vmem:[%s415 + $0xd0] sm:$0xff]
        %v457 = vld [vmem:[%s415 + $0xd8] sm:$0xff]
        %v458 = vld [vmem:[%s415 + $0xe0] sm:$0xff]
        %v459 = vld [vmem:[%s415 + $0xe8] sm:$0xff]
        %v460 = vld [vmem:[%s415 + $0xf0] sm:$0xff]
        %v461 = vld [vmem:[%s415 + $0xf8] sm:$0xff]
        %v462 = vld [vmem:[%s415 + $0x100] sm:$0xff]
        %v463 = vld [vmem:[%s415 + $0x108] sm:$0xff]
        %v464 = vld [vmem:[%s415 + $0x110] sm:$0xff]
        %v465 = vld [vmem:[%s415 + $0x118] sm:$0xff]
        %v466 = vld [vmem:[%s415 + $0x120] sm:$0xff]
        %v467 = vld [vmem:[%s415 + $0x128] sm:$0xff]
        %v468 = vpack.c.bf16 %v431, %v430
        %v469 = vpack.c.bf16 %v433, %v432
        %v470 = vpack.c.bf16 %v435, %v434
        %v471 = vpack.c.bf16 %v437, %v436
        %v472 = vpack.c.bf16 %v439, %v438
        %v473 = vpack.c.bf16 %v441, %v440
        %v474 = vpack.c.bf16 %v443, %v442
        %v475 = vpack.c.bf16 %v445, %v444
        %v476 = vpack.c.bf16 %v447, %v446
        %v477 = vpack.c.bf16 %v449, %v448
        %v478 = vpack.c.bf16 %v451, %v450
        %v479 = vpack.c.bf16 %v453, %v452
        %v480 = vpack.c.bf16 %v455, %v454
        %v481 = vpack.c.bf16 %v457, %v456
        %v482 = vpack.c.bf16 %v459, %v458
        %v483 = vpack.c.bf16 %v461, %v460
        %v484 = vpack.c.bf16 %v463, %v462
        %v485 = vpack.c.bf16 %v465, %v464
        %v486 = vpack.c.bf16 %v467, %v466
        %v487 = vld [vmem:[%s2] sm:$0xff]
        %v488 = vld [vmem:[%s2 + $0x8] sm:$0xff]
        %v489 = vld [vmem:[%s2 + $0x10] sm:$0xff]
        %v490 = vld [vmem:[%s2 + $0x18] sm:$0xff]
        %v491 = vld [vmem:[%s2 + $0x20] sm:$0xff]
        %v492 = vld [vmem:[%s2 + $0x28] sm:$0xff]
        %v493 = vld [vmem:[%s2 + $0x30] sm:$0xff]
        %v494 = vld [vmem:[%s2 + $0x38] sm:$0xff]
        %v495 = vld [vmem:[%s2 + $0x40] sm:$0x11]
        %v496 = vld [vmem:[%s2 + $0x48] sm:$0x11]
        %v497 = vld [vmem:[%s3] sm:$0xf]
        %v499 = vlaneseq
        %v500 = vshrl.u32 %v499, 7
        %v501 = vsub.s32 0, %v500
        %v502 = vrot.slane %v497, %v501
        %v503 = vlaneseq
        %v504 = vshrl.u32 %v503, 7
        %v505 = vsub.s32 1, %v504
        %v506 = vrot.slane %v497, %v505
        %v507 = vlaneseq
        %v508 = vshrl.u32 %v507, 7
        %v509 = vsub.s32 2, %v508
        %v510 = vrot.slane %v497, %v509
        %v511 = vlaneseq
        %v512 = vshrl.u32 %v511, 7
        %v513 = vsub.s32 3, %v512
        %v514 = vrot.slane %v497, %v513
        %v529 = vunpack.c.l.b16 %v487
        %v530 = vunpack.c.h.b16 %v487
        %v531 = vunpack.c.l.b16 %v488
        %v532 = vunpack.c.h.b16 %v488
        %v533 = vunpack.c.l.b16 %v489
        %v534 = vunpack.c.h.b16 %v489
        %v535 = vunpack.c.l.b16 %v490
        %v536 = vunpack.c.h.b16 %v490
        %v537 = vunpack.c.l.b16 %v491
        %v538 = vunpack.c.h.b16 %v491
        %v539 = vunpack.c.l.b16 %v492
        %v540 = vunpack.c.h.b16 %v492
        %v541 = vunpack.c.l.b16 %v493
        %v542 = vunpack.c.h.b16 %v493
        %v543 = vunpack.c.l.b16 %v494
        %v544 = vunpack.c.h.b16 %v494
        %v545 = vunpack.c.l.b16 %v495
        %v546 = vunpack.c.h.b16 %v495
        %v547 = vunpack.c.l.b16 %v496
        %v548 = vunpack.c.h.b16 %v496
        %v549 = vpack.c.b16 %v533, %v529
        %v550 = vpack.c.b16 %v534, %v530
        %v551 = vpack.c.b16 %v535, %v531
        %v552 = vpack.c.b16 %v536, %v532
        %v553 = vpack.c.b16 %v541, %v537
        %v554 = vpack.c.b16 %v542, %v538
        %v555 = vpack.c.b16 %v543, %v539
        %v556 = vpack.c.b16 %v544, %v540
        %v557 = vpack.c.b16 %v545, %v545
        %v558 = vpack.c.b16 %v546, %v546
        %v559 = vpack.c.b16 %v547, %v547
        %v560 = vpack.c.b16 %v548, %v548
        %vm569 = vcmask 269312
        %v571 = vsel %vm569, %v468, 0
        %v574 = vsel %vm569, %v469, 0
        %v577 = vsel %vm569, %v470, 0
        %v580 = vsel %vm569, %v471, 0
        %v583 = vsel %vm569, %v472, 0
        %v586 = vsel %vm569, %v473, 0
        %v589 = vsel %vm569, %v474, 0
        %v592 = vsel %vm569, %v475, 0
        %v595 = vsel %vm569, %v476, 0
        %v598 = vsel %vm569, %v477, 0
        %v601 = vsel %vm569, %v478, 0
        %v604 = vsel %vm569, %v479, 0
        %v607 = vsel %vm569, %v480, 0
        %v610 = vsel %vm569, %v481, 0
        %v613 = vsel %vm569, %v482, 0
        %v616 = vsel %vm569, %v483, 0
        %v619 = vsel %vm569, %v484, 0
        %v622 = vsel %vm569, %v485, 0
        %v625 = vsel %vm569, %v486, 0
        %vm627 = vcmask 1040384
        %v628 = vsel 0, 4294967295, 65535
        %v629 = vsel %vm627, %v628, 0
        %v631 = vand.u32 %v557, %v629
        %v634 = vand.u32 %v558, %v629
        %v637 = vand.u32 %v559, %v629
        %v640 = vand.u32 %v560, %v629
        %642 = vmatprep.subr.bf16.mxu0 0
        %643 = vmatpush1.bf16.msra.mxu0 0
        %644 = vmatprep.subr.bf16.mxu0 0
        %645 = vmatpush1.bf16.msra.mxu0 0
        %646 = vmatprep.subr.bf16.mxu0 0
        %647 = vmatpush1.bf16.msra.mxu0 0
        %648 = vmatprep.subr.bf16.mxu0 0
        %649 = vmatpush1.bf16.msra.mxu0 0
        %650 = vmatprep.subr.bf16.mxu0 0
        %651 = vmatpush1.bf16.msra.mxu0 0
        %652 = vmatprep.subr.bf16.mxu0 %v634
        %653 = vmatpush1.bf16.msra.mxu0 %v631
        %654 = vmatprep.subr.bf16.mxu0 %v554
        %655 = vmatpush1.bf16.msra.mxu0 %v553
        %656 = vmatprep.subr.bf16.mxu0 %v550
        %657 = vmatpush1.bf16.msra.mxu0 %v549
        %658 = vmatprep.subr.bf16.mxu0 0
        %659 = vmatpush2.bf16.msra.mxu0 0
        %660 = vmatprep.subr.bf16.mxu0 0
        %661 = vmatpush2.bf16.msra.mxu0 0
        %662 = vmatprep.subr.bf16.mxu0 0
        %663 = vmatpush2.bf16.msra.mxu0 0
        %664 = vmatprep.subr.bf16.mxu0 0
        %665 = vmatpush2.bf16.msra.mxu0 0
        %666 = vmatprep.subr.bf16.mxu0 0
        %667 = vmatpush2.bf16.msra.mxu0 0
        %668 = vmatprep.subr.bf16.mxu0 0
        %669 = vmatpush2.bf16.msra.mxu0 0
        %670 = vmatprep.subr.bf16.mxu0 0
        %671 = vmatpush2.bf16.msra.mxu0 0
        %672 = vmatprep.subr.bf16.mxu0 0
        %673 = vmatpush2.bf16.msra.mxu0 0
        %674 = vmatprep.mubr.bf16.mxu0 0
        %675 = vmatmul.mubr.bf16.gmra.mxu0 %v571
        %v676 = vpop.f32.mrf.mxu0
        %v677 = vadd.f32 %v502, %v676
        %v678 = vpop.f32.mrf.mxu0
        %v679 = vadd.f32 %v506, %v678
        %v680 = vpop.f32.mrf.mxu0
        %v681 = vadd.f32 %v502, %v680
        %v682 = vpop.f32.mrf.mxu0
        %v683 = vadd.f32 %v506, %v682
        %684 = vmatprep.mubr.bf16.mxu0 0
        %685 = vmatmul.mubr.bf16.gmra.mxu0 %v574
        %v686 = vpop.f32.mrf.mxu0
        %v687 = vadd.f32 %v502, %v686
        %v688 = vpop.f32.mrf.mxu0
        %v689 = vadd.f32 %v506, %v688
        %v690 = vpop.f32.mrf.mxu0
        %v691 = vadd.f32 %v502, %v690
        %v692 = vpop.f32.mrf.mxu0
        %v693 = vadd.f32 %v506, %v692
        %694 = vmatprep.mubr.bf16.mxu0 0
        %695 = vmatmul.mubr.bf16.gmra.mxu0 %v577
        %v696 = vpop.f32.mrf.mxu0
        %v697 = vadd.f32 %v502, %v696
        %v698 = vpop.f32.mrf.mxu0
        %v699 = vadd.f32 %v506, %v698
        %v700 = vpop.f32.mrf.mxu0
        %v701 = vadd.f32 %v502, %v700
        %v702 = vpop.f32.mrf.mxu0
        %v703 = vadd.f32 %v506, %v702
        %704 = vmatprep.mubr.bf16.mxu0 0
        %705 = vmatmul.mubr.bf16.gmra.mxu0 %v580
        %v706 = vpop.f32.mrf.mxu0
        %v707 = vadd.f32 %v502, %v706
        %v708 = vpop.f32.mrf.mxu0
        %v709 = vadd.f32 %v506, %v708
        %v710 = vpop.f32.mrf.mxu0
        %v711 = vadd.f32 %v502, %v710
        %v712 = vpop.f32.mrf.mxu0
        %v713 = vadd.f32 %v506, %v712
        %714 = vmatprep.mubr.bf16.mxu0 0
        %715 = vmatmul.mubr.bf16.gmra.mxu0 %v583
        %v716 = vpop.f32.mrf.mxu0
        %v717 = vadd.f32 %v502, %v716
        %v718 = vpop.f32.mrf.mxu0
        %v719 = vadd.f32 %v506, %v718
        %v720 = vpop.f32.mrf.mxu0
        %v721 = vadd.f32 %v502, %v720
        %v722 = vpop.f32.mrf.mxu0
        %v723 = vadd.f32 %v506, %v722
        %724 = vmatprep.mubr.bf16.mxu0 0
        %725 = vmatmul.mubr.bf16.gmra.mxu0 %v586
        %v726 = vpop.f32.mrf.mxu0
        %v727 = vadd.f32 %v502, %v726
        %v728 = vpop.f32.mrf.mxu0
        %v729 = vadd.f32 %v506, %v728
        %v730 = vpop.f32.mrf.mxu0
        %v731 = vadd.f32 %v502, %v730
        %v732 = vpop.f32.mrf.mxu0
        %v733 = vadd.f32 %v506, %v732
        %734 = vmatprep.mubr.bf16.mxu0 0
        %735 = vmatmul.mubr.bf16.gmra.mxu0 %v589
        %v736 = vpop.f32.mrf.mxu0
        %v737 = vadd.f32 %v502, %v736
        %v738 = vpop.f32.mrf.mxu0
        %v739 = vadd.f32 %v506, %v738
        %v740 = vpop.f32.mrf.mxu0
        %v741 = vadd.f32 %v502, %v740
        %v742 = vpop.f32.mrf.mxu0
        %v743 = vadd.f32 %v506, %v742
        %744 = vmatprep.mubr.bf16.mxu0 0
        %745 = vmatmul.mubr.bf16.gmra.mxu0 %v592
        %v746 = vpop.f32.mrf.mxu0
        %v747 = vadd.f32 %v502, %v746
        %v748 = vpop.f32.mrf.mxu0
        %v749 = vadd.f32 %v506, %v748
        %v750 = vpop.f32.mrf.mxu0
        %v751 = vadd.f32 %v502, %v750
        %v752 = vpop.f32.mrf.mxu0
        %v753 = vadd.f32 %v506, %v752
        %754 = vmatprep.mubr.bf16.mxu0 0
        %755 = vmatmul.mubr.bf16.gmra.mxu0 %v595
        %v756 = vpop.f32.mrf.mxu0
        %v757 = vadd.f32 %v502, %v756
        %v758 = vpop.f32.mrf.mxu0
        %v759 = vadd.f32 %v506, %v758
        %v760 = vpop.f32.mrf.mxu0
        %v761 = vadd.f32 %v502, %v760
        %v762 = vpop.f32.mrf.mxu0
        %v763 = vadd.f32 %v506, %v762
        %764 = vmatprep.mubr.bf16.mxu0 0
        %765 = vmatmul.mubr.bf16.gmra.mxu0 %v598
        %v766 = vpop.f32.mrf.mxu0
        %v767 = vadd.f32 %v502, %v766
        %v768 = vpop.f32.mrf.mxu0
        %v769 = vadd.f32 %v506, %v768
        %v770 = vpop.f32.mrf.mxu0
        %v771 = vadd.f32 %v502, %v770
        %v772 = vpop.f32.mrf.mxu0
        %v773 = vadd.f32 %v506, %v772
        %774 = vmatprep.mubr.bf16.mxu0 0
        %775 = vmatmul.mubr.bf16.gmra.mxu0 %v601
        %v776 = vpop.f32.mrf.mxu0
        %v777 = vadd.f32 %v502, %v776
        %v778 = vpop.f32.mrf.mxu0
        %v779 = vadd.f32 %v506, %v778
        %v780 = vpop.f32.mrf.mxu0
        %v781 = vadd.f32 %v502, %v780
        %v782 = vpop.f32.mrf.mxu0
        %v783 = vadd.f32 %v506, %v782
        %784 = vmatprep.mubr.bf16.mxu0 0
        %785 = vmatmul.mubr.bf16.gmra.mxu0 %v604
        %v786 = vpop.f32.mrf.mxu0
        %v787 = vadd.f32 %v502, %v786
        %v788 = vpop.f32.mrf.mxu0
        %v789 = vadd.f32 %v506, %v788
        %v790 = vpop.f32.mrf.mxu0
        %v791 = vadd.f32 %v502, %v790
        %v792 = vpop.f32.mrf.mxu0
        %v793 = vadd.f32 %v506, %v792
        %794 = vmatprep.mubr.bf16.mxu0 0
        %795 = vmatmul.mubr.bf16.gmra.mxu0 %v607
        %v796 = vpop.f32.mrf.mxu0
        %v797 = vadd.f32 %v502, %v796
        %v798 = vpop.f32.mrf.mxu0
        %v799 = vadd.f32 %v506, %v798
        %v800 = vpop.f32.mrf.mxu0
        %v801 = vadd.f32 %v502, %v800
        %v802 = vpop.f32.mrf.mxu0
        %v803 = vadd.f32 %v506, %v802
        %804 = vmatprep.mubr.bf16.mxu0 0
        %805 = vmatmul.mubr.bf16.gmra.mxu0 %v610
        %v806 = vpop.f32.mrf.mxu0
        %v807 = vadd.f32 %v502, %v806
        %v808 = vpop.f32.mrf.mxu0
        %v809 = vadd.f32 %v506, %v808
        %v810 = vpop.f32.mrf.mxu0
        %v811 = vadd.f32 %v502, %v810
        %v812 = vpop.f32.mrf.mxu0
        %v813 = vadd.f32 %v506, %v812
        %814 = vmatprep.mubr.bf16.mxu0 0
        %815 = vmatmul.mubr.bf16.gmra.mxu0 %v613
        %v816 = vpop.f32.mrf.mxu0
        %v817 = vadd.f32 %v502, %v816
        %v818 = vpop.f32.mrf.mxu0
        %v819 = vadd.f32 %v506, %v818
        %v820 = vpop.f32.mrf.mxu0
        %v821 = vadd.f32 %v502, %v820
        %v822 = vpop.f32.mrf.mxu0
        %v823 = vadd.f32 %v506, %v822
        %824 = vmatprep.mubr.bf16.mxu0 0
        %825 = vmatmul.mubr.bf16.gmra.mxu0 %v616
        %v826 = vpop.f32.mrf.mxu0
        %v827 = vadd.f32 %v502, %v826
        %v828 = vpop.f32.mrf.mxu0
        %v829 = vadd.f32 %v506, %v828
        %v830 = vpop.f32.mrf.mxu0
        %v831 = vadd.f32 %v502, %v830
        %v832 = vpop.f32.mrf.mxu0
        %v833 = vadd.f32 %v506, %v832
        %834 = vmatprep.mubr.bf16.mxu0 0
        %835 = vmatmul.mubr.bf16.gmra.mxu0 %v619
        %v836 = vpop.f32.mrf.mxu0
        %v837 = vadd.f32 %v502, %v836
        %v838 = vpop.f32.mrf.mxu0
        %v839 = vadd.f32 %v506, %v838
        %v840 = vpop.f32.mrf.mxu0
        %v841 = vadd.f32 %v502, %v840
        %v842 = vpop.f32.mrf.mxu0
        %v843 = vadd.f32 %v506, %v842
        %844 = vmatprep.mubr.bf16.mxu0 0
        %845 = vmatmul.mubr.bf16.gmra.mxu0 %v622
        %v846 = vpop.f32.mrf.mxu0
        %v847 = vadd.f32 %v502, %v846
        %v848 = vpop.f32.mrf.mxu0
        %v849 = vadd.f32 %v506, %v848
        %v850 = vpop.f32.mrf.mxu0
        %v851 = vadd.f32 %v502, %v850
        %v852 = vpop.f32.mrf.mxu0
        %v853 = vadd.f32 %v506, %v852
        %854 = vmatprep.mubr.bf16.mxu0 0
        %855 = vmatmul.mubr.bf16.gmra.mxu0 %v625
        %v856 = vpop.f32.mrf.mxu0
        %v857 = vadd.f32 %v502, %v856
        %v858 = vpop.f32.mrf.mxu0
        %v859 = vadd.f32 %v506, %v858
        %v860 = vpop.f32.mrf.mxu0
        %v861 = vadd.f32 %v502, %v860
        %v862 = vpop.f32.mrf.mxu0
        %v863 = vadd.f32 %v506, %v862
        %864 = vdwg.mxu0
        %865 = vmatprep.subr.bf16.mxu0 0
        %866 = vmatpush1.bf16.msra.mxu0 0
        %867 = vmatprep.subr.bf16.mxu0 0
        %868 = vmatpush1.bf16.msra.mxu0 0
        %869 = vmatprep.subr.bf16.mxu0 0
        %870 = vmatpush1.bf16.msra.mxu0 0
        %871 = vmatprep.subr.bf16.mxu0 0
        %872 = vmatpush1.bf16.msra.mxu0 0
        %873 = vmatprep.subr.bf16.mxu0 0
        %874 = vmatpush1.bf16.msra.mxu0 0
        %875 = vmatprep.subr.bf16.mxu0 %v640
        %876 = vmatpush1.bf16.msra.mxu0 %v637
        %877 = vmatprep.subr.bf16.mxu0 %v556
        %878 = vmatpush1.bf16.msra.mxu0 %v555
        %879 = vmatprep.subr.bf16.mxu0 %v552
        %880 = vmatpush1.bf16.msra.mxu0 %v551
        %881 = vmatprep.subr.bf16.mxu0 0
        %882 = vmatpush2.bf16.msra.mxu0 0
        %883 = vmatprep.subr.bf16.mxu0 0
        %884 = vmatpush2.bf16.msra.mxu0 0
        %885 = vmatprep.subr.bf16.mxu0 0
        %886 = vmatpush2.bf16.msra.mxu0 0
        %887 = vmatprep.subr.bf16.mxu0 0
        %888 = vmatpush2.bf16.msra.mxu0 0
        %889 = vmatprep.subr.bf16.mxu0 0
        %890 = vmatpush2.bf16.msra.mxu0 0
        %891 = vmatprep.subr.bf16.mxu0 0
        %892 = vmatpush2.bf16.msra.mxu0 0
        %893 = vmatprep.subr.bf16.mxu0 0
        %894 = vmatpush2.bf16.msra.mxu0 0
        %895 = vmatprep.subr.bf16.mxu0 0
        %896 = vmatpush2.bf16.msra.mxu0 0
        %897 = vmatprep.mubr.bf16.mxu0 0
        %898 = vmatmul.mubr.bf16.gmra.mxu0 %v571
        %v899 = vpop.f32.mrf.mxu0
        %v900 = vadd.f32 %v510, %v899
        %v901 = vpop.f32.mrf.mxu0
        %v902 = vadd.f32 %v514, %v901
        %v903 = vpop.f32.mrf.mxu0
        %v904 = vadd.f32 %v510, %v903
        %v905 = vpop.f32.mrf.mxu0
        %v906 = vadd.f32 %v514, %v905
        %907 = vmatprep.mubr.bf16.mxu0 0
        %908 = vmatmul.mubr.bf16.gmra.mxu0 %v574
        %v909 = vpop.f32.mrf.mxu0
        %v910 = vadd.f32 %v510, %v909
        %v911 = vpop.f32.mrf.mxu0
        %v912 = vadd.f32 %v514, %v911
        %v913 = vpop.f32.mrf.mxu0
        %v914 = vadd.f32 %v510, %v913
        %v915 = vpop.f32.mrf.mxu0
        %v916 = vadd.f32 %v514, %v915
        %917 = vmatprep.mubr.bf16.mxu0 0
        %918 = vmatmul.mubr.bf16.gmra.mxu0 %v577
        %v919 = vpop.f32.mrf.mxu0
        %v920 = vadd.f32 %v510, %v919
        %v921 = vpop.f32.mrf.mxu0
        %v922 = vadd.f32 %v514, %v921
        %v923 = vpop.f32.mrf.mxu0
        %v924 = vadd.f32 %v510, %v923
        %v925 = vpop.f32.mrf.mxu0
        %v926 = vadd.f32 %v514, %v925
        %927 = vmatprep.mubr.bf16.mxu0 0
        %928 = vmatmul.mubr.bf16.gmra.mxu0 %v580
        %v929 = vpop.f32.mrf.mxu0
        %v930 = vadd.f32 %v510, %v929
        %v931 = vpop.f32.mrf.mxu0
        %v932 = vadd.f32 %v514, %v931
        %v933 = vpop.f32.mrf.mxu0
        %v934 = vadd.f32 %v510, %v933
        %v935 = vpop.f32.mrf.mxu0
        %v936 = vadd.f32 %v514, %v935
        %937 = vmatprep.mubr.bf16.mxu0 0
        %938 = vmatmul.mubr.bf16.gmra.mxu0 %v583
        %v939 = vpop.f32.mrf.mxu0
        %v940 = vadd.f32 %v510, %v939
        %v941 = vpop.f32.mrf.mxu0
        %v942 = vadd.f32 %v514, %v941
        %v943 = vpop.f32.mrf.mxu0
        %v944 = vadd.f32 %v510, %v943
        %v945 = vpop.f32.mrf.mxu0
        %v946 = vadd.f32 %v514, %v945
        %947 = vmatprep.mubr.bf16.mxu0 0
        %948 = vmatmul.mubr.bf16.gmra.mxu0 %v586
        %v949 = vpop.f32.mrf.mxu0
        %v950 = vadd.f32 %v510, %v949
        %v951 = vpop.f32.mrf.mxu0
        %v952 = vadd.f32 %v514, %v951
        %v953 = vpop.f32.mrf.mxu0
        %v954 = vadd.f32 %v510, %v953
        %v955 = vpop.f32.mrf.mxu0
        %v956 = vadd.f32 %v514, %v955
        %957 = vmatprep.mubr.bf16.mxu0 0
        %958 = vmatmul.mubr.bf16.gmra.mxu0 %v589
        %v959 = vpop.f32.mrf.mxu0
        %v960 = vadd.f32 %v510, %v959
        %v961 = vpop.f32.mrf.mxu0
        %v962 = vadd.f32 %v514, %v961
        %v963 = vpop.f32.mrf.mxu0
        %v964 = vadd.f32 %v510, %v963
        %v965 = vpop.f32.mrf.mxu0
        %v966 = vadd.f32 %v514, %v965
        %967 = vmatprep.mubr.bf16.mxu0 0
        %968 = vmatmul.mubr.bf16.gmra.mxu0 %v592
        %v969 = vpop.f32.mrf.mxu0
        %v970 = vadd.f32 %v510, %v969
        %v971 = vpop.f32.mrf.mxu0
        %v972 = vadd.f32 %v514, %v971
        %v973 = vpop.f32.mrf.mxu0
        %v974 = vadd.f32 %v510, %v973
        %v975 = vpop.f32.mrf.mxu0
        %v976 = vadd.f32 %v514, %v975
        %977 = vmatprep.mubr.bf16.mxu0 0
        %978 = vmatmul.mubr.bf16.gmra.mxu0 %v595
        %v979 = vpop.f32.mrf.mxu0
        %v980 = vadd.f32 %v510, %v979
        %v981 = vpop.f32.mrf.mxu0
        %v982 = vadd.f32 %v514, %v981
        %v983 = vpop.f32.mrf.mxu0
        %v984 = vadd.f32 %v510, %v983
        %v985 = vpop.f32.mrf.mxu0
        %v986 = vadd.f32 %v514, %v985
        %987 = vmatprep.mubr.bf16.mxu0 0
        %988 = vmatmul.mubr.bf16.gmra.mxu0 %v598
        %v989 = vpop.f32.mrf.mxu0
        %v990 = vadd.f32 %v510, %v989
        %v991 = vpop.f32.mrf.mxu0
        %v992 = vadd.f32 %v514, %v991
        %v993 = vpop.f32.mrf.mxu0
        %v994 = vadd.f32 %v510, %v993
        %v995 = vpop.f32.mrf.mxu0
        %v996 = vadd.f32 %v514, %v995
        %997 = vmatprep.mubr.bf16.mxu0 0
        %998 = vmatmul.mubr.bf16.gmra.mxu0 %v601
        %v999 = vpop.f32.mrf.mxu0
        %v1000 = vadd.f32 %v510, %v999
        %v1001 = vpop.f32.mrf.mxu0
        %v1002 = vadd.f32 %v514, %v1001
        %v1003 = vpop.f32.mrf.mxu0
        %v1004 = vadd.f32 %v510, %v1003
        %v1005 = vpop.f32.mrf.mxu0
        %v1006 = vadd.f32 %v514, %v1005
        %1007 = vmatprep.mubr.bf16.mxu0 0
        %1008 = vmatmul.mubr.bf16.gmra.mxu0 %v604
        %v1009 = vpop.f32.mrf.mxu0
        %v1010 = vadd.f32 %v510, %v1009
        %v1011 = vpop.f32.mrf.mxu0
        %v1012 = vadd.f32 %v514, %v1011
        %v1013 = vpop.f32.mrf.mxu0
        %v1014 = vadd.f32 %v510, %v1013
        %v1015 = vpop.f32.mrf.mxu0
        %v1016 = vadd.f32 %v514, %v1015
        %1017 = vmatprep.mubr.bf16.mxu0 0
        %1018 = vmatmul.mubr.bf16.gmra.mxu0 %v607
        %v1019 = vpop.f32.mrf.mxu0
        %v1020 = vadd.f32 %v510, %v1019
        %v1021 = vpop.f32.mrf.mxu0
        %v1022 = vadd.f32 %v514, %v1021
        %v1023 = vpop.f32.mrf.mxu0
        %v1024 = vadd.f32 %v510, %v1023
        %v1025 = vpop.f32.mrf.mxu0
        %v1026 = vadd.f32 %v514, %v1025
        %1027 = vmatprep.mubr.bf16.mxu0 0
        %1028 = vmatmul.mubr.bf16.gmra.mxu0 %v610
        %v1029 = vpop.f32.mrf.mxu0
        %v1030 = vadd.f32 %v510, %v1029
        %v1031 = vpop.f32.mrf.mxu0
        %v1032 = vadd.f32 %v514, %v1031
        %v1033 = vpop.f32.mrf.mxu0
        %v1034 = vadd.f32 %v510, %v1033
        %v1035 = vpop.f32.mrf.mxu0
        %v1036 = vadd.f32 %v514, %v1035
        %1037 = vmatprep.mubr.bf16.mxu0 0
        %1038 = vmatmul.mubr.bf16.gmra.mxu0 %v613
        %v1039 = vpop.f32.mrf.mxu0
        %v1040 = vadd.f32 %v510, %v1039
        %v1041 = vpop.f32.mrf.mxu0
        %v1042 = vadd.f32 %v514, %v1041
        %v1043 = vpop.f32.mrf.mxu0
        %v1044 = vadd.f32 %v510, %v1043
        %v1045 = vpop.f32.mrf.mxu0
        %v1046 = vadd.f32 %v514, %v1045
        %1047 = vmatprep.mubr.bf16.mxu0 0
        %1048 = vmatmul.mubr.bf16.gmra.mxu0 %v616
        %v1049 = vpop.f32.mrf.mxu0
        %v1050 = vadd.f32 %v510, %v1049
        %v1051 = vpop.f32.mrf.mxu0
        %v1052 = vadd.f32 %v514, %v1051
        %v1053 = vpop.f32.mrf.mxu0
        %v1054 = vadd.f32 %v510, %v1053
        %v1055 = vpop.f32.mrf.mxu0
        %v1056 = vadd.f32 %v514, %v1055
        %1057 = vmatprep.mubr.bf16.mxu0 0
        %1058 = vmatmul.mubr.bf16.gmra.mxu0 %v619
        %v1059 = vpop.f32.mrf.mxu0
        %v1060 = vadd.f32 %v510, %v1059
        %v1061 = vpop.f32.mrf.mxu0
        %v1062 = vadd.f32 %v514, %v1061
        %v1063 = vpop.f32.mrf.mxu0
        %v1064 = vadd.f32 %v510, %v1063
        %v1065 = vpop.f32.mrf.mxu0
        %v1066 = vadd.f32 %v514, %v1065
        %1067 = vmatprep.mubr.bf16.mxu0 0
        %1068 = vmatmul.mubr.bf16.gmra.mxu0 %v622
        %v1069 = vpop.f32.mrf.mxu0
        %v1070 = vadd.f32 %v510, %v1069
        %v1071 = vpop.f32.mrf.mxu0
        %v1072 = vadd.f32 %v514, %v1071
        %v1073 = vpop.f32.mrf.mxu0
        %v1074 = vadd.f32 %v510, %v1073
        %v1075 = vpop.f32.mrf.mxu0
        %v1076 = vadd.f32 %v514, %v1075
        %1077 = vmatprep.mubr.bf16.mxu0 0
        %1078 = vmatmul.mubr.bf16.gmra.mxu0 %v625
        %v1079 = vpop.f32.mrf.mxu0
        %v1080 = vadd.f32 %v510, %v1079
        %v1081 = vpop.f32.mrf.mxu0
        %v1082 = vadd.f32 %v514, %v1081
        %v1083 = vpop.f32.mrf.mxu0
        %v1084 = vadd.f32 %v510, %v1083
        %v1085 = vpop.f32.mrf.mxu0
        %v1086 = vadd.f32 %v514, %v1085
        %1087 = vdwg.mxu0
        %v1088 = vmul.f32 %v677, 0.01
        %v1089 = vmul.f32 %v679, 0.01
        %v1090 = vmul.f32 %v900, 0.01
        %v1091 = vmul.f32 %v902, 0.01
        %v1092 = vmul.f32 %v681, 0.01
        %v1093 = vmul.f32 %v683, 0.01
        %v1094 = vmul.f32 %v904, 0.01
        %v1095 = vmul.f32 %v906, 0.01
        %v1096 = vmul.f32 %v687, 0.01
        %v1097 = vmul.f32 %v689, 0.01
        %v1098 = vmul.f32 %v910, 0.01
        %v1099 = vmul.f32 %v912, 0.01
        %v1100 = vmul.f32 %v691, 0.01
        %v1101 = vmul.f32 %v693, 0.01
        %v1102 = vmul.f32 %v914, 0.01
        %v1103 = vmul.f32 %v916, 0.01
        %v1104 = vmul.f32 %v697, 0.01
        %v1105 = vmul.f32 %v699, 0.01
        %v1106 = vmul.f32 %v920, 0.01
        %v1107 = vmul.f32 %v922, 0.01
        %v1108 = vmul.f32 %v701, 0.01
        %v1109 = vmul.f32 %v703, 0.01
        %v1110 = vmul.f32 %v924, 0.01
        %v1111 = vmul.f32 %v926, 0.01
        %v1112 = vmul.f32 %v707, 0.01
        %v1113 = vmul.f32 %v709, 0.01
        %v1114 = vmul.f32 %v930, 0.01
        %v1115 = vmul.f32 %v932, 0.01
        %v1116 = vmul.f32 %v711, 0.01
        %v1117 = vmul.f32 %v713, 0.01
        %v1118 = vmul.f32 %v934, 0.01
        %v1119 = vmul.f32 %v936, 0.01
        %v1120 = vmul.f32 %v717, 0.01
        %v1121 = vmul.f32 %v719, 0.01
        %v1122 = vmul.f32 %v940, 0.01
        %v1123 = vmul.f32 %v942, 0.01
        %v1124 = vmul.f32 %v721, 0.01
        %v1125 = vmul.f32 %v723, 0.01
        %v1126 = vmul.f32 %v944, 0.01
        %v1127 = vmul.f32 %v946, 0.01
        %v1128 = vmul.f32 %v727, 0.01
        %v1129 = vmul.f32 %v729, 0.01
        %v1130 = vmul.f32 %v950, 0.01
        %v1131 = vmul.f32 %v952, 0.01
        %v1132 = vmul.f32 %v731, 0.01
        %v1133 = vmul.f32 %v733, 0.01
        %v1134 = vmul.f32 %v954, 0.01
        %v1135 = vmul.f32 %v956, 0.01
        %v1136 = vmul.f32 %v737, 0.01
        %v1137 = vmul.f32 %v739, 0.01
        %v1138 = vmul.f32 %v960, 0.01
        %v1139 = vmul.f32 %v962, 0.01
        %v1140 = vmul.f32 %v741, 0.01
        %v1141 = vmul.f32 %v743, 0.01
        %v1142 = vmul.f32 %v964, 0.01
        %v1143 = vmul.f32 %v966, 0.01
        %v1144 = vmul.f32 %v747, 0.01
        %v1145 = vmul.f32 %v749, 0.01
        %v1146 = vmul.f32 %v970, 0.01
        %v1147 = vmul.f32 %v972, 0.01
        %v1148 = vmul.f32 %v751, 0.01
        %v1149 = vmul.f32 %v753, 0.01
        %v1150 = vmul.f32 %v974, 0.01
        %v1151 = vmul.f32 %v976, 0.01
        %v1152 = vmul.f32 %v757, 0.01
        %v1153 = vmul.f32 %v759, 0.01
        %v1154 = vmul.f32 %v980, 0.01
        %v1155 = vmul.f32 %v982, 0.01
        %v1156 = vmul.f32 %v761, 0.01
        %v1157 = vmul.f32 %v763, 0.01
        %v1158 = vmul.f32 %v984, 0.01
        %v1159 = vmul.f32 %v986, 0.01
        %v1160 = vmul.f32 %v767, 0.01
        %v1161 = vmul.f32 %v769, 0.01
        %v1162 = vmul.f32 %v990, 0.01
        %v1163 = vmul.f32 %v992, 0.01
        %v1164 = vmul.f32 %v771, 0.01
        %v1165 = vmul.f32 %v773, 0.01
        %v1166 = vmul.f32 %v994, 0.01
        %v1167 = vmul.f32 %v996, 0.01
        %v1168 = vmul.f32 %v777, 0.01
        %v1169 = vmul.f32 %v779, 0.01
        %v1170 = vmul.f32 %v1000, 0.01
        %v1171 = vmul.f32 %v1002, 0.01
        %v1172 = vmul.f32 %v781, 0.01
        %v1173 = vmul.f32 %v783, 0.01
        %v1174 = vmul.f32 %v1004, 0.01
        %v1175 = vmul.f32 %v1006, 0.01
        %v1176 = vmul.f32 %v787, 0.01
        %v1177 = vmul.f32 %v789, 0.01
        %v1178 = vmul.f32 %v1010, 0.01
        %v1179 = vmul.f32 %v1012, 0.01
        %v1180 = vmul.f32 %v791, 0.01
        %v1181 = vmul.f32 %v793, 0.01
        %v1182 = vmul.f32 %v1014, 0.01
        %v1183 = vmul.f32 %v1016, 0.01
        %v1184 = vmul.f32 %v797, 0.01
        %v1185 = vmul.f32 %v799, 0.01
        %v1186 = vmul.f32 %v1020, 0.01
        %v1187 = vmul.f32 %v1022, 0.01
        %v1188 = vmul.f32 %v801, 0.01
        %v1189 = vmul.f32 %v803, 0.01
        %v1190 = vmul.f32 %v1024, 0.01
        %v1191 = vmul.f32 %v1026, 0.01
        %v1192 = vmul.f32 %v807, 0.01
        %v1193 = vmul.f32 %v809, 0.01
        %v1194 = vmul.f32 %v1030, 0.01
        %v1195 = vmul.f32 %v1032, 0.01
        %v1196 = vmul.f32 %v811, 0.01
        %v1197 = vmul.f32 %v813, 0.01
        %v1198 = vmul.f32 %v1034, 0.01
        %v1199 = vmul.f32 %v1036, 0.01
        %v1200 = vmul.f32 %v817, 0.01
        %v1201 = vmul.f32 %v819, 0.01
        %v1202 = vmul.f32 %v1040, 0.01
        %v1203 = vmul.f32 %v1042, 0.01
        %v1204 = vmul.f32 %v821, 0.01
        %v1205 = vmul.f32 %v823, 0.01
        %v1206 = vmul.f32 %v1044, 0.01
        %v1207 = vmul.f32 %v1046, 0.01
        %v1208 = vmul.f32 %v827, 0.01
        %v1209 = vmul.f32 %v829, 0.01
        %v1210 = vmul.f32 %v1050, 0.01
        %v1211 = vmul.f32 %v1052, 0.01
        %v1212 = vmul.f32 %v831, 0.01
        %v1213 = vmul.f32 %v833, 0.01
        %v1214 = vmul.f32 %v1054, 0.01
        %v1215 = vmul.f32 %v1056, 0.01
        %v1216 = vmul.f32 %v837, 0.01
        %v1217 = vmul.f32 %v839, 0.01
        %v1218 = vmul.f32 %v1060, 0.01
        %v1219 = vmul.f32 %v1062, 0.01
        %v1220 = vmul.f32 %v841, 0.01
        %v1221 = vmul.f32 %v843, 0.01
        %v1222 = vmul.f32 %v1064, 0.01
        %v1223 = vmul.f32 %v1066, 0.01
        %v1224 = vmul.f32 %v847, 0.01
        %v1225 = vmul.f32 %v849, 0.01
        %v1226 = vmul.f32 %v1070, 0.01
        %v1227 = vmul.f32 %v1072, 0.01
        %v1228 = vmul.f32 %v851, 0.01
        %v1229 = vmul.f32 %v853, 0.01
        %v1230 = vmul.f32 %v1074, 0.01
        %v1231 = vmul.f32 %v1076, 0.01
        %v1232 = vmul.f32 %v857, 0.01
        %v1233 = vmul.f32 %v859, 0.01
        %v1234 = vmul.f32 %v1080, 0.01
        %v1235 = vmul.f32 %v1082, 0.01
        %v1236 = vmul.f32 %v861, 0.01
        %v1237 = vmul.f32 %v863, 0.01
        %v1238 = vmul.f32 %v1084, 0.01
        %v1239 = vmul.f32 %v1086, 0.01
        %v1240 = vmax.f32 %v677, %v1088
        %v1241 = vmax.f32 %v679, %v1089
        %v1242 = vmax.f32 %v900, %v1090
        %v1243 = vmax.f32 %v902, %v1091
        %v1244 = vmax.f32 %v681, %v1092
        %v1245 = vmax.f32 %v683, %v1093
        %v1246 = vmax.f32 %v904, %v1094
        %v1247 = vmax.f32 %v906, %v1095
        %v1248 = vmax.f32 %v687, %v1096
        %v1249 = vmax.f32 %v689, %v1097
        %v1250 = vmax.f32 %v910, %v1098
        %v1251 = vmax.f32 %v912, %v1099
        %v1252 = vmax.f32 %v691, %v1100
        %v1253 = vmax.f32 %v693, %v1101
        %v1254 = vmax.f32 %v914, %v1102
        %v1255 = vmax.f32 %v916, %v1103
        %v1256 = vmax.f32 %v697, %v1104
        %v1257 = vmax.f32 %v699, %v1105
        %v1258 = vmax.f32 %v920, %v1106
        %v1259 = vmax.f32 %v922, %v1107
        %v1260 = vmax.f32 %v701, %v1108
        %v1261 = vmax.f32 %v703, %v1109
        %v1262 = vmax.f32 %v924, %v1110
        %v1263 = vmax.f32 %v926, %v1111
        %v1264 = vmax.f32 %v707, %v1112
        %v1265 = vmax.f32 %v709, %v1113
        %v1266 = vmax.f32 %v930, %v1114
        %v1267 = vmax.f32 %v932, %v1115
        %v1268 = vmax.f32 %v711, %v1116
        %v1269 = vmax.f32 %v713, %v1117
        %v1270 = vmax.f32 %v934, %v1118
        %v1271 = vmax.f32 %v936, %v1119
        %v1272 = vmax.f32 %v717, %v1120
        %v1273 = vmax.f32 %v719, %v1121
        %v1274 = vmax.f32 %v940, %v1122
        %v1275 = vmax.f32 %v942, %v1123
        %v1276 = vmax.f32 %v721, %v1124
        %v1277 = vmax.f32 %v723, %v1125
        %v1278 = vmax.f32 %v944, %v1126
        %v1279 = vmax.f32 %v946, %v1127
        %v1280 = vmax.f32 %v727, %v1128
        %v1281 = vmax.f32 %v729, %v1129
        %v1282 = vmax.f32 %v950, %v1130
        %v1283 = vmax.f32 %v952, %v1131
        %v1284 = vmax.f32 %v731, %v1132
        %v1285 = vmax.f32 %v733, %v1133
        %v1286 = vmax.f32 %v954, %v1134
        %v1287 = vmax.f32 %v956, %v1135
        %v1288 = vmax.f32 %v737, %v1136
        %v1289 = vmax.f32 %v739, %v1137
        %v1290 = vmax.f32 %v960, %v1138
        %v1291 = vmax.f32 %v962, %v1139
        %v1292 = vmax.f32 %v741, %v1140
        %v1293 = vmax.f32 %v743, %v1141
        %v1294 = vmax.f32 %v964, %v1142
        %v1295 = vmax.f32 %v966, %v1143
        %v1296 = vmax.f32 %v747, %v1144
        %v1297 = vmax.f32 %v749, %v1145
        %v1298 = vmax.f32 %v970, %v1146
        %v1299 = vmax.f32 %v972, %v1147
        %v1300 = vmax.f32 %v751, %v1148
        %v1301 = vmax.f32 %v753, %v1149
        %v1302 = vmax.f32 %v974, %v1150
        %v1303 = vmax.f32 %v976, %v1151
        %v1304 = vmax.f32 %v757, %v1152
        %v1305 = vmax.f32 %v759, %v1153
        %v1306 = vmax.f32 %v980, %v1154
        %v1307 = vmax.f32 %v982, %v1155
        %v1308 = vmax.f32 %v761, %v1156
        %v1309 = vmax.f32 %v763, %v1157
        %v1310 = vmax.f32 %v984, %v1158
        %v1311 = vmax.f32 %v986, %v1159
        %v1312 = vmax.f32 %v767, %v1160
        %v1313 = vmax.f32 %v769, %v1161
        %v1314 = vmax.f32 %v990, %v1162
        %v1315 = vmax.f32 %v992, %v1163
        %v1316 = vmax.f32 %v771, %v1164
        %v1317 = vmax.f32 %v773, %v1165
        %v1318 = vmax.f32 %v994, %v1166
        %v1319 = vmax.f32 %v996, %v1167
        %v1320 = vmax.f32 %v777, %v1168
        %v1321 = vmax.f32 %v779, %v1169
        %v1322 = vmax.f32 %v1000, %v1170
        %v1323 = vmax.f32 %v1002, %v1171
        %v1324 = vmax.f32 %v781, %v1172
        %v1325 = vmax.f32 %v783, %v1173
        %v1326 = vmax.f32 %v1004, %v1174
        %v1327 = vmax.f32 %v1006, %v1175
        %v1328 = vmax.f32 %v787, %v1176
        %v1329 = vmax.f32 %v789, %v1177
        %v1330 = vmax.f32 %v1010, %v1178
        %v1331 = vmax.f32 %v1012, %v1179
        %v1332 = vmax.f32 %v791, %v1180
        %v1333 = vmax.f32 %v793, %v1181
        %v1334 = vmax.f32 %v1014, %v1182
        %v1335 = vmax.f32 %v1016, %v1183
        %v1336 = vmax.f32 %v797, %v1184
        %v1337 = vmax.f32 %v799, %v1185
        %v1338 = vmax.f32 %v1020, %v1186
        %v1339 = vmax.f32 %v1022, %v1187
        %v1340 = vmax.f32 %v801, %v1188
        %v1341 = vmax.f32 %v803, %v1189
        %v1342 = vmax.f32 %v1024, %v1190
        %v1343 = vmax.f32 %v1026, %v1191
        %v1344 = vmax.f32 %v807, %v1192
        %v1345 = vmax.f32 %v809, %v1193
        %v1346 = vmax.f32 %v1030, %v1194
        %v1347 = vmax.f32 %v1032, %v1195
        %v1348 = vmax.f32 %v811, %v1196
        %v1349 = vmax.f32 %v813, %v1197
        %v1350 = vmax.f32 %v1034, %v1198
        %v1351 = vmax.f32 %v1036, %v1199
        %v1352 = vmax.f32 %v817, %v1200
        %v1353 = vmax.f32 %v819, %v1201
        %v1354 = vmax.f32 %v1040, %v1202
        %v1355 = vmax.f32 %v1042, %v1203
        %v1356 = vmax.f32 %v821, %v1204
        %v1357 = vmax.f32 %v823, %v1205
        %v1358 = vmax.f32 %v1044, %v1206
        %v1359 = vmax.f32 %v1046, %v1207
        %v1360 = vmax.f32 %v827, %v1208
        %v1361 = vmax.f32 %v829, %v1209
        %v1362 = vmax.f32 %v1050, %v1210
        %v1363 = vmax.f32 %v1052, %v1211
        %v1364 = vmax.f32 %v831, %v1212
        %v1365 = vmax.f32 %v833, %v1213
        %v1366 = vmax.f32 %v1054, %v1214
        %v1367 = vmax.f32 %v1056, %v1215
        %v1368 = vmax.f32 %v837, %v1216
        %v1369 = vmax.f32 %v839, %v1217
        %v1370 = vmax.f32 %v1060, %v1218
        %v1371 = vmax.f32 %v1062, %v1219
        %v1372 = vmax.f32 %v841, %v1220
        %v1373 = vmax.f32 %v843, %v1221
        %v1374 = vmax.f32 %v1064, %v1222
        %v1375 = vmax.f32 %v1066, %v1223
        %v1376 = vmax.f32 %v847, %v1224
        %v1377 = vmax.f32 %v849, %v1225
        %v1378 = vmax.f32 %v1070, %v1226
        %v1379 = vmax.f32 %v1072, %v1227
        %v1380 = vmax.f32 %v851, %v1228
        %v1381 = vmax.f32 %v853, %v1229
        %v1382 = vmax.f32 %v1074, %v1230
        %v1383 = vmax.f32 %v1076, %v1231
        %v1384 = vmax.f32 %v857, %v1232
        %v1385 = vmax.f32 %v859, %v1233
        %v1386 = vmax.f32 %v1080, %v1234
        %v1387 = vmax.f32 %v1082, %v1235
        %v1388 = vmax.f32 %v861, %v1236
        %v1389 = vmax.f32 %v863, %v1237
        %v1390 = vmax.f32 %v1084, %v1238
        %v1391 = vmax.f32 %v1086, %v1239
        %v1392 = vpack.c.bf16 %v1244, %v1240
        %v1393 = vpack.c.bf16 %v1245, %v1241
        %v1394 = vpack.c.bf16 %v1246, %v1242
        %v1395 = vpack.c.bf16 %v1247, %v1243
        %v1396 = vpack.c.bf16 %v1252, %v1248
        %v1397 = vpack.c.bf16 %v1253, %v1249
        %v1398 = vpack.c.bf16 %v1254, %v1250
        %v1399 = vpack.c.bf16 %v1255, %v1251
        %v1400 = vpack.c.bf16 %v1260, %v1256
        %v1401 = vpack.c.bf16 %v1261, %v1257
        %v1402 = vpack.c.bf16 %v1262, %v1258
        %v1403 = vpack.c.bf16 %v1263, %v1259
        %v1404 = vpack.c.bf16 %v1268, %v1264
        %v1405 = vpack.c.bf16 %v1269, %v1265
        %v1406 = vpack.c.bf16 %v1270, %v1266
        %v1407 = vpack.c.bf16 %v1271, %v1267
        %v1408 = vpack.c.bf16 %v1276, %v1272
        %v1409 = vpack.c.bf16 %v1277, %v1273
        %v1410 = vpack.c.bf16 %v1278, %v1274
        %v1411 = vpack.c.bf16 %v1279, %v1275
        %v1412 = vpack.c.bf16 %v1284, %v1280
        %v1413 = vpack.c.bf16 %v1285, %v1281
        %v1414 = vpack.c.bf16 %v1286, %v1282
        %v1415 = vpack.c.bf16 %v1287, %v1283
        %v1416 = vpack.c.bf16 %v1292, %v1288
        %v1417 = vpack.c.bf16 %v1293, %v1289
        %v1418 = vpack.c.bf16 %v1294, %v1290
        %v1419 = vpack.c.bf16 %v1295, %v1291
        %v1420 = vpack.c.bf16 %v1300, %v1296
        %v1421 = vpack.c.bf16 %v1301, %v1297
        %v1422 = vpack.c.bf16 %v1302, %v1298
        %v1423 = vpack.c.bf16 %v1303, %v1299
        %v1424 = vpack.c.bf16 %v1308, %v1304
        %v1425 = vpack.c.bf16 %v1309, %v1305
        %v1426 = vpack.c.bf16 %v1310, %v1306
        %v1427 = vpack.c.bf16 %v1311, %v1307
        %v1428 = vpack.c.bf16 %v1316, %v1312
        %v1429 = vpack.c.bf16 %v1317, %v1313
        %v1430 = vpack.c.bf16 %v1318, %v1314
        %v1431 = vpack.c.bf16 %v1319, %v1315
        %v1432 = vpack.c.bf16 %v1324, %v1320
        %v1433 = vpack.c.bf16 %v1325, %v1321
        %v1434 = vpack.c.bf16 %v1326, %v1322
        %v1435 = vpack.c.bf16 %v1327, %v1323
        %v1436 = vpack.c.bf16 %v1332, %v1328
        %v1437 = vpack.c.bf16 %v1333, %v1329
        %v1438 = vpack.c.bf16 %v1334, %v1330
        %v1439 = vpack.c.bf16 %v1335, %v1331
        %v1440 = vpack.c.bf16 %v1340, %v1336
        %v1441 = vpack.c.bf16 %v1341, %v1337
        %v1442 = vpack.c.bf16 %v1342, %v1338
        %v1443 = vpack.c.bf16 %v1343, %v1339
        %v1444 = vpack.c.bf16 %v1348, %v1344
        %v1445 = vpack.c.bf16 %v1349, %v1345
        %v1446 = vpack.c.bf16 %v1350, %v1346
        %v1447 = vpack.c.bf16 %v1351, %v1347
        %v1448 = vpack.c.bf16 %v1356, %v1352
        %v1449 = vpack.c.bf16 %v1357, %v1353
        %v1450 = vpack.c.bf16 %v1358, %v1354
        %v1451 = vpack.c.bf16 %v1359, %v1355
        %v1452 = vpack.c.bf16 %v1364, %v1360
        %v1453 = vpack.c.bf16 %v1365, %v1361
        %v1454 = vpack.c.bf16 %v1366, %v1362
        %v1455 = vpack.c.bf16 %v1367, %v1363
        %v1456 = vpack.c.bf16 %v1372, %v1368
        %v1457 = vpack.c.bf16 %v1373, %v1369
        %v1458 = vpack.c.bf16 %v1374, %v1370
        %v1459 = vpack.c.bf16 %v1375, %v1371
        %v1460 = vpack.c.bf16 %v1380, %v1376
        %v1461 = vpack.c.bf16 %v1381, %v1377
        %v1462 = vpack.c.bf16 %v1382, %v1378
        %v1463 = vpack.c.bf16 %v1383, %v1379
        %v1464 = vpack.c.bf16 %v1388, %v1384
        %v1465 = vpack.c.bf16 %v1389, %v1385
        %v1466 = vpack.c.bf16 %v1390, %v1386
        %v1467 = vpack.c.bf16 %v1391, %v1387
        %v1468 = vld [vmem:[%s4] sm:$0xff]
        %v1469 = vld [vmem:[%s4 + $0x8] sm:$0xff]
        %v1470 = vld [vmem:[%s4 + $0x10] sm:$0xff]
        %v1471 = vld [vmem:[%s4 + $0x18] sm:$0xff]
        %v1472 = vld [vmem:[%s4 + $0x20] sm:$0xff]
        %v1473 = vld [vmem:[%s4 + $0x28] sm:$0xff]
        %v1474 = vld [vmem:[%s4 + $0x30] sm:$0xff]
        %v1475 = vld [vmem:[%s4 + $0x38] sm:$0xff]
        %v1476 = vld [vmem:[%s4 + $0x40] sm:$0xff]
        %v1477 = vld [vmem:[%s4 + $0x48] sm:$0xff]
        %v1478 = vld [vmem:[%s4 + $0x50] sm:$0xff]
        %v1479 = vld [vmem:[%s4 + $0x58] sm:$0xff]
        %v1480 = vld [vmem:[%s4 + $0x60] sm:$0xff]
        %v1481 = vld [vmem:[%s4 + $0x68] sm:$0xff]
        %v1482 = vld [vmem:[%s4 + $0x70] sm:$0xff]
        %v1483 = vld [vmem:[%s4 + $0x78] sm:$0xff]
        %v1484 = vld [vmem:[%s4 + $0x80] sm:$0xff]
        %v1485 = vld [vmem:[%s4 + $0x88] sm:$0xff]
        %v1486 = vld [vmem:[%s4 + $0x90] sm:$0xff]
        %v1487 = vld [vmem:[%s4 + $0x98] sm:$0xff]
        %v1488 = vld [vmem:[%s4 + $0xa0] sm:$0xff]
        %v1489 = vld [vmem:[%s4 + $0xa8] sm:$0xff]
        %v1490 = vld [vmem:[%s4 + $0xb0] sm:$0xff]
        %v1491 = vld [vmem:[%s4 + $0xb8] sm:$0xff]
        %v1492 = vld [vmem:[%s4 + $0xc0] sm:$0xff]
        %v1493 = vld [vmem:[%s4 + $0xc8] sm:$0xff]
        %v1494 = vld [vmem:[%s4 + $0xd0] sm:$0xff]
        %v1495 = vld [vmem:[%s4 + $0xd8] sm:$0xff]
        %v1496 = vld [vmem:[%s4 + $0xe0] sm:$0xff]
        %v1497 = vld [vmem:[%s4 + $0xe8] sm:$0xff]
        %v1498 = vld [vmem:[%s4 + $0xf0] sm:$0xff]
        %v1499 = vld [vmem:[%s4 + $0xf8] sm:$0xff]
        %v1500 = vld [vmem:[%s4 + $0x100] sm:$0xff]
        %v1501 = vld [vmem:[%s4 + $0x108] sm:$0xff]
        %v1502 = vld [vmem:[%s4 + $0x110] sm:$0xff]
        %v1503 = vld [vmem:[%s4 + $0x118] sm:$0xff]
        %v1504 = vld [vmem:[%s4 + $0x120] sm:$0xff]
        %v1505 = vld [vmem:[%s4 + $0x128] sm:$0xff]
        %v1506 = vld [vmem:[%s4 + $0x130] sm:$0xff]
        %v1507 = vld [vmem:[%s4 + $0x138] sm:$0xff]
        %v1508 = vld [vmem:[%s4 + $0x140] sm:$0xff]
        %v1509 = vld [vmem:[%s4 + $0x148] sm:$0xff]
        %v1510 = vld [vmem:[%s4 + $0x150] sm:$0xff]
        %v1511 = vld [vmem:[%s4 + $0x158] sm:$0xff]
        %v1512 = vld [vmem:[%s4 + $0x160] sm:$0xff]
        %v1513 = vld [vmem:[%s4 + $0x168] sm:$0xff]
        %v1514 = vld [vmem:[%s4 + $0x170] sm:$0xff]
        %v1515 = vld [vmem:[%s4 + $0x178] sm:$0xff]
        %v1516 = vld [vmem:[%s4 + $0x180] sm:$0xff]
        %v1517 = vld [vmem:[%s4 + $0x188] sm:$0xff]
        %v1518 = vld [vmem:[%s4 + $0x190] sm:$0xff]
        %v1519 = vld [vmem:[%s4 + $0x198] sm:$0xff]
        %v1520 = vld [vmem:[%s4 + $0x1a0] sm:$0xff]
        %v1521 = vld [vmem:[%s4 + $0x1a8] sm:$0xff]
        %v1522 = vld [vmem:[%s4 + $0x1b0] sm:$0xff]
        %v1523 = vld [vmem:[%s4 + $0x1b8] sm:$0xff]
        %v1524 = vld [vmem:[%s4 + $0x1c0] sm:$0xff]
        %v1525 = vld [vmem:[%s4 + $0x1c8] sm:$0xff]
        %v1526 = vld [vmem:[%s4 + $0x1d0] sm:$0xff]
        %v1527 = vld [vmem:[%s4 + $0x1d8] sm:$0xff]
        %v1528 = vld [vmem:[%s4 + $0x1e0] sm:$0xff]
        %v1529 = vld [vmem:[%s4 + $0x1e8] sm:$0xff]
        %v1530 = vld [vmem:[%s4 + $0x1f0] sm:$0xff]
        %v1531 = vld [vmem:[%s4 + $0x1f8] sm:$0xff]
        %v1532 = vld [vmem:[%s4 + $0x200] sm:$0xff]
        %v1533 = vld [vmem:[%s4 + $0x208] sm:$0xff]
        %v1534 = vld [vmem:[%s4 + $0x210] sm:$0xff]
        %v1535 = vld [vmem:[%s4 + $0x218] sm:$0xff]
        %v1536 = vld [vmem:[%s4 + $0x220] sm:$0xff]
        %v1537 = vld [vmem:[%s4 + $0x228] sm:$0xff]
        %v1538 = vld [vmem:[%s4 + $0x230] sm:$0xff]
        %v1539 = vld [vmem:[%s4 + $0x238] sm:$0xff]
        %v1540 = vld [vmem:[%s4 + $0x240] sm:$0xff]
        %v1541 = vld [vmem:[%s4 + $0x248] sm:$0xff]
        %v1542 = vld [vmem:[%s4 + $0x250] sm:$0xff]
        %v1543 = vld [vmem:[%s4 + $0x258] sm:$0xff]
        %v1544 = vld [vmem:[%s4 + $0x260] sm:$0xff]
        %v1545 = vld [vmem:[%s4 + $0x268] sm:$0xff]
        %v1546 = vld [vmem:[%s4 + $0x270] sm:$0xff]
        %v1547 = vld [vmem:[%s4 + $0x278] sm:$0xff]
        %v1548 = vld [vmem:[%s4 + $0x280] sm:$0xff]
        %v1549 = vld [vmem:[%s4 + $0x288] sm:$0xff]
        %v1550 = vld [vmem:[%s4 + $0x290] sm:$0xff]
        %v1551 = vld [vmem:[%s4 + $0x298] sm:$0xff]
        %v1552 = vld [vmem:[%s4 + $0x2a0] sm:$0xff]
        %v1553 = vld [vmem:[%s4 + $0x2a8] sm:$0xff]
        %v1554 = vld [vmem:[%s4 + $0x2b0] sm:$0xff]
        %v1555 = vld [vmem:[%s4 + $0x2b8] sm:$0xff]
        %v1556 = vld [vmem:[%s4 + $0x2c0] sm:$0xff]
        %v1557 = vld [vmem:[%s4 + $0x2c8] sm:$0xff]
        %v1558 = vld [vmem:[%s4 + $0x2d0] sm:$0xff]
        %v1559 = vld [vmem:[%s4 + $0x2d8] sm:$0xff]
        %v1560 = vld [vmem:[%s4 + $0x2e0] sm:$0xff]
        %v1561 = vld [vmem:[%s4 + $0x2e8] sm:$0xff]
        %v1562 = vld [vmem:[%s4 + $0x2f0] sm:$0xff]
        %v1563 = vld [vmem:[%s4 + $0x2f8] sm:$0xff]
        %v1564 = vld [vmem:[%s4 + $0x300] sm:$0xff]
        %v1565 = vld [vmem:[%s4 + $0x308] sm:$0xff]
        %v1566 = vld [vmem:[%s4 + $0x310] sm:$0xff]
        %v1567 = vld [vmem:[%s4 + $0x318] sm:$0xff]
        %v1568 = vld [vmem:[%s4 + $0x320] sm:$0xff]
        %v1569 = vld [vmem:[%s4 + $0x328] sm:$0xff]
        %v1570 = vld [vmem:[%s4 + $0x330] sm:$0xff]
        %v1571 = vld [vmem:[%s4 + $0x338] sm:$0xff]
        %v1572 = vld [vmem:[%s4 + $0x340] sm:$0xff]
        %v1573 = vld [vmem:[%s4 + $0x348] sm:$0xff]
        %v1574 = vld [vmem:[%s4 + $0x350] sm:$0xff]
        %v1575 = vld [vmem:[%s4 + $0x358] sm:$0xff]
        %v1576 = vld [vmem:[%s4 + $0x360] sm:$0xff]
        %v1577 = vld [vmem:[%s4 + $0x368] sm:$0xff]
        %v1578 = vld [vmem:[%s4 + $0x370] sm:$0xff]
        %v1579 = vld [vmem:[%s4 + $0x378] sm:$0xff]
        %v1580 = vld [vmem:[%s4 + $0x380] sm:$0xff]
        %v1581 = vld [vmem:[%s4 + $0x388] sm:$0xff]
        %v1582 = vld [vmem:[%s4 + $0x390] sm:$0xff]
        %v1583 = vld [vmem:[%s4 + $0x398] sm:$0xff]
        %v1584 = vld [vmem:[%s4 + $0x3a0] sm:$0xff]
        %v1585 = vld [vmem:[%s4 + $0x3a8] sm:$0xff]
        %v1586 = vld [vmem:[%s4 + $0x3b0] sm:$0xff]
        %v1587 = vld [vmem:[%s4 + $0x3b8] sm:$0xff]
        %v1588 = vld [vmem:[%s4 + $0x3c0] sm:$0xff]
        %v1589 = vld [vmem:[%s4 + $0x3c8] sm:$0xff]
        %v1590 = vld [vmem:[%s4 + $0x3d0] sm:$0xff]
        %v1591 = vld [vmem:[%s4 + $0x3d8] sm:$0xff]
        %v1592 = vld [vmem:[%s4 + $0x3e0] sm:$0xff]
        %v1593 = vld [vmem:[%s4 + $0x3e8] sm:$0xff]
        %v1594 = vld [vmem:[%s4 + $0x3f0] sm:$0xff]
        %v1595 = vld [vmem:[%s4 + $0x3f8] sm:$0xff]
        %v1596 = vld [vmem:[%s421] sm:$0xff]
        %v1597 = vld [vmem:[%s421 + $0x8] sm:$0xff]
        %v1598 = vld [vmem:[%s421 + $0x10] sm:$0xff]
        %v1599 = vld [vmem:[%s421 + $0x18] sm:$0xff]
        %v1600 = vld [vmem:[%s421 + $0x20] sm:$0xff]
        %v1601 = vld [vmem:[%s421 + $0x28] sm:$0xff]
        %v1602 = vld [vmem:[%s421 + $0x30] sm:$0xff]
        %v1603 = vld [vmem:[%s421 + $0x38] sm:$0xff]
        %v1604 = vld [vmem:[%s421 + $0x40] sm:$0xff]
        %v1605 = vld [vmem:[%s421 + $0x48] sm:$0xff]
        %v1606 = vld [vmem:[%s421 + $0x50] sm:$0xff]
        %v1607 = vld [vmem:[%s421 + $0x58] sm:$0xff]
        %v1608 = vld [vmem:[%s421 + $0x60] sm:$0xff]
        %v1609 = vld [vmem:[%s421 + $0x68] sm:$0xff]
        %v1610 = vld [vmem:[%s421 + $0x70] sm:$0xff]
        %v1611 = vld [vmem:[%s421 + $0x78] sm:$0xff]
        %v1612 = vld [vmem:[%s421 + $0x80] sm:$0xff]
        %v1613 = vld [vmem:[%s421 + $0x88] sm:$0xff]
        %v1614 = vld [vmem:[%s421 + $0x90] sm:$0xff]
        %v1615 = vld [vmem:[%s421 + $0x98] sm:$0xff]
        %v1616 = vld [vmem:[%s421 + $0xa0] sm:$0xff]
        %v1617 = vld [vmem:[%s421 + $0xa8] sm:$0xff]
        %v1618 = vld [vmem:[%s421 + $0xb0] sm:$0xff]
        %v1619 = vld [vmem:[%s421 + $0xb8] sm:$0xff]
        %v1620 = vld [vmem:[%s421 + $0xc0] sm:$0xff]
        %v1621 = vld [vmem:[%s421 + $0xc8] sm:$0xff]
        %v1622 = vld [vmem:[%s421 + $0xd0] sm:$0xff]
        %v1623 = vld [vmem:[%s421 + $0xd8] sm:$0xff]
        %v1624 = vld [vmem:[%s421 + $0xe0] sm:$0xff]
        %v1625 = vld [vmem:[%s421 + $0xe8] sm:$0xff]
        %v1626 = vld [vmem:[%s421 + $0xf0] sm:$0xff]
        %v1627 = vld [vmem:[%s421 + $0xf8] sm:$0xff]
        %v1628 = vld [vmem:[%s421 + $0x100] sm:$0xff]
        %v1629 = vld [vmem:[%s421 + $0x108] sm:$0xff]
        %v1630 = vld [vmem:[%s421 + $0x110] sm:$0xff]
        %v1631 = vld [vmem:[%s421 + $0x118] sm:$0xff]
        %v1632 = vld [vmem:[%s421 + $0x120] sm:$0xff]
        %v1633 = vld [vmem:[%s421 + $0x128] sm:$0xff]
        %v1634 = vpack.c.bf16 %v1597, %v1596
        %v1635 = vpack.c.bf16 %v1599, %v1598
        %v1636 = vpack.c.bf16 %v1601, %v1600
        %v1637 = vpack.c.bf16 %v1603, %v1602
        %v1638 = vpack.c.bf16 %v1605, %v1604
        %v1639 = vpack.c.bf16 %v1607, %v1606
        %v1640 = vpack.c.bf16 %v1609, %v1608
        %v1641 = vpack.c.bf16 %v1611, %v1610
        %v1642 = vpack.c.bf16 %v1613, %v1612
        %v1643 = vpack.c.bf16 %v1615, %v1614
        %v1644 = vpack.c.bf16 %v1617, %v1616
        %v1645 = vpack.c.bf16 %v1619, %v1618
        %v1646 = vpack.c.bf16 %v1621, %v1620
        %v1647 = vpack.c.bf16 %v1623, %v1622
        %v1648 = vpack.c.bf16 %v1625, %v1624
        %v1649 = vpack.c.bf16 %v1627, %v1626
        %v1650 = vpack.c.bf16 %v1629, %v1628
        %v1651 = vpack.c.bf16 %v1631, %v1630
        %v1652 = vpack.c.bf16 %v1633, %v1632
        %v1653 = vld [vmem:[%s5] sm:$0xff]
        %v1654 = vld [vmem:[%s5 + $0x8] sm:$0xff]
        %v1657 = vunpack.c.l.b16 %v1653
        %v1658 = vunpack.c.h.b16 %v1653
        %v1659 = vunpack.c.l.b16 %v1654
        %v1660 = vunpack.c.h.b16 %v1654
        %v1661 = vpack.c.b16 %v1657, %v1657
        %v1662 = vpack.c.b16 %v1658, %v1658
        %v1663 = vpack.c.b16 %v1659, %v1659
        %v1664 = vpack.c.b16 %v1660, %v1660
        %vm1665 = vcmask 64512
        %v1667 = vsel %vm1665, %v1634, 0
        %v1670 = vsel %vm1665, %v1635, 0
        %v1673 = vsel %vm1665, %v1636, 0
        %v1676 = vsel %vm1665, %v1637, 0
        %v1679 = vsel %vm1665, %v1638, 0
        %v1682 = vsel %vm1665, %v1639, 0
        %v1685 = vsel %vm1665, %v1640, 0
        %v1688 = vsel %vm1665, %v1641, 0
        %v1691 = vsel %vm1665, %v1642, 0
        %v1694 = vsel %vm1665, %v1643, 0
        %v1697 = vsel %vm1665, %v1644, 0
        %v1700 = vsel %vm1665, %v1645, 0
        %v1703 = vsel %vm1665, %v1646, 0
        %v1706 = vsel %vm1665, %v1647, 0
        %v1709 = vsel %vm1665, %v1648, 0
        %v1712 = vsel %vm1665, %v1649, 0
        %v1715 = vsel %vm1665, %v1650, 0
        %v1718 = vsel %vm1665, %v1651, 0
        %v1721 = vsel %vm1665, %v1652, 0
        %vm1723 = vcmask 1043456
        %v1725 = vsel %vm1723, %v1661, 0
        %v1728 = vsel %vm1723, %v1662, 0
        %v1731 = vsel %vm1723, %v1663, 0
        %v1734 = vsel %vm1723, %v1664, 0
        %1736 = vmatprep.subr.bf16.mxu0 0
        %1737 = vmatpush1.bf16.msra.mxu0 0
        %1738 = vmatprep.subr.bf16.mxu0 0
        %1739 = vmatpush1.bf16.msra.mxu0 0
        %1740 = vmatprep.subr.bf16.mxu0 0
        %1741 = vmatpush1.bf16.msra.mxu0 0
        %1742 = vmatprep.subr.bf16.mxu0 0
        %1743 = vmatpush1.bf16.msra.mxu0 0
        %1744 = vmatprep.subr.bf16.mxu0 0
        %1745 = vmatpush1.bf16.msra.mxu0 0
        %1746 = vmatprep.subr.bf16.mxu0 0
        %1747 = vmatpush1.bf16.msra.mxu0 0
        %1748 = vmatprep.subr.bf16.mxu0 0
        %1749 = vmatpush1.bf16.msra.mxu0 0
        %1750 = vmatprep.subr.bf16.mxu0 %v1728
        %1751 = vmatpush1.bf16.msra.mxu0 %v1725
        %1752 = vmatprep.subr.bf16.mxu0 0
        %1753 = vmatpush2.bf16.msra.mxu0 0
        %1754 = vmatprep.subr.bf16.mxu0 0
        %1755 = vmatpush2.bf16.msra.mxu0 0
        %1756 = vmatprep.subr.bf16.mxu0 0
        %1757 = vmatpush2.bf16.msra.mxu0 0
        %1758 = vmatprep.subr.bf16.mxu0 0
        %1759 = vmatpush2.bf16.msra.mxu0 0
        %1760 = vmatprep.subr.bf16.mxu0 0
        %1761 = vmatpush2.bf16.msra.mxu0 0
        %1762 = vmatprep.subr.bf16.mxu0 0
        %1763 = vmatpush2.bf16.msra.mxu0 0
        %1764 = vmatprep.subr.bf16.mxu0 0
        %1765 = vmatpush2.bf16.msra.mxu0 0
        %1766 = vmatprep.subr.bf16.mxu0 0
        %1767 = vmatpush2.bf16.msra.mxu0 0
        %1768 = vmatprep.mubr.bf16.mxu0 0
        %1769 = vmatmul.mubr.bf16.gmra.mxu0 %v1667
        %v1770 = vpop.f32.mrf.mxu0
        %v1771 = vadd.f32 0.0, %v1770
        %v1772 = vpop.f32.mrf.mxu0
        %v1773 = vadd.f32 0.0, %v1772
        %v1774 = vpop.f32.mrf.mxu0
        %v1775 = vadd.f32 0.0, %v1774
        %v1776 = vpop.f32.mrf.mxu0
        %v1777 = vadd.f32 0.0, %v1776
        %1778 = vmatprep.mubr.bf16.mxu0 0
        %1779 = vmatmul.mubr.bf16.gmra.mxu0 %v1670
        %v1780 = vpop.f32.mrf.mxu0
        %v1781 = vadd.f32 0.0, %v1780
        %v1782 = vpop.f32.mrf.mxu0
        %v1783 = vadd.f32 0.0, %v1782
        %v1784 = vpop.f32.mrf.mxu0
        %v1785 = vadd.f32 0.0, %v1784
        %v1786 = vpop.f32.mrf.mxu0
        %v1787 = vadd.f32 0.0, %v1786
        %1788 = vmatprep.mubr.bf16.mxu0 0
        %1789 = vmatmul.mubr.bf16.gmra.mxu0 %v1673
        %v1790 = vpop.f32.mrf.mxu0
        %v1791 = vadd.f32 0.0, %v1790
        %v1792 = vpop.f32.mrf.mxu0
        %v1793 = vadd.f32 0.0, %v1792
        %v1794 = vpop.f32.mrf.mxu0
        %v1795 = vadd.f32 0.0, %v1794
        %v1796 = vpop.f32.mrf.mxu0
        %v1797 = vadd.f32 0.0, %v1796
        %1798 = vmatprep.mubr.bf16.mxu0 0
        %1799 = vmatmul.mubr.bf16.gmra.mxu0 %v1676
        %v1800 = vpop.f32.mrf.mxu0
        %v1801 = vadd.f32 0.0, %v1800
        %v1802 = vpop.f32.mrf.mxu0
        %v1803 = vadd.f32 0.0, %v1802
        %v1804 = vpop.f32.mrf.mxu0
        %v1805 = vadd.f32 0.0, %v1804
        %v1806 = vpop.f32.mrf.mxu0
        %v1807 = vadd.f32 0.0, %v1806
        %1808 = vmatprep.mubr.bf16.mxu0 0
        %1809 = vmatmul.mubr.bf16.gmra.mxu0 %v1679
        %v1810 = vpop.f32.mrf.mxu0
        %v1811 = vadd.f32 0.0, %v1810
        %v1812 = vpop.f32.mrf.mxu0
        %v1813 = vadd.f32 0.0, %v1812
        %v1814 = vpop.f32.mrf.mxu0
        %v1815 = vadd.f32 0.0, %v1814
        %v1816 = vpop.f32.mrf.mxu0
        %v1817 = vadd.f32 0.0, %v1816
        %1818 = vmatprep.mubr.bf16.mxu0 0
        %1819 = vmatmul.mubr.bf16.gmra.mxu0 %v1682
        %v1820 = vpop.f32.mrf.mxu0
        %v1821 = vadd.f32 0.0, %v1820
        %v1822 = vpop.f32.mrf.mxu0
        %v1823 = vadd.f32 0.0, %v1822
        %v1824 = vpop.f32.mrf.mxu0
        %v1825 = vadd.f32 0.0, %v1824
        %v1826 = vpop.f32.mrf.mxu0
        %v1827 = vadd.f32 0.0, %v1826
        %1828 = vmatprep.mubr.bf16.mxu0 0
        %1829 = vmatmul.mubr.bf16.gmra.mxu0 %v1685
        %v1830 = vpop.f32.mrf.mxu0
        %v1831 = vadd.f32 0.0, %v1830
        %v1832 = vpop.f32.mrf.mxu0
        %v1833 = vadd.f32 0.0, %v1832
        %v1834 = vpop.f32.mrf.mxu0
        %v1835 = vadd.f32 0.0, %v1834
        %v1836 = vpop.f32.mrf.mxu0
        %v1837 = vadd.f32 0.0, %v1836
        %1838 = vmatprep.mubr.bf16.mxu0 0
        %1839 = vmatmul.mubr.bf16.gmra.mxu0 %v1688
        %v1840 = vpop.f32.mrf.mxu0
        %v1841 = vadd.f32 0.0, %v1840
        %v1842 = vpop.f32.mrf.mxu0
        %v1843 = vadd.f32 0.0, %v1842
        %v1844 = vpop.f32.mrf.mxu0
        %v1845 = vadd.f32 0.0, %v1844
        %v1846 = vpop.f32.mrf.mxu0
        %v1847 = vadd.f32 0.0, %v1846
        %1848 = vmatprep.mubr.bf16.mxu0 0
        %1849 = vmatmul.mubr.bf16.gmra.mxu0 %v1691
        %v1850 = vpop.f32.mrf.mxu0
        %v1851 = vadd.f32 0.0, %v1850
        %v1852 = vpop.f32.mrf.mxu0
        %v1853 = vadd.f32 0.0, %v1852
        %v1854 = vpop.f32.mrf.mxu0
        %v1855 = vadd.f32 0.0, %v1854
        %v1856 = vpop.f32.mrf.mxu0
        %v1857 = vadd.f32 0.0, %v1856
        %1858 = vmatprep.mubr.bf16.mxu0 0
        %1859 = vmatmul.mubr.bf16.gmra.mxu0 %v1694
        %v1860 = vpop.f32.mrf.mxu0
        %v1861 = vadd.f32 0.0, %v1860
        %v1862 = vpop.f32.mrf.mxu0
        %v1863 = vadd.f32 0.0, %v1862
        %v1864 = vpop.f32.mrf.mxu0
        %v1865 = vadd.f32 0.0, %v1864
        %v1866 = vpop.f32.mrf.mxu0
        %v1867 = vadd.f32 0.0, %v1866
        %1868 = vmatprep.mubr.bf16.mxu0 0
        %1869 = vmatmul.mubr.bf16.gmra.mxu0 %v1697
        %v1870 = vpop.f32.mrf.mxu0
        %v1871 = vadd.f32 0.0, %v1870
        %v1872 = vpop.f32.mrf.mxu0
        %v1873 = vadd.f32 0.0, %v1872
        %v1874 = vpop.f32.mrf.mxu0
        %v1875 = vadd.f32 0.0, %v1874
        %v1876 = vpop.f32.mrf.mxu0
        %v1877 = vadd.f32 0.0, %v1876
        %1878 = vmatprep.mubr.bf16.mxu0 0
        %1879 = vmatmul.mubr.bf16.gmra.mxu0 %v1700
        %v1880 = vpop.f32.mrf.mxu0
        %v1881 = vadd.f32 0.0, %v1880
        %v1882 = vpop.f32.mrf.mxu0
        %v1883 = vadd.f32 0.0, %v1882
        %v1884 = vpop.f32.mrf.mxu0
        %v1885 = vadd.f32 0.0, %v1884
        %v1886 = vpop.f32.mrf.mxu0
        %v1887 = vadd.f32 0.0, %v1886
        %1888 = vmatprep.mubr.bf16.mxu0 0
        %1889 = vmatmul.mubr.bf16.gmra.mxu0 %v1703
        %v1890 = vpop.f32.mrf.mxu0
        %v1891 = vadd.f32 0.0, %v1890
        %v1892 = vpop.f32.mrf.mxu0
        %v1893 = vadd.f32 0.0, %v1892
        %v1894 = vpop.f32.mrf.mxu0
        %v1895 = vadd.f32 0.0, %v1894
        %v1896 = vpop.f32.mrf.mxu0
        %v1897 = vadd.f32 0.0, %v1896
        %1898 = vmatprep.mubr.bf16.mxu0 0
        %1899 = vmatmul.mubr.bf16.gmra.mxu0 %v1706
        %v1900 = vpop.f32.mrf.mxu0
        %v1901 = vadd.f32 0.0, %v1900
        %v1902 = vpop.f32.mrf.mxu0
        %v1903 = vadd.f32 0.0, %v1902
        %v1904 = vpop.f32.mrf.mxu0
        %v1905 = vadd.f32 0.0, %v1904
        %v1906 = vpop.f32.mrf.mxu0
        %v1907 = vadd.f32 0.0, %v1906
        %1908 = vmatprep.mubr.bf16.mxu0 0
        %1909 = vmatmul.mubr.bf16.gmra.mxu0 %v1709
        %v1910 = vpop.f32.mrf.mxu0
        %v1911 = vadd.f32 0.0, %v1910
        %v1912 = vpop.f32.mrf.mxu0
        %v1913 = vadd.f32 0.0, %v1912
        %v1914 = vpop.f32.mrf.mxu0
        %v1915 = vadd.f32 0.0, %v1914
        %v1916 = vpop.f32.mrf.mxu0
        %v1917 = vadd.f32 0.0, %v1916
        %1918 = vmatprep.mubr.bf16.mxu0 0
        %1919 = vmatmul.mubr.bf16.gmra.mxu0 %v1712
        %v1920 = vpop.f32.mrf.mxu0
        %v1921 = vadd.f32 0.0, %v1920
        %v1922 = vpop.f32.mrf.mxu0
        %v1923 = vadd.f32 0.0, %v1922
        %v1924 = vpop.f32.mrf.mxu0
        %v1925 = vadd.f32 0.0, %v1924
        %v1926 = vpop.f32.mrf.mxu0
        %v1927 = vadd.f32 0.0, %v1926
        %1928 = vmatprep.mubr.bf16.mxu0 0
        %1929 = vmatmul.mubr.bf16.gmra.mxu0 %v1715
        %v1930 = vpop.f32.mrf.mxu0
        %v1931 = vadd.f32 0.0, %v1930
        %v1932 = vpop.f32.mrf.mxu0
        %v1933 = vadd.f32 0.0, %v1932
        %v1934 = vpop.f32.mrf.mxu0
        %v1935 = vadd.f32 0.0, %v1934
        %v1936 = vpop.f32.mrf.mxu0
        %v1937 = vadd.f32 0.0, %v1936
        %1938 = vmatprep.mubr.bf16.mxu0 0
        %1939 = vmatmul.mubr.bf16.gmra.mxu0 %v1718
        %v1940 = vpop.f32.mrf.mxu0
        %v1941 = vadd.f32 0.0, %v1940
        %v1942 = vpop.f32.mrf.mxu0
        %v1943 = vadd.f32 0.0, %v1942
        %v1944 = vpop.f32.mrf.mxu0
        %v1945 = vadd.f32 0.0, %v1944
        %v1946 = vpop.f32.mrf.mxu0
        %v1947 = vadd.f32 0.0, %v1946
        %1948 = vmatprep.mubr.bf16.mxu0 0
        %1949 = vmatmul.mubr.bf16.gmra.mxu0 %v1721
        %v1950 = vpop.f32.mrf.mxu0
        %v1951 = vadd.f32 0.0, %v1950
        %v1952 = vpop.f32.mrf.mxu0
        %v1953 = vadd.f32 0.0, %v1952
        %v1954 = vpop.f32.mrf.mxu0
        %v1955 = vadd.f32 0.0, %v1954
        %v1956 = vpop.f32.mrf.mxu0
        %v1957 = vadd.f32 0.0, %v1956
        %1958 = vdwg.mxu0
        %1959 = vmatprep.subr.bf16.mxu0 0
        %1960 = vmatpush1.bf16.msra.mxu0 0
        %1961 = vmatprep.subr.bf16.mxu0 0
        %1962 = vmatpush1.bf16.msra.mxu0 0
        %1963 = vmatprep.subr.bf16.mxu0 0
        %1964 = vmatpush1.bf16.msra.mxu0 0
        %1965 = vmatprep.subr.bf16.mxu0 0
        %1966 = vmatpush1.bf16.msra.mxu0 0
        %1967 = vmatprep.subr.bf16.mxu0 0
        %1968 = vmatpush1.bf16.msra.mxu0 0
        %1969 = vmatprep.subr.bf16.mxu0 0
        %1970 = vmatpush1.bf16.msra.mxu0 0
        %1971 = vmatprep.subr.bf16.mxu0 0
        %1972 = vmatpush1.bf16.msra.mxu0 0
        %1973 = vmatprep.subr.bf16.mxu0 %v1734
        %1974 = vmatpush1.bf16.msra.mxu0 %v1731
        %1975 = vmatprep.subr.bf16.mxu0 0
        %1976 = vmatpush2.bf16.msra.mxu0 0
        %1977 = vmatprep.subr.bf16.mxu0 0
        %1978 = vmatpush2.bf16.msra.mxu0 0
        %1979 = vmatprep.subr.bf16.mxu0 0
        %1980 = vmatpush2.bf16.msra.mxu0 0
        %1981 = vmatprep.subr.bf16.mxu0 0
        %1982 = vmatpush2.bf16.msra.mxu0 0
        %1983 = vmatprep.subr.bf16.mxu0 0
        %1984 = vmatpush2.bf16.msra.mxu0 0
        %1985 = vmatprep.subr.bf16.mxu0 0
        %1986 = vmatpush2.bf16.msra.mxu0 0
        %1987 = vmatprep.subr.bf16.mxu0 0
        %1988 = vmatpush2.bf16.msra.mxu0 0
        %1989 = vmatprep.subr.bf16.mxu0 0
        %1990 = vmatpush2.bf16.msra.mxu0 0
        %1991 = vmatprep.mubr.bf16.mxu0 0
        %1992 = vmatmul.mubr.bf16.gmra.mxu0 %v1667
        %v1993 = vpop.f32.mrf.mxu0
        %v1994 = vadd.f32 0.0, %v1993
        %v1995 = vpop.f32.mrf.mxu0
        %v1996 = vadd.f32 0.0, %v1995
        %v1997 = vpop.f32.mrf.mxu0
        %v1998 = vadd.f32 0.0, %v1997
        %v1999 = vpop.f32.mrf.mxu0
        %v2000 = vadd.f32 0.0, %v1999
        %2001 = vmatprep.mubr.bf16.mxu0 0
        %2002 = vmatmul.mubr.bf16.gmra.mxu0 %v1670
        %v2003 = vpop.f32.mrf.mxu0
        %v2004 = vadd.f32 0.0, %v2003
        %v2005 = vpop.f32.mrf.mxu0
        %v2006 = vadd.f32 0.0, %v2005
        %v2007 = vpop.f32.mrf.mxu0
        %v2008 = vadd.f32 0.0, %v2007
        %v2009 = vpop.f32.mrf.mxu0
        %v2010 = vadd.f32 0.0, %v2009
        %2011 = vmatprep.mubr.bf16.mxu0 0
        %2012 = vmatmul.mubr.bf16.gmra.mxu0 %v1673
        %v2013 = vpop.f32.mrf.mxu0
        %v2014 = vadd.f32 0.0, %v2013
        %v2015 = vpop.f32.mrf.mxu0
        %v2016 = vadd.f32 0.0, %v2015
        %v2017 = vpop.f32.mrf.mxu0
        %v2018 = vadd.f32 0.0, %v2017
        %v2019 = vpop.f32.mrf.mxu0
        %v2020 = vadd.f32 0.0, %v2019
        %2021 = vmatprep.mubr.bf16.mxu0 0
        %2022 = vmatmul.mubr.bf16.gmra.mxu0 %v1676
        %v2023 = vpop.f32.mrf.mxu0
        %v2024 = vadd.f32 0.0, %v2023
        %v2025 = vpop.f32.mrf.mxu0
        %v2026 = vadd.f32 0.0, %v2025
        %v2027 = vpop.f32.mrf.mxu0
        %v2028 = vadd.f32 0.0, %v2027
        %v2029 = vpop.f32.mrf.mxu0
        %v2030 = vadd.f32 0.0, %v2029
        %2031 = vmatprep.mubr.bf16.mxu0 0
        %2032 = vmatmul.mubr.bf16.gmra.mxu0 %v1679
        %v2033 = vpop.f32.mrf.mxu0
        %v2034 = vadd.f32 0.0, %v2033
        %v2035 = vpop.f32.mrf.mxu0
        %v2036 = vadd.f32 0.0, %v2035
        %v2037 = vpop.f32.mrf.mxu0
        %v2038 = vadd.f32 0.0, %v2037
        %v2039 = vpop.f32.mrf.mxu0
        %v2040 = vadd.f32 0.0, %v2039
        %2041 = vmatprep.mubr.bf16.mxu0 0
        %2042 = vmatmul.mubr.bf16.gmra.mxu0 %v1682
        %v2043 = vpop.f32.mrf.mxu0
        %v2044 = vadd.f32 0.0, %v2043
        %v2045 = vpop.f32.mrf.mxu0
        %v2046 = vadd.f32 0.0, %v2045
        %v2047 = vpop.f32.mrf.mxu0
        %v2048 = vadd.f32 0.0, %v2047
        %v2049 = vpop.f32.mrf.mxu0
        %v2050 = vadd.f32 0.0, %v2049
        %2051 = vmatprep.mubr.bf16.mxu0 0
        %2052 = vmatmul.mubr.bf16.gmra.mxu0 %v1685
        %v2053 = vpop.f32.mrf.mxu0
        %v2054 = vadd.f32 0.0, %v2053
        %v2055 = vpop.f32.mrf.mxu0
        %v2056 = vadd.f32 0.0, %v2055
        %v2057 = vpop.f32.mrf.mxu0
        %v2058 = vadd.f32 0.0, %v2057
        %v2059 = vpop.f32.mrf.mxu0
        %v2060 = vadd.f32 0.0, %v2059
        %2061 = vmatprep.mubr.bf16.mxu0 0
        %2062 = vmatmul.mubr.bf16.gmra.mxu0 %v1688
        %v2063 = vpop.f32.mrf.mxu0
        %v2064 = vadd.f32 0.0, %v2063
        %v2065 = vpop.f32.mrf.mxu0
        %v2066 = vadd.f32 0.0, %v2065
        %v2067 = vpop.f32.mrf.mxu0
        %v2068 = vadd.f32 0.0, %v2067
        %v2069 = vpop.f32.mrf.mxu0
        %v2070 = vadd.f32 0.0, %v2069
        %2071 = vmatprep.mubr.bf16.mxu0 0
        %2072 = vmatmul.mubr.bf16.gmra.mxu0 %v1691
        %v2073 = vpop.f32.mrf.mxu0
        %v2074 = vadd.f32 0.0, %v2073
        %v2075 = vpop.f32.mrf.mxu0
        %v2076 = vadd.f32 0.0, %v2075
        %v2077 = vpop.f32.mrf.mxu0
        %v2078 = vadd.f32 0.0, %v2077
        %v2079 = vpop.f32.mrf.mxu0
        %v2080 = vadd.f32 0.0, %v2079
        %2081 = vmatprep.mubr.bf16.mxu0 0
        %2082 = vmatmul.mubr.bf16.gmra.mxu0 %v1694
        %v2083 = vpop.f32.mrf.mxu0
        %v2084 = vadd.f32 0.0, %v2083
        %v2085 = vpop.f32.mrf.mxu0
        %v2086 = vadd.f32 0.0, %v2085
        %v2087 = vpop.f32.mrf.mxu0
        %v2088 = vadd.f32 0.0, %v2087
        %v2089 = vpop.f32.mrf.mxu0
        %v2090 = vadd.f32 0.0, %v2089
        %2091 = vmatprep.mubr.bf16.mxu0 0
        %2092 = vmatmul.mubr.bf16.gmra.mxu0 %v1697
        %v2093 = vpop.f32.mrf.mxu0
        %v2094 = vadd.f32 0.0, %v2093
        %v2095 = vpop.f32.mrf.mxu0
        %v2096 = vadd.f32 0.0, %v2095
        %v2097 = vpop.f32.mrf.mxu0
        %v2098 = vadd.f32 0.0, %v2097
        %v2099 = vpop.f32.mrf.mxu0
        %v2100 = vadd.f32 0.0, %v2099
        %2101 = vmatprep.mubr.bf16.mxu0 0
        %2102 = vmatmul.mubr.bf16.gmra.mxu0 %v1700
        %v2103 = vpop.f32.mrf.mxu0
        %v2104 = vadd.f32 0.0, %v2103
        %v2105 = vpop.f32.mrf.mxu0
        %v2106 = vadd.f32 0.0, %v2105
        %v2107 = vpop.f32.mrf.mxu0
        %v2108 = vadd.f32 0.0, %v2107
        %v2109 = vpop.f32.mrf.mxu0
        %v2110 = vadd.f32 0.0, %v2109
        %2111 = vmatprep.mubr.bf16.mxu0 0
        %2112 = vmatmul.mubr.bf16.gmra.mxu0 %v1703
        %v2113 = vpop.f32.mrf.mxu0
        %v2114 = vadd.f32 0.0, %v2113
        %v2115 = vpop.f32.mrf.mxu0
        %v2116 = vadd.f32 0.0, %v2115
        %v2117 = vpop.f32.mrf.mxu0
        %v2118 = vadd.f32 0.0, %v2117
        %v2119 = vpop.f32.mrf.mxu0
        %v2120 = vadd.f32 0.0, %v2119
        %2121 = vmatprep.mubr.bf16.mxu0 0
        %2122 = vmatmul.mubr.bf16.gmra.mxu0 %v1706
        %v2123 = vpop.f32.mrf.mxu0
        %v2124 = vadd.f32 0.0, %v2123
        %v2125 = vpop.f32.mrf.mxu0
        %v2126 = vadd.f32 0.0, %v2125
        %v2127 = vpop.f32.mrf.mxu0
        %v2128 = vadd.f32 0.0, %v2127
        %v2129 = vpop.f32.mrf.mxu0
        %v2130 = vadd.f32 0.0, %v2129
        %2131 = vmatprep.mubr.bf16.mxu0 0
        %2132 = vmatmul.mubr.bf16.gmra.mxu0 %v1709
        %v2133 = vpop.f32.mrf.mxu0
        %v2134 = vadd.f32 0.0, %v2133
        %v2135 = vpop.f32.mrf.mxu0
        %v2136 = vadd.f32 0.0, %v2135
        %v2137 = vpop.f32.mrf.mxu0
        %v2138 = vadd.f32 0.0, %v2137
        %v2139 = vpop.f32.mrf.mxu0
        %v2140 = vadd.f32 0.0, %v2139
        %2141 = vmatprep.mubr.bf16.mxu0 0
        %2142 = vmatmul.mubr.bf16.gmra.mxu0 %v1712
        %v2143 = vpop.f32.mrf.mxu0
        %v2144 = vadd.f32 0.0, %v2143
        %v2145 = vpop.f32.mrf.mxu0
        %v2146 = vadd.f32 0.0, %v2145
        %v2147 = vpop.f32.mrf.mxu0
        %v2148 = vadd.f32 0.0, %v2147
        %v2149 = vpop.f32.mrf.mxu0
        %v2150 = vadd.f32 0.0, %v2149
        %2151 = vmatprep.mubr.bf16.mxu0 0
        %2152 = vmatmul.mubr.bf16.gmra.mxu0 %v1715
        %v2153 = vpop.f32.mrf.mxu0
        %v2154 = vadd.f32 0.0, %v2153
        %v2155 = vpop.f32.mrf.mxu0
        %v2156 = vadd.f32 0.0, %v2155
        %v2157 = vpop.f32.mrf.mxu0
        %v2158 = vadd.f32 0.0, %v2157
        %v2159 = vpop.f32.mrf.mxu0
        %v2160 = vadd.f32 0.0, %v2159
        %2161 = vmatprep.mubr.bf16.mxu0 0
        %2162 = vmatmul.mubr.bf16.gmra.mxu0 %v1718
        %v2163 = vpop.f32.mrf.mxu0
        %v2164 = vadd.f32 0.0, %v2163
        %v2165 = vpop.f32.mrf.mxu0
        %v2166 = vadd.f32 0.0, %v2165
        %v2167 = vpop.f32.mrf.mxu0
        %v2168 = vadd.f32 0.0, %v2167
        %v2169 = vpop.f32.mrf.mxu0
        %v2170 = vadd.f32 0.0, %v2169
        %2171 = vmatprep.mubr.bf16.mxu0 0
        %2172 = vmatmul.mubr.bf16.gmra.mxu0 %v1721
        %v2173 = vpop.f32.mrf.mxu0
        %v2174 = vadd.f32 0.0, %v2173
        %v2175 = vpop.f32.mrf.mxu0
        %v2176 = vadd.f32 0.0, %v2175
        %v2177 = vpop.f32.mrf.mxu0
        %v2178 = vadd.f32 0.0, %v2177
        %v2179 = vpop.f32.mrf.mxu0
        %v2180 = vadd.f32 0.0, %v2179
        %2181 = vdwg.mxu0
        %v2310 = vunpack.c.l.b16 %v1468
        %v2311 = vunpack.c.h.b16 %v1468
        %v2312 = vunpack.c.l.b16 %v1469
        %v2313 = vunpack.c.h.b16 %v1469
        %v2314 = vunpack.c.l.b16 %v1470
        %v2315 = vunpack.c.h.b16 %v1470
        %v2316 = vunpack.c.l.b16 %v1471
        %v2317 = vunpack.c.h.b16 %v1471
        %v2318 = vunpack.c.l.b16 %v1472
        %v2319 = vunpack.c.h.b16 %v1472
        %v2320 = vunpack.c.l.b16 %v1473
        %v2321 = vunpack.c.h.b16 %v1473
        %v2322 = vunpack.c.l.b16 %v1474
        %v2323 = vunpack.c.h.b16 %v1474
        %v2324 = vunpack.c.l.b16 %v1475
        %v2325 = vunpack.c.h.b16 %v1475
        %v2326 = vunpack.c.l.b16 %v1476
        %v2327 = vunpack.c.h.b16 %v1476
        %v2328 = vunpack.c.l.b16 %v1477
        %v2329 = vunpack.c.h.b16 %v1477
        %v2330 = vunpack.c.l.b16 %v1478
        %v2331 = vunpack.c.h.b16 %v1478
        %v2332 = vunpack.c.l.b16 %v1479
        %v2333 = vunpack.c.h.b16 %v1479
        %v2334 = vunpack.c.l.b16 %v1480
        %v2335 = vunpack.c.h.b16 %v1480
        %v2336 = vunpack.c.l.b16 %v1481
        %v2337 = vunpack.c.h.b16 %v1481
        %v2338 = vunpack.c.l.b16 %v1482
        %v2339 = vunpack.c.h.b16 %v1482
        %v2340 = vunpack.c.l.b16 %v1483
        %v2341 = vunpack.c.h.b16 %v1483
        %v2342 = vunpack.c.l.b16 %v1484
        %v2343 = vunpack.c.h.b16 %v1484
        %v2344 = vunpack.c.l.b16 %v1485
        %v2345 = vunpack.c.h.b16 %v1485
        %v2346 = vunpack.c.l.b16 %v1486
        %v2347 = vunpack.c.h.b16 %v1486
        %v2348 = vunpack.c.l.b16 %v1487
        %v2349 = vunpack.c.h.b16 %v1487
        %v2350 = vunpack.c.l.b16 %v1488
        %v2351 = vunpack.c.h.b16 %v1488
        %v2352 = vunpack.c.l.b16 %v1489
        %v2353 = vunpack.c.h.b16 %v1489
        %v2354 = vunpack.c.l.b16 %v1490
        %v2355 = vunpack.c.h.b16 %v1490
        %v2356 = vunpack.c.l.b16 %v1491
        %v2357 = vunpack.c.h.b16 %v1491
        %v2358 = vunpack.c.l.b16 %v1492
        %v2359 = vunpack.c.h.b16 %v1492
        %v2360 = vunpack.c.l.b16 %v1493
        %v2361 = vunpack.c.h.b16 %v1493
        %v2362 = vunpack.c.l.b16 %v1494
        %v2363 = vunpack.c.h.b16 %v1494
        %v2364 = vunpack.c.l.b16 %v1495
        %v2365 = vunpack.c.h.b16 %v1495
        %v2366 = vunpack.c.l.b16 %v1496
        %v2367 = vunpack.c.h.b16 %v1496
        %v2368 = vunpack.c.l.b16 %v1497
        %v2369 = vunpack.c.h.b16 %v1497
        %v2370 = vunpack.c.l.b16 %v1498
        %v2371 = vunpack.c.h.b16 %v1498
        %v2372 = vunpack.c.l.b16 %v1499
        %v2373 = vunpack.c.h.b16 %v1499
        %v2374 = vunpack.c.l.b16 %v1500
        %v2375 = vunpack.c.h.b16 %v1500
        %v2376 = vunpack.c.l.b16 %v1501
        %v2377 = vunpack.c.h.b16 %v1501
        %v2378 = vunpack.c.l.b16 %v1502
        %v2379 = vunpack.c.h.b16 %v1502
        %v2380 = vunpack.c.l.b16 %v1503
        %v2381 = vunpack.c.h.b16 %v1503
        %v2382 = vunpack.c.l.b16 %v1504
        %v2383 = vunpack.c.h.b16 %v1504
        %v2384 = vunpack.c.l.b16 %v1505
        %v2385 = vunpack.c.h.b16 %v1505
        %v2386 = vunpack.c.l.b16 %v1506
        %v2387 = vunpack.c.h.b16 %v1506
        %v2388 = vunpack.c.l.b16 %v1507
        %v2389 = vunpack.c.h.b16 %v1507
        %v2390 = vunpack.c.l.b16 %v1508
        %v2391 = vunpack.c.h.b16 %v1508
        %v2392 = vunpack.c.l.b16 %v1509
        %v2393 = vunpack.c.h.b16 %v1509
        %v2394 = vunpack.c.l.b16 %v1510
        %v2395 = vunpack.c.h.b16 %v1510
        %v2396 = vunpack.c.l.b16 %v1511
        %v2397 = vunpack.c.h.b16 %v1511
        %v2398 = vunpack.c.l.b16 %v1512
        %v2399 = vunpack.c.h.b16 %v1512
        %v2400 = vunpack.c.l.b16 %v1513
        %v2401 = vunpack.c.h.b16 %v1513
        %v2402 = vunpack.c.l.b16 %v1514
        %v2403 = vunpack.c.h.b16 %v1514
        %v2404 = vunpack.c.l.b16 %v1515
        %v2405 = vunpack.c.h.b16 %v1515
        %v2406 = vunpack.c.l.b16 %v1516
        %v2407 = vunpack.c.h.b16 %v1516
        %v2408 = vunpack.c.l.b16 %v1517
        %v2409 = vunpack.c.h.b16 %v1517
        %v2410 = vunpack.c.l.b16 %v1518
        %v2411 = vunpack.c.h.b16 %v1518
        %v2412 = vunpack.c.l.b16 %v1519
        %v2413 = vunpack.c.h.b16 %v1519
        %v2414 = vunpack.c.l.b16 %v1520
        %v2415 = vunpack.c.h.b16 %v1520
        %v2416 = vunpack.c.l.b16 %v1521
        %v2417 = vunpack.c.h.b16 %v1521
        %v2418 = vunpack.c.l.b16 %v1522
        %v2419 = vunpack.c.h.b16 %v1522
        %v2420 = vunpack.c.l.b16 %v1523
        %v2421 = vunpack.c.h.b16 %v1523
        %v2422 = vunpack.c.l.b16 %v1524
        %v2423 = vunpack.c.h.b16 %v1524
        %v2424 = vunpack.c.l.b16 %v1525
        %v2425 = vunpack.c.h.b16 %v1525
        %v2426 = vunpack.c.l.b16 %v1526
        %v2427 = vunpack.c.h.b16 %v1526
        %v2428 = vunpack.c.l.b16 %v1527
        %v2429 = vunpack.c.h.b16 %v1527
        %v2430 = vunpack.c.l.b16 %v1528
        %v2431 = vunpack.c.h.b16 %v1528
        %v2432 = vunpack.c.l.b16 %v1529
        %v2433 = vunpack.c.h.b16 %v1529
        %v2434 = vunpack.c.l.b16 %v1530
        %v2435 = vunpack.c.h.b16 %v1530
        %v2436 = vunpack.c.l.b16 %v1531
        %v2437 = vunpack.c.h.b16 %v1531
        %v2438 = vunpack.c.l.b16 %v1532
        %v2439 = vunpack.c.h.b16 %v1532
        %v2440 = vunpack.c.l.b16 %v1533
        %v2441 = vunpack.c.h.b16 %v1533
        %v2442 = vunpack.c.l.b16 %v1534
        %v2443 = vunpack.c.h.b16 %v1534
        %v2444 = vunpack.c.l.b16 %v1535
        %v2445 = vunpack.c.h.b16 %v1535
        %v2446 = vunpack.c.l.b16 %v1536
        %v2447 = vunpack.c.h.b16 %v1536
        %v2448 = vunpack.c.l.b16 %v1537
        %v2449 = vunpack.c.h.b16 %v1537
        %v2450 = vunpack.c.l.b16 %v1538
        %v2451 = vunpack.c.h.b16 %v1538
        %v2452 = vunpack.c.l.b16 %v1539
        %v2453 = vunpack.c.h.b16 %v1539
        %v2454 = vunpack.c.l.b16 %v1540
        %v2455 = vunpack.c.h.b16 %v1540
        %v2456 = vunpack.c.l.b16 %v1541
        %v2457 = vunpack.c.h.b16 %v1541
        %v2458 = vunpack.c.l.b16 %v1542
        %v2459 = vunpack.c.h.b16 %v1542
        %v2460 = vunpack.c.l.b16 %v1543
        %v2461 = vunpack.c.h.b16 %v1543
        %v2462 = vunpack.c.l.b16 %v1544
        %v2463 = vunpack.c.h.b16 %v1544
        %v2464 = vunpack.c.l.b16 %v1545
        %v2465 = vunpack.c.h.b16 %v1545
        %v2466 = vunpack.c.l.b16 %v1546
        %v2467 = vunpack.c.h.b16 %v1546
        %v2468 = vunpack.c.l.b16 %v1547
        %v2469 = vunpack.c.h.b16 %v1547
        %v2470 = vunpack.c.l.b16 %v1548
        %v2471 = vunpack.c.h.b16 %v1548
        %v2472 = vunpack.c.l.b16 %v1549
        %v2473 = vunpack.c.h.b16 %v1549
        %v2474 = vunpack.c.l.b16 %v1550
        %v2475 = vunpack.c.h.b16 %v1550
        %v2476 = vunpack.c.l.b16 %v1551
        %v2477 = vunpack.c.h.b16 %v1551
        %v2478 = vunpack.c.l.b16 %v1552
        %v2479 = vunpack.c.h.b16 %v1552
        %v2480 = vunpack.c.l.b16 %v1553
        %v2481 = vunpack.c.h.b16 %v1553
        %v2482 = vunpack.c.l.b16 %v1554
        %v2483 = vunpack.c.h.b16 %v1554
        %v2484 = vunpack.c.l.b16 %v1555
        %v2485 = vunpack.c.h.b16 %v1555
        %v2486 = vunpack.c.l.b16 %v1556
        %v2487 = vunpack.c.h.b16 %v1556
        %v2488 = vunpack.c.l.b16 %v1557
        %v2489 = vunpack.c.h.b16 %v1557
        %v2490 = vunpack.c.l.b16 %v1558
        %v2491 = vunpack.c.h.b16 %v1558
        %v2492 = vunpack.c.l.b16 %v1559
        %v2493 = vunpack.c.h.b16 %v1559
        %v2494 = vunpack.c.l.b16 %v1560
        %v2495 = vunpack.c.h.b16 %v1560
        %v2496 = vunpack.c.l.b16 %v1561
        %v2497 = vunpack.c.h.b16 %v1561
        %v2498 = vunpack.c.l.b16 %v1562
        %v2499 = vunpack.c.h.b16 %v1562
        %v2500 = vunpack.c.l.b16 %v1563
        %v2501 = vunpack.c.h.b16 %v1563
        %v2502 = vunpack.c.l.b16 %v1564
        %v2503 = vunpack.c.h.b16 %v1564
        %v2504 = vunpack.c.l.b16 %v1565
        %v2505 = vunpack.c.h.b16 %v1565
        %v2506 = vunpack.c.l.b16 %v1566
        %v2507 = vunpack.c.h.b16 %v1566
        %v2508 = vunpack.c.l.b16 %v1567
        %v2509 = vunpack.c.h.b16 %v1567
        %v2510 = vunpack.c.l.b16 %v1568
        %v2511 = vunpack.c.h.b16 %v1568
        %v2512 = vunpack.c.l.b16 %v1569
        %v2513 = vunpack.c.h.b16 %v1569
        %v2514 = vunpack.c.l.b16 %v1570
        %v2515 = vunpack.c.h.b16 %v1570
        %v2516 = vunpack.c.l.b16 %v1571
        %v2517 = vunpack.c.h.b16 %v1571
        %v2518 = vunpack.c.l.b16 %v1572
        %v2519 = vunpack.c.h.b16 %v1572
        %v2520 = vunpack.c.l.b16 %v1573
        %v2521 = vunpack.c.h.b16 %v1573
        %v2522 = vunpack.c.l.b16 %v1574
        %v2523 = vunpack.c.h.b16 %v1574
        %v2524 = vunpack.c.l.b16 %v1575
        %v2525 = vunpack.c.h.b16 %v1575
        %v2526 = vunpack.c.l.b16 %v1576
        %v2527 = vunpack.c.h.b16 %v1576
        %v2528 = vunpack.c.l.b16 %v1577
        %v2529 = vunpack.c.h.b16 %v1577
        %v2530 = vunpack.c.l.b16 %v1578
        %v2531 = vunpack.c.h.b16 %v1578
        %v2532 = vunpack.c.l.b16 %v1579
        %v2533 = vunpack.c.h.b16 %v1579
        %v2534 = vunpack.c.l.b16 %v1580
        %v2535 = vunpack.c.h.b16 %v1580
        %v2536 = vunpack.c.l.b16 %v1581
        %v2537 = vunpack.c.h.b16 %v1581
        %v2538 = vunpack.c.l.b16 %v1582
        %v2539 = vunpack.c.h.b16 %v1582
        %v2540 = vunpack.c.l.b16 %v1583
        %v2541 = vunpack.c.h.b16 %v1583
        %v2542 = vunpack.c.l.b16 %v1584
        %v2543 = vunpack.c.h.b16 %v1584
        %v2544 = vunpack.c.l.b16 %v1585
        %v2545 = vunpack.c.h.b16 %v1585
        %v2546 = vunpack.c.l.b16 %v1586
        %v2547 = vunpack.c.h.b16 %v1586
        %v2548 = vunpack.c.l.b16 %v1587
        %v2549 = vunpack.c.h.b16 %v1587
        %v2550 = vunpack.c.l.b16 %v1588
        %v2551 = vunpack.c.h.b16 %v1588
        %v2552 = vunpack.c.l.b16 %v1589
        %v2553 = vunpack.c.h.b16 %v1589
        %v2554 = vunpack.c.l.b16 %v1590
        %v2555 = vunpack.c.h.b16 %v1590
        %v2556 = vunpack.c.l.b16 %v1591
        %v2557 = vunpack.c.h.b16 %v1591
        %v2558 = vunpack.c.l.b16 %v1592
        %v2559 = vunpack.c.h.b16 %v1592
        %v2560 = vunpack.c.l.b16 %v1593
        %v2561 = vunpack.c.h.b16 %v1593
        %v2562 = vunpack.c.l.b16 %v1594
        %v2563 = vunpack.c.h.b16 %v1594
        %v2564 = vunpack.c.l.b16 %v1595
        %v2565 = vunpack.c.h.b16 %v1595
        %v2566 = vpack.c.b16 %v2314, %v2310
        %v2567 = vpack.c.b16 %v2315, %v2311
        %v2568 = vpack.c.b16 %v2316, %v2312
        %v2569 = vpack.c.b16 %v2317, %v2313
        %v2570 = vpack.c.b16 %v2322, %v2318
        %v2571 = vpack.c.b16 %v2323, %v2319
        %v2572 = vpack.c.b16 %v2324, %v2320
        %v2573 = vpack.c.b16 %v2325, %v2321
        %v2574 = vpack.c.b16 %v2330, %v2326
        %v2575 = vpack.c.b16 %v2331, %v2327
        %v2576 = vpack.c.b16 %v2332, %v2328
        %v2577 = vpack.c.b16 %v2333, %v2329
        %v2578 = vpack.c.b16 %v2338, %v2334
        %v2579 = vpack.c.b16 %v2339, %v2335
        %v2580 = vpack.c.b16 %v2340, %v2336
        %v2581 = vpack.c.b16 %v2341, %v2337
        %v2582 = vpack.c.b16 %v2346, %v2342
        %v2583 = vpack.c.b16 %v2347, %v2343
        %v2584 = vpack.c.b16 %v2348, %v2344
        %v2585 = vpack.c.b16 %v2349, %v2345
        %v2586 = vpack.c.b16 %v2354, %v2350
        %v2587 = vpack.c.b16 %v2355, %v2351
        %v2588 = vpack.c.b16 %v2356, %v2352
        %v2589 = vpack.c.b16 %v2357, %v2353
        %v2590 = vpack.c.b16 %v2362, %v2358
        %v2591 = vpack.c.b16 %v2363, %v2359
        %v2592 = vpack.c.b16 %v2364, %v2360
        %v2593 = vpack.c.b16 %v2365, %v2361
        %v2594 = vpack.c.b16 %v2370, %v2366
        %v2595 = vpack.c.b16 %v2371, %v2367
        %v2596 = vpack.c.b16 %v2372, %v2368
        %v2597 = vpack.c.b16 %v2373, %v2369
        %v2598 = vpack.c.b16 %v2378, %v2374
        %v2599 = vpack.c.b16 %v2379, %v2375
        %v2600 = vpack.c.b16 %v2380, %v2376
        %v2601 = vpack.c.b16 %v2381, %v2377
        %v2602 = vpack.c.b16 %v2386, %v2382
        %v2603 = vpack.c.b16 %v2387, %v2383
        %v2604 = vpack.c.b16 %v2388, %v2384
        %v2605 = vpack.c.b16 %v2389, %v2385
        %v2606 = vpack.c.b16 %v2394, %v2390
        %v2607 = vpack.c.b16 %v2395, %v2391
        %v2608 = vpack.c.b16 %v2396, %v2392
        %v2609 = vpack.c.b16 %v2397, %v2393
        %v2610 = vpack.c.b16 %v2402, %v2398
        %v2611 = vpack.c.b16 %v2403, %v2399
        %v2612 = vpack.c.b16 %v2404, %v2400
        %v2613 = vpack.c.b16 %v2405, %v2401
        %v2614 = vpack.c.b16 %v2410, %v2406
        %v2615 = vpack.c.b16 %v2411, %v2407
        %v2616 = vpack.c.b16 %v2412, %v2408
        %v2617 = vpack.c.b16 %v2413, %v2409
        %v2618 = vpack.c.b16 %v2418, %v2414
        %v2619 = vpack.c.b16 %v2419, %v2415
        %v2620 = vpack.c.b16 %v2420, %v2416
        %v2621 = vpack.c.b16 %v2421, %v2417
        %v2622 = vpack.c.b16 %v2426, %v2422
        %v2623 = vpack.c.b16 %v2427, %v2423
        %v2624 = vpack.c.b16 %v2428, %v2424
        %v2625 = vpack.c.b16 %v2429, %v2425
        %v2626 = vpack.c.b16 %v2434, %v2430
        %v2627 = vpack.c.b16 %v2435, %v2431
        %v2628 = vpack.c.b16 %v2436, %v2432
        %v2629 = vpack.c.b16 %v2437, %v2433
        %v2630 = vpack.c.b16 %v2442, %v2438
        %v2631 = vpack.c.b16 %v2443, %v2439
        %v2632 = vpack.c.b16 %v2444, %v2440
        %v2633 = vpack.c.b16 %v2445, %v2441
        %v2634 = vpack.c.b16 %v2450, %v2446
        %v2635 = vpack.c.b16 %v2451, %v2447
        %v2636 = vpack.c.b16 %v2452, %v2448
        %v2637 = vpack.c.b16 %v2453, %v2449
        %v2638 = vpack.c.b16 %v2458, %v2454
        %v2639 = vpack.c.b16 %v2459, %v2455
        %v2640 = vpack.c.b16 %v2460, %v2456
        %v2641 = vpack.c.b16 %v2461, %v2457
        %v2642 = vpack.c.b16 %v2466, %v2462
        %v2643 = vpack.c.b16 %v2467, %v2463
        %v2644 = vpack.c.b16 %v2468, %v2464
        %v2645 = vpack.c.b16 %v2469, %v2465
        %v2646 = vpack.c.b16 %v2474, %v2470
        %v2647 = vpack.c.b16 %v2475, %v2471
        %v2648 = vpack.c.b16 %v2476, %v2472
        %v2649 = vpack.c.b16 %v2477, %v2473
        %v2650 = vpack.c.b16 %v2482, %v2478
        %v2651 = vpack.c.b16 %v2483, %v2479
        %v2652 = vpack.c.b16 %v2484, %v2480
        %v2653 = vpack.c.b16 %v2485, %v2481
        %v2654 = vpack.c.b16 %v2490, %v2486
        %v2655 = vpack.c.b16 %v2491, %v2487
        %v2656 = vpack.c.b16 %v2492, %v2488
        %v2657 = vpack.c.b16 %v2493, %v2489
        %v2658 = vpack.c.b16 %v2498, %v2494
        %v2659 = vpack.c.b16 %v2499, %v2495
        %v2660 = vpack.c.b16 %v2500, %v2496
        %v2661 = vpack.c.b16 %v2501, %v2497
        %v2662 = vpack.c.b16 %v2506, %v2502
        %v2663 = vpack.c.b16 %v2507, %v2503
        %v2664 = vpack.c.b16 %v2508, %v2504
        %v2665 = vpack.c.b16 %v2509, %v2505
        %v2666 = vpack.c.b16 %v2514, %v2510
        %v2667 = vpack.c.b16 %v2515, %v2511
        %v2668 = vpack.c.b16 %v2516, %v2512
        %v2669 = vpack.c.b16 %v2517, %v2513
        %v2670 = vpack.c.b16 %v2522, %v2518
        %v2671 = vpack.c.b16 %v2523, %v2519
        %v2672 = vpack.c.b16 %v2524, %v2520
        %v2673 = vpack.c.b16 %v2525, %v2521
        %v2674 = vpack.c.b16 %v2530, %v2526
        %v2675 = vpack.c.b16 %v2531, %v2527
        %v2676 = vpack.c.b16 %v2532, %v2528
        %v2677 = vpack.c.b16 %v2533, %v2529
        %v2678 = vpack.c.b16 %v2538, %v2534
        %v2679 = vpack.c.b16 %v2539, %v2535
        %v2680 = vpack.c.b16 %v2540, %v2536
        %v2681 = vpack.c.b16 %v2541, %v2537
        %v2682 = vpack.c.b16 %v2546, %v2542
        %v2683 = vpack.c.b16 %v2547, %v2543
        %v2684 = vpack.c.b16 %v2548, %v2544
        %v2685 = vpack.c.b16 %v2549, %v2545
        %v2686 = vpack.c.b16 %v2554, %v2550
        %v2687 = vpack.c.b16 %v2555, %v2551
        %v2688 = vpack.c.b16 %v2556, %v2552
        %v2689 = vpack.c.b16 %v2557, %v2553
        %v2690 = vpack.c.b16 %v2562, %v2558
        %v2691 = vpack.c.b16 %v2563, %v2559
        %v2692 = vpack.c.b16 %v2564, %v2560
        %v2693 = vpack.c.b16 %v2565, %v2561
        %2822 = vmatprep.subr.bf16.mxu0 %v2595
        %2823 = vmatpush1.bf16.msra.mxu0 %v2594
        %2824 = vmatprep.subr.bf16.mxu0 %v2591
        %2825 = vmatpush1.bf16.msra.mxu0 %v2590
        %2826 = vmatprep.subr.bf16.mxu0 %v2587
        %2827 = vmatpush1.bf16.msra.mxu0 %v2586
        %2828 = vmatprep.subr.bf16.mxu0 %v2583
        %2829 = vmatpush1.bf16.msra.mxu0 %v2582
        %2830 = vmatprep.subr.bf16.mxu0 %v2579
        %2831 = vmatpush1.bf16.msra.mxu0 %v2578
        %2832 = vmatprep.subr.bf16.mxu0 %v2575
        %2833 = vmatpush1.bf16.msra.mxu0 %v2574
        %2834 = vmatprep.subr.bf16.mxu0 %v2571
        %2835 = vmatpush1.bf16.msra.mxu0 %v2570
        %2836 = vmatprep.subr.bf16.mxu0 %v2567
        %2837 = vmatpush1.bf16.msra.mxu0 %v2566
        %2838 = vmatprep.subr.bf16.mxu0 %v2627
        %2839 = vmatpush2.bf16.msra.mxu0 %v2626
        %2840 = vmatprep.subr.bf16.mxu0 %v2623
        %2841 = vmatpush2.bf16.msra.mxu0 %v2622
        %2842 = vmatprep.subr.bf16.mxu0 %v2619
        %2843 = vmatpush2.bf16.msra.mxu0 %v2618
        %2844 = vmatprep.subr.bf16.mxu0 %v2615
        %2845 = vmatpush2.bf16.msra.mxu0 %v2614
        %2846 = vmatprep.subr.bf16.mxu0 %v2611
        %2847 = vmatpush2.bf16.msra.mxu0 %v2610
        %2848 = vmatprep.subr.bf16.mxu0 %v2607
        %2849 = vmatpush2.bf16.msra.mxu0 %v2606
        %2850 = vmatprep.subr.bf16.mxu0 %v2603
        %2851 = vmatpush2.bf16.msra.mxu0 %v2602
        %2852 = vmatprep.subr.bf16.mxu0 %v2599
        %2853 = vmatpush2.bf16.msra.mxu0 %v2598
        %2854 = vmatprep.mubr.bf16.mxu0 %v1393
        %2855 = vmatmul.mubr.bf16.gmra.mxu0 %v1392
        %v2856 = vpop.f32.mrf.mxu0
        %v2857 = vadd.f32 %v1771, %v2856
        %v2858 = vpop.f32.mrf.mxu0
        %v2859 = vadd.f32 %v1773, %v2858
        %v2860 = vpop.f32.mrf.mxu0
        %v2861 = vadd.f32 %v1775, %v2860
        %v2862 = vpop.f32.mrf.mxu0
        %v2863 = vadd.f32 %v1777, %v2862
        %2864 = vmatprep.mubr.bf16.mxu0 %v1397
        %2865 = vmatmul.mubr.bf16.gmra.mxu0 %v1396
        %v2866 = vpop.f32.mrf.mxu0
        %v2867 = vadd.f32 %v1781, %v2866
        %v2868 = vpop.f32.mrf.mxu0
        %v2869 = vadd.f32 %v1783, %v2868
        %v2870 = vpop.f32.mrf.mxu0
        %v2871 = vadd.f32 %v1785, %v2870
        %v2872 = vpop.f32.mrf.mxu0
        %v2873 = vadd.f32 %v1787, %v2872
        %2874 = vmatprep.mubr.bf16.mxu0 %v1401
        %2875 = vmatmul.mubr.bf16.gmra.mxu0 %v1400
        %v2876 = vpop.f32.mrf.mxu0
        %v2877 = vadd.f32 %v1791, %v2876
        %v2878 = vpop.f32.mrf.mxu0
        %v2879 = vadd.f32 %v1793, %v2878
        %v2880 = vpop.f32.mrf.mxu0
        %v2881 = vadd.f32 %v1795, %v2880
        %v2882 = vpop.f32.mrf.mxu0
        %v2883 = vadd.f32 %v1797, %v2882
        %2884 = vmatprep.mubr.bf16.mxu0 %v1405
        %2885 = vmatmul.mubr.bf16.gmra.mxu0 %v1404
        %v2886 = vpop.f32.mrf.mxu0
        %v2887 = vadd.f32 %v1801, %v2886
        %v2888 = vpop.f32.mrf.mxu0
        %v2889 = vadd.f32 %v1803, %v2888
        %v2890 = vpop.f32.mrf.mxu0
        %v2891 = vadd.f32 %v1805, %v2890
        %v2892 = vpop.f32.mrf.mxu0
        %v2893 = vadd.f32 %v1807, %v2892
        %2894 = vmatprep.mubr.bf16.mxu0 %v1409
        %2895 = vmatmul.mubr.bf16.gmra.mxu0 %v1408
        %v2896 = vpop.f32.mrf.mxu0
        %v2897 = vadd.f32 %v1811, %v2896
        %v2898 = vpop.f32.mrf.mxu0
        %v2899 = vadd.f32 %v1813, %v2898
        %v2900 = vpop.f32.mrf.mxu0
        %v2901 = vadd.f32 %v1815, %v2900
        %v2902 = vpop.f32.mrf.mxu0
        %v2903 = vadd.f32 %v1817, %v2902
        %2904 = vmatprep.mubr.bf16.mxu0 %v1413
        %2905 = vmatmul.mubr.bf16.gmra.mxu0 %v1412
        %v2906 = vpop.f32.mrf.mxu0
        %v2907 = vadd.f32 %v1821, %v2906
        %v2908 = vpop.f32.mrf.mxu0
        %v2909 = vadd.f32 %v1823, %v2908
        %v2910 = vpop.f32.mrf.mxu0
        %v2911 = vadd.f32 %v1825, %v2910
        %v2912 = vpop.f32.mrf.mxu0
        %v2913 = vadd.f32 %v1827, %v2912
        %2914 = vmatprep.mubr.bf16.mxu0 %v1417
        %2915 = vmatmul.mubr.bf16.gmra.mxu0 %v1416
        %v2916 = vpop.f32.mrf.mxu0
        %v2917 = vadd.f32 %v1831, %v2916
        %v2918 = vpop.f32.mrf.mxu0
        %v2919 = vadd.f32 %v1833, %v2918
        %v2920 = vpop.f32.mrf.mxu0
        %v2921 = vadd.f32 %v1835, %v2920
        %v2922 = vpop.f32.mrf.mxu0
        %v2923 = vadd.f32 %v1837, %v2922
        %2924 = vmatprep.mubr.bf16.mxu0 %v1421
        %2925 = vmatmul.mubr.bf16.gmra.mxu0 %v1420
        %v2926 = vpop.f32.mrf.mxu0
        %v2927 = vadd.f32 %v1841, %v2926
        %v2928 = vpop.f32.mrf.mxu0
        %v2929 = vadd.f32 %v1843, %v2928
        %v2930 = vpop.f32.mrf.mxu0
        %v2931 = vadd.f32 %v1845, %v2930
        %v2932 = vpop.f32.mrf.mxu0
        %v2933 = vadd.f32 %v1847, %v2932
        %2934 = vmatprep.mubr.bf16.mxu0 %v1425
        %2935 = vmatmul.mubr.bf16.gmra.mxu0 %v1424
        %v2936 = vpop.f32.mrf.mxu0
        %v2937 = vadd.f32 %v1851, %v2936
        %v2938 = vpop.f32.mrf.mxu0
        %v2939 = vadd.f32 %v1853, %v2938
        %v2940 = vpop.f32.mrf.mxu0
        %v2941 = vadd.f32 %v1855, %v2940
        %v2942 = vpop.f32.mrf.mxu0
        %v2943 = vadd.f32 %v1857, %v2942
        %2944 = vmatprep.mubr.bf16.mxu0 %v1429
        %2945 = vmatmul.mubr.bf16.gmra.mxu0 %v1428
        %v2946 = vpop.f32.mrf.mxu0
        %v2947 = vadd.f32 %v1861, %v2946
        %v2948 = vpop.f32.mrf.mxu0
        %v2949 = vadd.f32 %v1863, %v2948
        %v2950 = vpop.f32.mrf.mxu0
        %v2951 = vadd.f32 %v1865, %v2950
        %v2952 = vpop.f32.mrf.mxu0
        %v2953 = vadd.f32 %v1867, %v2952
        %2954 = vmatprep.mubr.bf16.mxu0 %v1433
        %2955 = vmatmul.mubr.bf16.gmra.mxu0 %v1432
        %v2956 = vpop.f32.mrf.mxu0
        %v2957 = vadd.f32 %v1871, %v2956
        %v2958 = vpop.f32.mrf.mxu0
        %v2959 = vadd.f32 %v1873, %v2958
        %v2960 = vpop.f32.mrf.mxu0
        %v2961 = vadd.f32 %v1875, %v2960
        %v2962 = vpop.f32.mrf.mxu0
        %v2963 = vadd.f32 %v1877, %v2962
        %2964 = vmatprep.mubr.bf16.mxu0 %v1437
        %2965 = vmatmul.mubr.bf16.gmra.mxu0 %v1436
        %v2966 = vpop.f32.mrf.mxu0
        %v2967 = vadd.f32 %v1881, %v2966
        %v2968 = vpop.f32.mrf.mxu0
        %v2969 = vadd.f32 %v1883, %v2968
        %v2970 = vpop.f32.mrf.mxu0
        %v2971 = vadd.f32 %v1885, %v2970
        %v2972 = vpop.f32.mrf.mxu0
        %v2973 = vadd.f32 %v1887, %v2972
        %2974 = vmatprep.mubr.bf16.mxu0 %v1441
        %2975 = vmatmul.mubr.bf16.gmra.mxu0 %v1440
        %v2976 = vpop.f32.mrf.mxu0
        %v2977 = vadd.f32 %v1891, %v2976
        %v2978 = vpop.f32.mrf.mxu0
        %v2979 = vadd.f32 %v1893, %v2978
        %v2980 = vpop.f32.mrf.mxu0
        %v2981 = vadd.f32 %v1895, %v2980
        %v2982 = vpop.f32.mrf.mxu0
        %v2983 = vadd.f32 %v1897, %v2982
        %2984 = vmatprep.mubr.bf16.mxu0 %v1445
        %2985 = vmatmul.mubr.bf16.gmra.mxu0 %v1444
        %v2986 = vpop.f32.mrf.mxu0
        %v2987 = vadd.f32 %v1901, %v2986
        %v2988 = vpop.f32.mrf.mxu0
        %v2989 = vadd.f32 %v1903, %v2988
        %v2990 = vpop.f32.mrf.mxu0
        %v2991 = vadd.f32 %v1905, %v2990
        %v2992 = vpop.f32.mrf.mxu0
        %v2993 = vadd.f32 %v1907, %v2992
        %2994 = vmatprep.mubr.bf16.mxu0 %v1449
        %2995 = vmatmul.mubr.bf16.gmra.mxu0 %v1448
        %v2996 = vpop.f32.mrf.mxu0
        %v2997 = vadd.f32 %v1911, %v2996
        %v2998 = vpop.f32.mrf.mxu0
        %v2999 = vadd.f32 %v1913, %v2998
        %v3000 = vpop.f32.mrf.mxu0
        %v3001 = vadd.f32 %v1915, %v3000
        %v3002 = vpop.f32.mrf.mxu0
        %v3003 = vadd.f32 %v1917, %v3002
        %3004 = vmatprep.mubr.bf16.mxu0 %v1453
        %3005 = vmatmul.mubr.bf16.gmra.mxu0 %v1452
        %v3006 = vpop.f32.mrf.mxu0
        %v3007 = vadd.f32 %v1921, %v3006
        %v3008 = vpop.f32.mrf.mxu0
        %v3009 = vadd.f32 %v1923, %v3008
        %v3010 = vpop.f32.mrf.mxu0
        %v3011 = vadd.f32 %v1925, %v3010
        %v3012 = vpop.f32.mrf.mxu0
        %v3013 = vadd.f32 %v1927, %v3012
        %3014 = vmatprep.mubr.bf16.mxu0 %v1457
        %3015 = vmatmul.mubr.bf16.gmra.mxu0 %v1456
        %v3016 = vpop.f32.mrf.mxu0
        %v3017 = vadd.f32 %v1931, %v3016
        %v3018 = vpop.f32.mrf.mxu0
        %v3019 = vadd.f32 %v1933, %v3018
        %v3020 = vpop.f32.mrf.mxu0
        %v3021 = vadd.f32 %v1935, %v3020
        %v3022 = vpop.f32.mrf.mxu0
        %v3023 = vadd.f32 %v1937, %v3022
        %3024 = vmatprep.mubr.bf16.mxu0 %v1461
        %3025 = vmatmul.mubr.bf16.gmra.mxu0 %v1460
        %v3026 = vpop.f32.mrf.mxu0
        %v3027 = vadd.f32 %v1941, %v3026
        %v3028 = vpop.f32.mrf.mxu0
        %v3029 = vadd.f32 %v1943, %v3028
        %v3030 = vpop.f32.mrf.mxu0
        %v3031 = vadd.f32 %v1945, %v3030
        %v3032 = vpop.f32.mrf.mxu0
        %v3033 = vadd.f32 %v1947, %v3032
        %3034 = vmatprep.mubr.bf16.mxu0 %v1465
        %3035 = vmatmul.mubr.bf16.gmra.mxu0 %v1464
        %v3036 = vpop.f32.mrf.mxu0
        %v3037 = vadd.f32 %v1951, %v3036
        %v3038 = vpop.f32.mrf.mxu0
        %v3039 = vadd.f32 %v1953, %v3038
        %v3040 = vpop.f32.mrf.mxu0
        %v3041 = vadd.f32 %v1955, %v3040
        %v3042 = vpop.f32.mrf.mxu0
        %v3043 = vadd.f32 %v1957, %v3042
        %3044 = vdwg.mxu0
        %3045 = vmatprep.subr.bf16.mxu0 %v2659
        %3046 = vmatpush1.bf16.msra.mxu0 %v2658
        %3047 = vmatprep.subr.bf16.mxu0 %v2655
        %3048 = vmatpush1.bf16.msra.mxu0 %v2654
        %3049 = vmatprep.subr.bf16.mxu0 %v2651
        %3050 = vmatpush1.bf16.msra.mxu0 %v2650
        %3051 = vmatprep.subr.bf16.mxu0 %v2647
        %3052 = vmatpush1.bf16.msra.mxu0 %v2646
        %3053 = vmatprep.subr.bf16.mxu0 %v2643
        %3054 = vmatpush1.bf16.msra.mxu0 %v2642
        %3055 = vmatprep.subr.bf16.mxu0 %v2639
        %3056 = vmatpush1.bf16.msra.mxu0 %v2638
        %3057 = vmatprep.subr.bf16.mxu0 %v2635
        %3058 = vmatpush1.bf16.msra.mxu0 %v2634
        %3059 = vmatprep.subr.bf16.mxu0 %v2631
        %3060 = vmatpush1.bf16.msra.mxu0 %v2630
        %3061 = vmatprep.subr.bf16.mxu0 %v2691
        %3062 = vmatpush2.bf16.msra.mxu0 %v2690
        %3063 = vmatprep.subr.bf16.mxu0 %v2687
        %3064 = vmatpush2.bf16.msra.mxu0 %v2686
        %3065 = vmatprep.subr.bf16.mxu0 %v2683
        %3066 = vmatpush2.bf16.msra.mxu0 %v2682
        %3067 = vmatprep.subr.bf16.mxu0 %v2679
        %3068 = vmatpush2.bf16.msra.mxu0 %v2678
        %3069 = vmatprep.subr.bf16.mxu0 %v2675
        %3070 = vmatpush2.bf16.msra.mxu0 %v2674
        %3071 = vmatprep.subr.bf16.mxu0 %v2671
        %3072 = vmatpush2.bf16.msra.mxu0 %v2670
        %3073 = vmatprep.subr.bf16.mxu0 %v2667
        %3074 = vmatpush2.bf16.msra.mxu0 %v2666
        %3075 = vmatprep.subr.bf16.mxu0 %v2663
        %3076 = vmatpush2.bf16.msra.mxu0 %v2662
        %3077 = vmatprep.mubr.bf16.mxu0 %v1395
        %3078 = vmatmul.mubr.bf16.gmra.mxu0 %v1394
        %v3079 = vpop.f32.mrf.mxu0
        %v3080 = vadd.f32 %v2857, %v3079
        %v3081 = vpop.f32.mrf.mxu0
        %v3082 = vadd.f32 %v2859, %v3081
        %v3083 = vpop.f32.mrf.mxu0
        %v3084 = vadd.f32 %v2861, %v3083
        %v3085 = vpop.f32.mrf.mxu0
        %v3086 = vadd.f32 %v2863, %v3085
        %3087 = vmatprep.mubr.bf16.mxu0 %v1399
        %3088 = vmatmul.mubr.bf16.gmra.mxu0 %v1398
        %v3089 = vpop.f32.mrf.mxu0
        %v3090 = vadd.f32 %v2867, %v3089
        %v3091 = vpop.f32.mrf.mxu0
        %v3092 = vadd.f32 %v2869, %v3091
        %v3093 = vpop.f32.mrf.mxu0
        %v3094 = vadd.f32 %v2871, %v3093
        %v3095 = vpop.f32.mrf.mxu0
        %v3096 = vadd.f32 %v2873, %v3095
        %3097 = vmatprep.mubr.bf16.mxu0 %v1403
        %3098 = vmatmul.mubr.bf16.gmra.mxu0 %v1402
        %v3099 = vpop.f32.mrf.mxu0
        %v3100 = vadd.f32 %v2877, %v3099
        %v3101 = vpop.f32.mrf.mxu0
        %v3102 = vadd.f32 %v2879, %v3101
        %v3103 = vpop.f32.mrf.mxu0
        %v3104 = vadd.f32 %v2881, %v3103
        %v3105 = vpop.f32.mrf.mxu0
        %v3106 = vadd.f32 %v2883, %v3105
        %3107 = vmatprep.mubr.bf16.mxu0 %v1407
        %3108 = vmatmul.mubr.bf16.gmra.mxu0 %v1406
        %v3109 = vpop.f32.mrf.mxu0
        %v3110 = vadd.f32 %v2887, %v3109
        %v3111 = vpop.f32.mrf.mxu0
        %v3112 = vadd.f32 %v2889, %v3111
        %v3113 = vpop.f32.mrf.mxu0
        %v3114 = vadd.f32 %v2891, %v3113
        %v3115 = vpop.f32.mrf.mxu0
        %v3116 = vadd.f32 %v2893, %v3115
        %3117 = vmatprep.mubr.bf16.mxu0 %v1411
        %3118 = vmatmul.mubr.bf16.gmra.mxu0 %v1410
        %v3119 = vpop.f32.mrf.mxu0
        %v3120 = vadd.f32 %v2897, %v3119
        %v3121 = vpop.f32.mrf.mxu0
        %v3122 = vadd.f32 %v2899, %v3121
        %v3123 = vpop.f32.mrf.mxu0
        %v3124 = vadd.f32 %v2901, %v3123
        %v3125 = vpop.f32.mrf.mxu0
        %v3126 = vadd.f32 %v2903, %v3125
        %3127 = vmatprep.mubr.bf16.mxu0 %v1415
        %3128 = vmatmul.mubr.bf16.gmra.mxu0 %v1414
        %v3129 = vpop.f32.mrf.mxu0
        %v3130 = vadd.f32 %v2907, %v3129
        %v3131 = vpop.f32.mrf.mxu0
        %v3132 = vadd.f32 %v2909, %v3131
        %v3133 = vpop.f32.mrf.mxu0
        %v3134 = vadd.f32 %v2911, %v3133
        %v3135 = vpop.f32.mrf.mxu0
        %v3136 = vadd.f32 %v2913, %v3135
        %3137 = vmatprep.mubr.bf16.mxu0 %v1419
        %3138 = vmatmul.mubr.bf16.gmra.mxu0 %v1418
        %v3139 = vpop.f32.mrf.mxu0
        %v3140 = vadd.f32 %v2917, %v3139
        %v3141 = vpop.f32.mrf.mxu0
        %v3142 = vadd.f32 %v2919, %v3141
        %v3143 = vpop.f32.mrf.mxu0
        %v3144 = vadd.f32 %v2921, %v3143
        %v3145 = vpop.f32.mrf.mxu0
        %v3146 = vadd.f32 %v2923, %v3145
        %3147 = vmatprep.mubr.bf16.mxu0 %v1423
        %3148 = vmatmul.mubr.bf16.gmra.mxu0 %v1422
        %v3149 = vpop.f32.mrf.mxu0
        %v3150 = vadd.f32 %v2927, %v3149
        %v3151 = vpop.f32.mrf.mxu0
        %v3152 = vadd.f32 %v2929, %v3151
        %v3153 = vpop.f32.mrf.mxu0
        %v3154 = vadd.f32 %v2931, %v3153
        %v3155 = vpop.f32.mrf.mxu0
        %v3156 = vadd.f32 %v2933, %v3155
        %3157 = vmatprep.mubr.bf16.mxu0 %v1427
        %3158 = vmatmul.mubr.bf16.gmra.mxu0 %v1426
        %v3159 = vpop.f32.mrf.mxu0
        %v3160 = vadd.f32 %v2937, %v3159
        %v3161 = vpop.f32.mrf.mxu0
        %v3162 = vadd.f32 %v2939, %v3161
        %v3163 = vpop.f32.mrf.mxu0
        %v3164 = vadd.f32 %v2941, %v3163
        %v3165 = vpop.f32.mrf.mxu0
        %v3166 = vadd.f32 %v2943, %v3165
        %3167 = vmatprep.mubr.bf16.mxu0 %v1431
        %3168 = vmatmul.mubr.bf16.gmra.mxu0 %v1430
        %v3169 = vpop.f32.mrf.mxu0
        %v3170 = vadd.f32 %v2947, %v3169
        %v3171 = vpop.f32.mrf.mxu0
        %v3172 = vadd.f32 %v2949, %v3171
        %v3173 = vpop.f32.mrf.mxu0
        %v3174 = vadd.f32 %v2951, %v3173
        %v3175 = vpop.f32.mrf.mxu0
        %v3176 = vadd.f32 %v2953, %v3175
        %3177 = vmatprep.mubr.bf16.mxu0 %v1435
        %3178 = vmatmul.mubr.bf16.gmra.mxu0 %v1434
        %v3179 = vpop.f32.mrf.mxu0
        %v3180 = vadd.f32 %v2957, %v3179
        %v3181 = vpop.f32.mrf.mxu0
        %v3182 = vadd.f32 %v2959, %v3181
        %v3183 = vpop.f32.mrf.mxu0
        %v3184 = vadd.f32 %v2961, %v3183
        %v3185 = vpop.f32.mrf.mxu0
        %v3186 = vadd.f32 %v2963, %v3185
        %3187 = vmatprep.mubr.bf16.mxu0 %v1439
        %3188 = vmatmul.mubr.bf16.gmra.mxu0 %v1438
        %v3189 = vpop.f32.mrf.mxu0
        %v3190 = vadd.f32 %v2967, %v3189
        %v3191 = vpop.f32.mrf.mxu0
        %v3192 = vadd.f32 %v2969, %v3191
        %v3193 = vpop.f32.mrf.mxu0
        %v3194 = vadd.f32 %v2971, %v3193
        %v3195 = vpop.f32.mrf.mxu0
        %v3196 = vadd.f32 %v2973, %v3195
        %3197 = vmatprep.mubr.bf16.mxu0 %v1443
        %3198 = vmatmul.mubr.bf16.gmra.mxu0 %v1442
        %v3199 = vpop.f32.mrf.mxu0
        %v3200 = vadd.f32 %v2977, %v3199
        %v3201 = vpop.f32.mrf.mxu0
        %v3202 = vadd.f32 %v2979, %v3201
        %v3203 = vpop.f32.mrf.mxu0
        %v3204 = vadd.f32 %v2981, %v3203
        %v3205 = vpop.f32.mrf.mxu0
        %v3206 = vadd.f32 %v2983, %v3205
        %3207 = vmatprep.mubr.bf16.mxu0 %v1447
        %3208 = vmatmul.mubr.bf16.gmra.mxu0 %v1446
        %v3209 = vpop.f32.mrf.mxu0
        %v3210 = vadd.f32 %v2987, %v3209
        %v3211 = vpop.f32.mrf.mxu0
        %v3212 = vadd.f32 %v2989, %v3211
        %v3213 = vpop.f32.mrf.mxu0
        %v3214 = vadd.f32 %v2991, %v3213
        %v3215 = vpop.f32.mrf.mxu0
        %v3216 = vadd.f32 %v2993, %v3215
        %3217 = vmatprep.mubr.bf16.mxu0 %v1451
        %3218 = vmatmul.mubr.bf16.gmra.mxu0 %v1450
        %v3219 = vpop.f32.mrf.mxu0
        %v3220 = vadd.f32 %v2997, %v3219
        %v3221 = vpop.f32.mrf.mxu0
        %v3222 = vadd.f32 %v2999, %v3221
        %v3223 = vpop.f32.mrf.mxu0
        %v3224 = vadd.f32 %v3001, %v3223
        %v3225 = vpop.f32.mrf.mxu0
        %v3226 = vadd.f32 %v3003, %v3225
        %3227 = vmatprep.mubr.bf16.mxu0 %v1455
        %3228 = vmatmul.mubr.bf16.gmra.mxu0 %v1454
        %v3229 = vpop.f32.mrf.mxu0
        %v3230 = vadd.f32 %v3007, %v3229
        %v3231 = vpop.f32.mrf.mxu0
        %v3232 = vadd.f32 %v3009, %v3231
        %v3233 = vpop.f32.mrf.mxu0
        %v3234 = vadd.f32 %v3011, %v3233
        %v3235 = vpop.f32.mrf.mxu0
        %v3236 = vadd.f32 %v3013, %v3235
        %3237 = vmatprep.mubr.bf16.mxu0 %v1459
        %3238 = vmatmul.mubr.bf16.gmra.mxu0 %v1458
        %v3239 = vpop.f32.mrf.mxu0
        %v3240 = vadd.f32 %v3017, %v3239
        %v3241 = vpop.f32.mrf.mxu0
        %v3242 = vadd.f32 %v3019, %v3241
        %v3243 = vpop.f32.mrf.mxu0
        %v3244 = vadd.f32 %v3021, %v3243
        %v3245 = vpop.f32.mrf.mxu0
        %v3246 = vadd.f32 %v3023, %v3245
        %3247 = vmatprep.mubr.bf16.mxu0 %v1463
        %3248 = vmatmul.mubr.bf16.gmra.mxu0 %v1462
        %v3249 = vpop.f32.mrf.mxu0
        %v3250 = vadd.f32 %v3027, %v3249
        %v3251 = vpop.f32.mrf.mxu0
        %v3252 = vadd.f32 %v3029, %v3251
        %v3253 = vpop.f32.mrf.mxu0
        %v3254 = vadd.f32 %v3031, %v3253
        %v3255 = vpop.f32.mrf.mxu0
        %v3256 = vadd.f32 %v3033, %v3255
        %3257 = vmatprep.mubr.bf16.mxu0 %v1467
        %3258 = vmatmul.mubr.bf16.gmra.mxu0 %v1466
        %v3259 = vpop.f32.mrf.mxu0
        %v3260 = vadd.f32 %v3037, %v3259
        %v3261 = vpop.f32.mrf.mxu0
        %v3262 = vadd.f32 %v3039, %v3261
        %v3263 = vpop.f32.mrf.mxu0
        %v3264 = vadd.f32 %v3041, %v3263
        %v3265 = vpop.f32.mrf.mxu0
        %v3266 = vadd.f32 %v3043, %v3265
        %3267 = vdwg.mxu0
        %3268 = vmatprep.subr.bf16.mxu0 %v2597
        %3269 = vmatpush1.bf16.msra.mxu0 %v2596
        %3270 = vmatprep.subr.bf16.mxu0 %v2593
        %3271 = vmatpush1.bf16.msra.mxu0 %v2592
        %3272 = vmatprep.subr.bf16.mxu0 %v2589
        %3273 = vmatpush1.bf16.msra.mxu0 %v2588
        %3274 = vmatprep.subr.bf16.mxu0 %v2585
        %3275 = vmatpush1.bf16.msra.mxu0 %v2584
        %3276 = vmatprep.subr.bf16.mxu0 %v2581
        %3277 = vmatpush1.bf16.msra.mxu0 %v2580
        %3278 = vmatprep.subr.bf16.mxu0 %v2577
        %3279 = vmatpush1.bf16.msra.mxu0 %v2576
        %3280 = vmatprep.subr.bf16.mxu0 %v2573
        %3281 = vmatpush1.bf16.msra.mxu0 %v2572
        %3282 = vmatprep.subr.bf16.mxu0 %v2569
        %3283 = vmatpush1.bf16.msra.mxu0 %v2568
        %3284 = vmatprep.subr.bf16.mxu0 %v2629
        %3285 = vmatpush2.bf16.msra.mxu0 %v2628
        %3286 = vmatprep.subr.bf16.mxu0 %v2625
        %3287 = vmatpush2.bf16.msra.mxu0 %v2624
        %3288 = vmatprep.subr.bf16.mxu0 %v2621
        %3289 = vmatpush2.bf16.msra.mxu0 %v2620
        %3290 = vmatprep.subr.bf16.mxu0 %v2617
        %3291 = vmatpush2.bf16.msra.mxu0 %v2616
        %3292 = vmatprep.subr.bf16.mxu0 %v2613
        %3293 = vmatpush2.bf16.msra.mxu0 %v2612
        %3294 = vmatprep.subr.bf16.mxu0 %v2609
        %3295 = vmatpush2.bf16.msra.mxu0 %v2608
        %3296 = vmatprep.subr.bf16.mxu0 %v2605
        %3297 = vmatpush2.bf16.msra.mxu0 %v2604
        %3298 = vmatprep.subr.bf16.mxu0 %v2601
        %3299 = vmatpush2.bf16.msra.mxu0 %v2600
        %3300 = vmatprep.mubr.bf16.mxu0 %v1393
        %3301 = vmatmul.mubr.bf16.gmra.mxu0 %v1392
        %v3302 = vpop.f32.mrf.mxu0
        %v3303 = vadd.f32 %v1994, %v3302
        %v3304 = vpop.f32.mrf.mxu0
        %v3305 = vadd.f32 %v1996, %v3304
        %v3306 = vpop.f32.mrf.mxu0
        %v3307 = vadd.f32 %v1998, %v3306
        %v3308 = vpop.f32.mrf.mxu0
        %v3309 = vadd.f32 %v2000, %v3308
        %3310 = vmatprep.mubr.bf16.mxu0 %v1397
        %3311 = vmatmul.mubr.bf16.gmra.mxu0 %v1396
        %v3312 = vpop.f32.mrf.mxu0
        %v3313 = vadd.f32 %v2004, %v3312
        %v3314 = vpop.f32.mrf.mxu0
        %v3315 = vadd.f32 %v2006, %v3314
        %v3316 = vpop.f32.mrf.mxu0
        %v3317 = vadd.f32 %v2008, %v3316
        %v3318 = vpop.f32.mrf.mxu0
        %v3319 = vadd.f32 %v2010, %v3318
        %3320 = vmatprep.mubr.bf16.mxu0 %v1401
        %3321 = vmatmul.mubr.bf16.gmra.mxu0 %v1400
        %v3322 = vpop.f32.mrf.mxu0
        %v3323 = vadd.f32 %v2014, %v3322
        %v3324 = vpop.f32.mrf.mxu0
        %v3325 = vadd.f32 %v2016, %v3324
        %v3326 = vpop.f32.mrf.mxu0
        %v3327 = vadd.f32 %v2018, %v3326
        %v3328 = vpop.f32.mrf.mxu0
        %v3329 = vadd.f32 %v2020, %v3328
        %3330 = vmatprep.mubr.bf16.mxu0 %v1405
        %3331 = vmatmul.mubr.bf16.gmra.mxu0 %v1404
        %v3332 = vpop.f32.mrf.mxu0
        %v3333 = vadd.f32 %v2024, %v3332
        %v3334 = vpop.f32.mrf.mxu0
        %v3335 = vadd.f32 %v2026, %v3334
        %v3336 = vpop.f32.mrf.mxu0
        %v3337 = vadd.f32 %v2028, %v3336
        %v3338 = vpop.f32.mrf.mxu0
        %v3339 = vadd.f32 %v2030, %v3338
        %3340 = vmatprep.mubr.bf16.mxu0 %v1409
        %3341 = vmatmul.mubr.bf16.gmra.mxu0 %v1408
        %v3342 = vpop.f32.mrf.mxu0
        %v3343 = vadd.f32 %v2034, %v3342
        %v3344 = vpop.f32.mrf.mxu0
        %v3345 = vadd.f32 %v2036, %v3344
        %v3346 = vpop.f32.mrf.mxu0
        %v3347 = vadd.f32 %v2038, %v3346
        %v3348 = vpop.f32.mrf.mxu0
        %v3349 = vadd.f32 %v2040, %v3348
        %3350 = vmatprep.mubr.bf16.mxu0 %v1413
        %3351 = vmatmul.mubr.bf16.gmra.mxu0 %v1412
        %v3352 = vpop.f32.mrf.mxu0
        %v3353 = vadd.f32 %v2044, %v3352
        %v3354 = vpop.f32.mrf.mxu0
        %v3355 = vadd.f32 %v2046, %v3354
        %v3356 = vpop.f32.mrf.mxu0
        %v3357 = vadd.f32 %v2048, %v3356
        %v3358 = vpop.f32.mrf.mxu0
        %v3359 = vadd.f32 %v2050, %v3358
        %3360 = vmatprep.mubr.bf16.mxu0 %v1417
        %3361 = vmatmul.mubr.bf16.gmra.mxu0 %v1416
        %v3362 = vpop.f32.mrf.mxu0
        %v3363 = vadd.f32 %v2054, %v3362
        %v3364 = vpop.f32.mrf.mxu0
        %v3365 = vadd.f32 %v2056, %v3364
        %v3366 = vpop.f32.mrf.mxu0
        %v3367 = vadd.f32 %v2058, %v3366
        %v3368 = vpop.f32.mrf.mxu0
        %v3369 = vadd.f32 %v2060, %v3368
        %3370 = vmatprep.mubr.bf16.mxu0 %v1421
        %3371 = vmatmul.mubr.bf16.gmra.mxu0 %v1420
        %v3372 = vpop.f32.mrf.mxu0
        %v3373 = vadd.f32 %v2064, %v3372
        %v3374 = vpop.f32.mrf.mxu0
        %v3375 = vadd.f32 %v2066, %v3374
        %v3376 = vpop.f32.mrf.mxu0
        %v3377 = vadd.f32 %v2068, %v3376
        %v3378 = vpop.f32.mrf.mxu0
        %v3379 = vadd.f32 %v2070, %v3378
        %3380 = vmatprep.mubr.bf16.mxu0 %v1425
        %3381 = vmatmul.mubr.bf16.gmra.mxu0 %v1424
        %v3382 = vpop.f32.mrf.mxu0
        %v3383 = vadd.f32 %v2074, %v3382
        %v3384 = vpop.f32.mrf.mxu0
        %v3385 = vadd.f32 %v2076, %v3384
        %v3386 = vpop.f32.mrf.mxu0
        %v3387 = vadd.f32 %v2078, %v3386
        %v3388 = vpop.f32.mrf.mxu0
        %v3389 = vadd.f32 %v2080, %v3388
        %3390 = vmatprep.mubr.bf16.mxu0 %v1429
        %3391 = vmatmul.mubr.bf16.gmra.mxu0 %v1428
        %v3392 = vpop.f32.mrf.mxu0
        %v3393 = vadd.f32 %v2084, %v3392
        %v3394 = vpop.f32.mrf.mxu0
        %v3395 = vadd.f32 %v2086, %v3394
        %v3396 = vpop.f32.mrf.mxu0
        %v3397 = vadd.f32 %v2088, %v3396
        %v3398 = vpop.f32.mrf.mxu0
        %v3399 = vadd.f32 %v2090, %v3398
        %3400 = vmatprep.mubr.bf16.mxu0 %v1433
        %3401 = vmatmul.mubr.bf16.gmra.mxu0 %v1432
        %v3402 = vpop.f32.mrf.mxu0
        %v3403 = vadd.f32 %v2094, %v3402
        %v3404 = vpop.f32.mrf.mxu0
        %v3405 = vadd.f32 %v2096, %v3404
        %v3406 = vpop.f32.mrf.mxu0
        %v3407 = vadd.f32 %v2098, %v3406
        %v3408 = vpop.f32.mrf.mxu0
        %v3409 = vadd.f32 %v2100, %v3408
        %3410 = vmatprep.mubr.bf16.mxu0 %v1437
        %3411 = vmatmul.mubr.bf16.gmra.mxu0 %v1436
        %v3412 = vpop.f32.mrf.mxu0
        %v3413 = vadd.f32 %v2104, %v3412
        %v3414 = vpop.f32.mrf.mxu0
        %v3415 = vadd.f32 %v2106, %v3414
        %v3416 = vpop.f32.mrf.mxu0
        %v3417 = vadd.f32 %v2108, %v3416
        %v3418 = vpop.f32.mrf.mxu0
        %v3419 = vadd.f32 %v2110, %v3418
        %3420 = vmatprep.mubr.bf16.mxu0 %v1441
        %3421 = vmatmul.mubr.bf16.gmra.mxu0 %v1440
        %v3422 = vpop.f32.mrf.mxu0
        %v3423 = vadd.f32 %v2114, %v3422
        %v3424 = vpop.f32.mrf.mxu0
        %v3425 = vadd.f32 %v2116, %v3424
        %v3426 = vpop.f32.mrf.mxu0
        %v3427 = vadd.f32 %v2118, %v3426
        %v3428 = vpop.f32.mrf.mxu0
        %v3429 = vadd.f32 %v2120, %v3428
        %3430 = vmatprep.mubr.bf16.mxu0 %v1445
        %3431 = vmatmul.mubr.bf16.gmra.mxu0 %v1444
        %v3432 = vpop.f32.mrf.mxu0
        %v3433 = vadd.f32 %v2124, %v3432
        %v3434 = vpop.f32.mrf.mxu0
        %v3435 = vadd.f32 %v2126, %v3434
        %v3436 = vpop.f32.mrf.mxu0
        %v3437 = vadd.f32 %v2128, %v3436
        %v3438 = vpop.f32.mrf.mxu0
        %v3439 = vadd.f32 %v2130, %v3438
        %3440 = vmatprep.mubr.bf16.mxu0 %v1449
        %3441 = vmatmul.mubr.bf16.gmra.mxu0 %v1448
        %v3442 = vpop.f32.mrf.mxu0
        %v3443 = vadd.f32 %v2134, %v3442
        %v3444 = vpop.f32.mrf.mxu0
        %v3445 = vadd.f32 %v2136, %v3444
        %v3446 = vpop.f32.mrf.mxu0
        %v3447 = vadd.f32 %v2138, %v3446
        %v3448 = vpop.f32.mrf.mxu0
        %v3449 = vadd.f32 %v2140, %v3448
        %3450 = vmatprep.mubr.bf16.mxu0 %v1453
        %3451 = vmatmul.mubr.bf16.gmra.mxu0 %v1452
        %v3452 = vpop.f32.mrf.mxu0
        %v3453 = vadd.f32 %v2144, %v3452
        %v3454 = vpop.f32.mrf.mxu0
        %v3455 = vadd.f32 %v2146, %v3454
        %v3456 = vpop.f32.mrf.mxu0
        %v3457 = vadd.f32 %v2148, %v3456
        %v3458 = vpop.f32.mrf.mxu0
        %v3459 = vadd.f32 %v2150, %v3458
        %3460 = vmatprep.mubr.bf16.mxu0 %v1457
        %3461 = vmatmul.mubr.bf16.gmra.mxu0 %v1456
        %v3462 = vpop.f32.mrf.mxu0
        %v3463 = vadd.f32 %v2154, %v3462
        %v3464 = vpop.f32.mrf.mxu0
        %v3465 = vadd.f32 %v2156, %v3464
        %v3466 = vpop.f32.mrf.mxu0
        %v3467 = vadd.f32 %v2158, %v3466
        %v3468 = vpop.f32.mrf.mxu0
        %v3469 = vadd.f32 %v2160, %v3468
        %3470 = vmatprep.mubr.bf16.mxu0 %v1461
        %3471 = vmatmul.mubr.bf16.gmra.mxu0 %v1460
        %v3472 = vpop.f32.mrf.mxu0
        %v3473 = vadd.f32 %v2164, %v3472
        %v3474 = vpop.f32.mrf.mxu0
        %v3475 = vadd.f32 %v2166, %v3474
        %v3476 = vpop.f32.mrf.mxu0
        %v3477 = vadd.f32 %v2168, %v3476
        %v3478 = vpop.f32.mrf.mxu0
        %v3479 = vadd.f32 %v2170, %v3478
        %3480 = vmatprep.mubr.bf16.mxu0 %v1465
        %3481 = vmatmul.mubr.bf16.gmra.mxu0 %v1464
        %v3482 = vpop.f32.mrf.mxu0
        %v3483 = vadd.f32 %v2174, %v3482
        %v3484 = vpop.f32.mrf.mxu0
        %v3485 = vadd.f32 %v2176, %v3484
        %v3486 = vpop.f32.mrf.mxu0
        %v3487 = vadd.f32 %v2178, %v3486
        %v3488 = vpop.f32.mrf.mxu0
        %v3489 = vadd.f32 %v2180, %v3488
        %3490 = vdwg.mxu0
        %3491 = vmatprep.subr.bf16.mxu0 %v2661
        %3492 = vmatpush1.bf16.msra.mxu0 %v2660
        %3493 = vmatprep.subr.bf16.mxu0 %v2657
        %3494 = vmatpush1.bf16.msra.mxu0 %v2656
        %3495 = vmatprep.subr.bf16.mxu0 %v2653
        %3496 = vmatpush1.bf16.msra.mxu0 %v2652
        %3497 = vmatprep.subr.bf16.mxu0 %v2649
        %3498 = vmatpush1.bf16.msra.mxu0 %v2648
        %3499 = vmatprep.subr.bf16.mxu0 %v2645
        %3500 = vmatpush1.bf16.msra.mxu0 %v2644
        %3501 = vmatprep.subr.bf16.mxu0 %v2641
        %3502 = vmatpush1.bf16.msra.mxu0 %v2640
        %3503 = vmatprep.subr.bf16.mxu0 %v2637
        %3504 = vmatpush1.bf16.msra.mxu0 %v2636
        %3505 = vmatprep.subr.bf16.mxu0 %v2633
        %3506 = vmatpush1.bf16.msra.mxu0 %v2632
        %3507 = vmatprep.subr.bf16.mxu0 %v2693
        %3508 = vmatpush2.bf16.msra.mxu0 %v2692
        %3509 = vmatprep.subr.bf16.mxu0 %v2689
        %3510 = vmatpush2.bf16.msra.mxu0 %v2688
        %3511 = vmatprep.subr.bf16.mxu0 %v2685
        %3512 = vmatpush2.bf16.msra.mxu0 %v2684
        %3513 = vmatprep.subr.bf16.mxu0 %v2681
        %3514 = vmatpush2.bf16.msra.mxu0 %v2680
        %3515 = vmatprep.subr.bf16.mxu0 %v2677
        %3516 = vmatpush2.bf16.msra.mxu0 %v2676
        %3517 = vmatprep.subr.bf16.mxu0 %v2673
        %3518 = vmatpush2.bf16.msra.mxu0 %v2672
        %3519 = vmatprep.subr.bf16.mxu0 %v2669
        %3520 = vmatpush2.bf16.msra.mxu0 %v2668
        %3521 = vmatprep.subr.bf16.mxu0 %v2665
        %3522 = vmatpush2.bf16.msra.mxu0 %v2664
        %3523 = vmatprep.mubr.bf16.mxu0 %v1395
        %3524 = vmatmul.mubr.bf16.gmra.mxu0 %v1394
        %v3525 = vpop.f32.mrf.mxu0
        %v3526 = vadd.f32 %v3303, %v3525
        %v3527 = vpop.f32.mrf.mxu0
        %v3528 = vadd.f32 %v3305, %v3527
        %v3529 = vpop.f32.mrf.mxu0
        %v3530 = vadd.f32 %v3307, %v3529
        %v3531 = vpop.f32.mrf.mxu0
        %v3532 = vadd.f32 %v3309, %v3531
        %3533 = vmatprep.mubr.bf16.mxu0 %v1399
        %3534 = vmatmul.mubr.bf16.gmra.mxu0 %v1398
        %v3535 = vpop.f32.mrf.mxu0
        %v3536 = vadd.f32 %v3313, %v3535
        %v3537 = vpop.f32.mrf.mxu0
        %v3538 = vadd.f32 %v3315, %v3537
        %v3539 = vpop.f32.mrf.mxu0
        %v3540 = vadd.f32 %v3317, %v3539
        %v3541 = vpop.f32.mrf.mxu0
        %v3542 = vadd.f32 %v3319, %v3541
        %3543 = vmatprep.mubr.bf16.mxu0 %v1403
        %3544 = vmatmul.mubr.bf16.gmra.mxu0 %v1402
        %v3545 = vpop.f32.mrf.mxu0
        %v3546 = vadd.f32 %v3323, %v3545
        %v3547 = vpop.f32.mrf.mxu0
        %v3548 = vadd.f32 %v3325, %v3547
        %v3549 = vpop.f32.mrf.mxu0
        %v3550 = vadd.f32 %v3327, %v3549
        %v3551 = vpop.f32.mrf.mxu0
        %v3552 = vadd.f32 %v3329, %v3551
        %3553 = vmatprep.mubr.bf16.mxu0 %v1407
        %3554 = vmatmul.mubr.bf16.gmra.mxu0 %v1406
        %v3555 = vpop.f32.mrf.mxu0
        %v3556 = vadd.f32 %v3333, %v3555
        %v3557 = vpop.f32.mrf.mxu0
        %v3558 = vadd.f32 %v3335, %v3557
        %v3559 = vpop.f32.mrf.mxu0
        %v3560 = vadd.f32 %v3337, %v3559
        %v3561 = vpop.f32.mrf.mxu0
        %v3562 = vadd.f32 %v3339, %v3561
        %3563 = vmatprep.mubr.bf16.mxu0 %v1411
        %3564 = vmatmul.mubr.bf16.gmra.mxu0 %v1410
        %v3565 = vpop.f32.mrf.mxu0
        %v3566 = vadd.f32 %v3343, %v3565
        %v3567 = vpop.f32.mrf.mxu0
        %v3568 = vadd.f32 %v3345, %v3567
        %v3569 = vpop.f32.mrf.mxu0
        %v3570 = vadd.f32 %v3347, %v3569
        %v3571 = vpop.f32.mrf.mxu0
        %v3572 = vadd.f32 %v3349, %v3571
        %3573 = vmatprep.mubr.bf16.mxu0 %v1415
        %3574 = vmatmul.mubr.bf16.gmra.mxu0 %v1414
        %v3575 = vpop.f32.mrf.mxu0
        %v3576 = vadd.f32 %v3353, %v3575
        %v3577 = vpop.f32.mrf.mxu0
        %v3578 = vadd.f32 %v3355, %v3577
        %v3579 = vpop.f32.mrf.mxu0
        %v3580 = vadd.f32 %v3357, %v3579
        %v3581 = vpop.f32.mrf.mxu0
        %v3582 = vadd.f32 %v3359, %v3581
        %3583 = vmatprep.mubr.bf16.mxu0 %v1419
        %3584 = vmatmul.mubr.bf16.gmra.mxu0 %v1418
        %v3585 = vpop.f32.mrf.mxu0
        %v3586 = vadd.f32 %v3363, %v3585
        %v3587 = vpop.f32.mrf.mxu0
        %v3588 = vadd.f32 %v3365, %v3587
        %v3589 = vpop.f32.mrf.mxu0
        %v3590 = vadd.f32 %v3367, %v3589
        %v3591 = vpop.f32.mrf.mxu0
        %v3592 = vadd.f32 %v3369, %v3591
        %3593 = vmatprep.mubr.bf16.mxu0 %v1423
        %3594 = vmatmul.mubr.bf16.gmra.mxu0 %v1422
        %v3595 = vpop.f32.mrf.mxu0
        %v3596 = vadd.f32 %v3373, %v3595
        %v3597 = vpop.f32.mrf.mxu0
        %v3598 = vadd.f32 %v3375, %v3597
        %v3599 = vpop.f32.mrf.mxu0
        %v3600 = vadd.f32 %v3377, %v3599
        %v3601 = vpop.f32.mrf.mxu0
        %v3602 = vadd.f32 %v3379, %v3601
        %3603 = vmatprep.mubr.bf16.mxu0 %v1427
        %3604 = vmatmul.mubr.bf16.gmra.mxu0 %v1426
        %v3605 = vpop.f32.mrf.mxu0
        %v3606 = vadd.f32 %v3383, %v3605
        %v3607 = vpop.f32.mrf.mxu0
        %v3608 = vadd.f32 %v3385, %v3607
        %v3609 = vpop.f32.mrf.mxu0
        %v3610 = vadd.f32 %v3387, %v3609
        %v3611 = vpop.f32.mrf.mxu0
        %v3612 = vadd.f32 %v3389, %v3611
        %3613 = vmatprep.mubr.bf16.mxu0 %v1431
        %3614 = vmatmul.mubr.bf16.gmra.mxu0 %v1430
        %v3615 = vpop.f32.mrf.mxu0
        %v3616 = vadd.f32 %v3393, %v3615
        %v3617 = vpop.f32.mrf.mxu0
        %v3618 = vadd.f32 %v3395, %v3617
        %v3619 = vpop.f32.mrf.mxu0
        %v3620 = vadd.f32 %v3397, %v3619
        %v3621 = vpop.f32.mrf.mxu0
        %v3622 = vadd.f32 %v3399, %v3621
        %3623 = vmatprep.mubr.bf16.mxu0 %v1435
        %3624 = vmatmul.mubr.bf16.gmra.mxu0 %v1434
        %v3625 = vpop.f32.mrf.mxu0
        %v3626 = vadd.f32 %v3403, %v3625
        %v3627 = vpop.f32.mrf.mxu0
        %v3628 = vadd.f32 %v3405, %v3627
        %v3629 = vpop.f32.mrf.mxu0
        %v3630 = vadd.f32 %v3407, %v3629
        %v3631 = vpop.f32.mrf.mxu0
        %v3632 = vadd.f32 %v3409, %v3631
        %3633 = vmatprep.mubr.bf16.mxu0 %v1439
        %3634 = vmatmul.mubr.bf16.gmra.mxu0 %v1438
        %v3635 = vpop.f32.mrf.mxu0
        %v3636 = vadd.f32 %v3413, %v3635
        %v3637 = vpop.f32.mrf.mxu0
        %v3638 = vadd.f32 %v3415, %v3637
        %v3639 = vpop.f32.mrf.mxu0
        %v3640 = vadd.f32 %v3417, %v3639
        %v3641 = vpop.f32.mrf.mxu0
        %v3642 = vadd.f32 %v3419, %v3641
        %3643 = vmatprep.mubr.bf16.mxu0 %v1443
        %3644 = vmatmul.mubr.bf16.gmra.mxu0 %v1442
        %v3645 = vpop.f32.mrf.mxu0
        %v3646 = vadd.f32 %v3423, %v3645
        %v3647 = vpop.f32.mrf.mxu0
        %v3648 = vadd.f32 %v3425, %v3647
        %v3649 = vpop.f32.mrf.mxu0
        %v3650 = vadd.f32 %v3427, %v3649
        %v3651 = vpop.f32.mrf.mxu0
        %v3652 = vadd.f32 %v3429, %v3651
        %3653 = vmatprep.mubr.bf16.mxu0 %v1447
        %3654 = vmatmul.mubr.bf16.gmra.mxu0 %v1446
        %v3655 = vpop.f32.mrf.mxu0
        %v3656 = vadd.f32 %v3433, %v3655
        %v3657 = vpop.f32.mrf.mxu0
        %v3658 = vadd.f32 %v3435, %v3657
        %v3659 = vpop.f32.mrf.mxu0
        %v3660 = vadd.f32 %v3437, %v3659
        %v3661 = vpop.f32.mrf.mxu0
        %v3662 = vadd.f32 %v3439, %v3661
        %3663 = vmatprep.mubr.bf16.mxu0 %v1451
        %3664 = vmatmul.mubr.bf16.gmra.mxu0 %v1450
        %v3665 = vpop.f32.mrf.mxu0
        %v3666 = vadd.f32 %v3443, %v3665
        %v3667 = vpop.f32.mrf.mxu0
        %v3668 = vadd.f32 %v3445, %v3667
        %v3669 = vpop.f32.mrf.mxu0
        %v3670 = vadd.f32 %v3447, %v3669
        %v3671 = vpop.f32.mrf.mxu0
        %v3672 = vadd.f32 %v3449, %v3671
        %3673 = vmatprep.mubr.bf16.mxu0 %v1455
        %3674 = vmatmul.mubr.bf16.gmra.mxu0 %v1454
        %v3675 = vpop.f32.mrf.mxu0
        %v3676 = vadd.f32 %v3453, %v3675
        %v3677 = vpop.f32.mrf.mxu0
        %v3678 = vadd.f32 %v3455, %v3677
        %v3679 = vpop.f32.mrf.mxu0
        %v3680 = vadd.f32 %v3457, %v3679
        %v3681 = vpop.f32.mrf.mxu0
        %v3682 = vadd.f32 %v3459, %v3681
        %3683 = vmatprep.mubr.bf16.mxu0 %v1459
        %3684 = vmatmul.mubr.bf16.gmra.mxu0 %v1458
        %v3685 = vpop.f32.mrf.mxu0
        %v3686 = vadd.f32 %v3463, %v3685
        %v3687 = vpop.f32.mrf.mxu0
        %v3688 = vadd.f32 %v3465, %v3687
        %v3689 = vpop.f32.mrf.mxu0
        %v3690 = vadd.f32 %v3467, %v3689
        %v3691 = vpop.f32.mrf.mxu0
        %v3692 = vadd.f32 %v3469, %v3691
        %3693 = vmatprep.mubr.bf16.mxu0 %v1463
        %3694 = vmatmul.mubr.bf16.gmra.mxu0 %v1462
        %v3695 = vpop.f32.mrf.mxu0
        %v3696 = vadd.f32 %v3473, %v3695
        %v3697 = vpop.f32.mrf.mxu0
        %v3698 = vadd.f32 %v3475, %v3697
        %v3699 = vpop.f32.mrf.mxu0
        %v3700 = vadd.f32 %v3477, %v3699
        %v3701 = vpop.f32.mrf.mxu0
        %v3702 = vadd.f32 %v3479, %v3701
        %3703 = vmatprep.mubr.bf16.mxu0 %v1467
        %3704 = vmatmul.mubr.bf16.gmra.mxu0 %v1466
        %v3705 = vpop.f32.mrf.mxu0
        %v3706 = vadd.f32 %v3483, %v3705
        %v3707 = vpop.f32.mrf.mxu0
        %v3708 = vadd.f32 %v3485, %v3707
        %v3709 = vpop.f32.mrf.mxu0
        %v3710 = vadd.f32 %v3487, %v3709
        %v3711 = vpop.f32.mrf.mxu0
        %v3712 = vadd.f32 %v3489, %v3711
        %3713 = vdwg.mxu0
        %v3714 = vld [vmem:[%s6] sm:$0xf]
        %v3716 = vlaneseq
        %v3717 = vshrl.u32 %v3716, 7
        %v3718 = vsub.s32 0, %v3717
        %v3719 = vrot.slane %v3714, %v3718
        %v3720 = vlaneseq
        %v3721 = vshrl.u32 %v3720, 7
        %v3722 = vsub.s32 1, %v3721
        %v3723 = vrot.slane %v3714, %v3722
        %v3724 = vlaneseq
        %v3725 = vshrl.u32 %v3724, 7
        %v3726 = vsub.s32 2, %v3725
        %v3727 = vrot.slane %v3714, %v3726
        %v3728 = vlaneseq
        %v3729 = vshrl.u32 %v3728, 7
        %v3730 = vsub.s32 3, %v3729
        %v3731 = vrot.slane %v3714, %v3730
        %v3736 = vadd.f32 %v3080, %v3719
        %v3737 = vadd.f32 %v3082, %v3723
        %v3738 = vadd.f32 %v3526, %v3727
        %v3739 = vadd.f32 %v3528, %v3731
        %v3740 = vadd.f32 %v3084, %v3719
        %v3741 = vadd.f32 %v3086, %v3723
        %v3742 = vadd.f32 %v3530, %v3727
        %v3743 = vadd.f32 %v3532, %v3731
        %v3744 = vadd.f32 %v3090, %v3719
        %v3745 = vadd.f32 %v3092, %v3723
        %v3746 = vadd.f32 %v3536, %v3727
        %v3747 = vadd.f32 %v3538, %v3731
        %v3748 = vadd.f32 %v3094, %v3719
        %v3749 = vadd.f32 %v3096, %v3723
        %v3750 = vadd.f32 %v3540, %v3727
        %v3751 = vadd.f32 %v3542, %v3731
        %v3752 = vadd.f32 %v3100, %v3719
        %v3753 = vadd.f32 %v3102, %v3723
        %v3754 = vadd.f32 %v3546, %v3727
        %v3755 = vadd.f32 %v3548, %v3731
        %v3756 = vadd.f32 %v3104, %v3719
        %v3757 = vadd.f32 %v3106, %v3723
        %v3758 = vadd.f32 %v3550, %v3727
        %v3759 = vadd.f32 %v3552, %v3731
        %v3760 = vadd.f32 %v3110, %v3719
        %v3761 = vadd.f32 %v3112, %v3723
        %v3762 = vadd.f32 %v3556, %v3727
        %v3763 = vadd.f32 %v3558, %v3731
        %v3764 = vadd.f32 %v3114, %v3719
        %v3765 = vadd.f32 %v3116, %v3723
        %v3766 = vadd.f32 %v3560, %v3727
        %v3767 = vadd.f32 %v3562, %v3731
        %v3768 = vadd.f32 %v3120, %v3719
        %v3769 = vadd.f32 %v3122, %v3723
        %v3770 = vadd.f32 %v3566, %v3727
        %v3771 = vadd.f32 %v3568, %v3731
        %v3772 = vadd.f32 %v3124, %v3719
        %v3773 = vadd.f32 %v3126, %v3723
        %v3774 = vadd.f32 %v3570, %v3727
        %v3775 = vadd.f32 %v3572, %v3731
        %v3776 = vadd.f32 %v3130, %v3719
        %v3777 = vadd.f32 %v3132, %v3723
        %v3778 = vadd.f32 %v3576, %v3727
        %v3779 = vadd.f32 %v3578, %v3731
        %v3780 = vadd.f32 %v3134, %v3719
        %v3781 = vadd.f32 %v3136, %v3723
        %v3782 = vadd.f32 %v3580, %v3727
        %v3783 = vadd.f32 %v3582, %v3731
        %v3784 = vadd.f32 %v3140, %v3719
        %v3785 = vadd.f32 %v3142, %v3723
        %v3786 = vadd.f32 %v3586, %v3727
        %v3787 = vadd.f32 %v3588, %v3731
        %v3788 = vadd.f32 %v3144, %v3719
        %v3789 = vadd.f32 %v3146, %v3723
        %v3790 = vadd.f32 %v3590, %v3727
        %v3791 = vadd.f32 %v3592, %v3731
        %v3792 = vadd.f32 %v3150, %v3719
        %v3793 = vadd.f32 %v3152, %v3723
        %v3794 = vadd.f32 %v3596, %v3727
        %v3795 = vadd.f32 %v3598, %v3731
        %v3796 = vadd.f32 %v3154, %v3719
        %v3797 = vadd.f32 %v3156, %v3723
        %v3798 = vadd.f32 %v3600, %v3727
        %v3799 = vadd.f32 %v3602, %v3731
        %v3800 = vadd.f32 %v3160, %v3719
        %v3801 = vadd.f32 %v3162, %v3723
        %v3802 = vadd.f32 %v3606, %v3727
        %v3803 = vadd.f32 %v3608, %v3731
        %v3804 = vadd.f32 %v3164, %v3719
        %v3805 = vadd.f32 %v3166, %v3723
        %v3806 = vadd.f32 %v3610, %v3727
        %v3807 = vadd.f32 %v3612, %v3731
        %v3808 = vadd.f32 %v3170, %v3719
        %v3809 = vadd.f32 %v3172, %v3723
        %v3810 = vadd.f32 %v3616, %v3727
        %v3811 = vadd.f32 %v3618, %v3731
        %v3812 = vadd.f32 %v3174, %v3719
        %v3813 = vadd.f32 %v3176, %v3723
        %v3814 = vadd.f32 %v3620, %v3727
        %v3815 = vadd.f32 %v3622, %v3731
        %v3816 = vadd.f32 %v3180, %v3719
        %v3817 = vadd.f32 %v3182, %v3723
        %v3818 = vadd.f32 %v3626, %v3727
        %v3819 = vadd.f32 %v3628, %v3731
        %v3820 = vadd.f32 %v3184, %v3719
        %v3821 = vadd.f32 %v3186, %v3723
        %v3822 = vadd.f32 %v3630, %v3727
        %v3823 = vadd.f32 %v3632, %v3731
        %v3824 = vadd.f32 %v3190, %v3719
        %v3825 = vadd.f32 %v3192, %v3723
        %v3826 = vadd.f32 %v3636, %v3727
        %v3827 = vadd.f32 %v3638, %v3731
        %v3828 = vadd.f32 %v3194, %v3719
        %v3829 = vadd.f32 %v3196, %v3723
        %v3830 = vadd.f32 %v3640, %v3727
        %v3831 = vadd.f32 %v3642, %v3731
        %v3832 = vadd.f32 %v3200, %v3719
        %v3833 = vadd.f32 %v3202, %v3723
        %v3834 = vadd.f32 %v3646, %v3727
        %v3835 = vadd.f32 %v3648, %v3731
        %v3836 = vadd.f32 %v3204, %v3719
        %v3837 = vadd.f32 %v3206, %v3723
        %v3838 = vadd.f32 %v3650, %v3727
        %v3839 = vadd.f32 %v3652, %v3731
        %v3840 = vadd.f32 %v3210, %v3719
        %v3841 = vadd.f32 %v3212, %v3723
        %v3842 = vadd.f32 %v3656, %v3727
        %v3843 = vadd.f32 %v3658, %v3731
        %v3844 = vadd.f32 %v3214, %v3719
        %v3845 = vadd.f32 %v3216, %v3723
        %v3846 = vadd.f32 %v3660, %v3727
        %v3847 = vadd.f32 %v3662, %v3731
        %v3848 = vadd.f32 %v3220, %v3719
        %v3849 = vadd.f32 %v3222, %v3723
        %v3850 = vadd.f32 %v3666, %v3727
        %v3851 = vadd.f32 %v3668, %v3731
        %v3852 = vadd.f32 %v3224, %v3719
        %v3853 = vadd.f32 %v3226, %v3723
        %v3854 = vadd.f32 %v3670, %v3727
        %v3855 = vadd.f32 %v3672, %v3731
        %v3856 = vadd.f32 %v3230, %v3719
        %v3857 = vadd.f32 %v3232, %v3723
        %v3858 = vadd.f32 %v3676, %v3727
        %v3859 = vadd.f32 %v3678, %v3731
        %v3860 = vadd.f32 %v3234, %v3719
        %v3861 = vadd.f32 %v3236, %v3723
        %v3862 = vadd.f32 %v3680, %v3727
        %v3863 = vadd.f32 %v3682, %v3731
        %v3864 = vadd.f32 %v3240, %v3719
        %v3865 = vadd.f32 %v3242, %v3723
        %v3866 = vadd.f32 %v3686, %v3727
        %v3867 = vadd.f32 %v3688, %v3731
        %v3868 = vadd.f32 %v3244, %v3719
        %v3869 = vadd.f32 %v3246, %v3723
        %v3870 = vadd.f32 %v3690, %v3727
        %v3871 = vadd.f32 %v3692, %v3731
        %v3872 = vadd.f32 %v3250, %v3719
        %v3873 = vadd.f32 %v3252, %v3723
        %v3874 = vadd.f32 %v3696, %v3727
        %v3875 = vadd.f32 %v3698, %v3731
        %v3876 = vadd.f32 %v3254, %v3719
        %v3877 = vadd.f32 %v3256, %v3723
        %v3878 = vadd.f32 %v3700, %v3727
        %v3879 = vadd.f32 %v3702, %v3731
        %v3880 = vadd.f32 %v3260, %v3719
        %v3881 = vadd.f32 %v3262, %v3723
        %v3882 = vadd.f32 %v3706, %v3727
        %v3883 = vadd.f32 %v3708, %v3731
        %v3884 = vadd.f32 %v3264, %v3719
        %v3885 = vadd.f32 %v3266, %v3723
        %v3886 = vadd.f32 %v3710, %v3727
        %v3887 = vadd.f32 %v3712, %v3731
        %v3888 = vmul.f32 %v3736, 0.01
        %v3889 = vmul.f32 %v3737, 0.01
        %v3890 = vmul.f32 %v3738, 0.01
        %v3891 = vmul.f32 %v3739, 0.01
        %v3892 = vmul.f32 %v3740, 0.01
        %v3893 = vmul.f32 %v3741, 0.01
        %v3894 = vmul.f32 %v3742, 0.01
        %v3895 = vmul.f32 %v3743, 0.01
        %v3896 = vmul.f32 %v3744, 0.01
        %v3897 = vmul.f32 %v3745, 0.01
        %v3898 = vmul.f32 %v3746, 0.01
        %v3899 = vmul.f32 %v3747, 0.01
        %v3900 = vmul.f32 %v3748, 0.01
        %v3901 = vmul.f32 %v3749, 0.01
        %v3902 = vmul.f32 %v3750, 0.01
        %v3903 = vmul.f32 %v3751, 0.01
        %v3904 = vmul.f32 %v3752, 0.01
        %v3905 = vmul.f32 %v3753, 0.01
        %v3906 = vmul.f32 %v3754, 0.01
        %v3907 = vmul.f32 %v3755, 0.01
        %v3908 = vmul.f32 %v3756, 0.01
        %v3909 = vmul.f32 %v3757, 0.01
        %v3910 = vmul.f32 %v3758, 0.01
        %v3911 = vmul.f32 %v3759, 0.01
        %v3912 = vmul.f32 %v3760, 0.01
        %v3913 = vmul.f32 %v3761, 0.01
        %v3914 = vmul.f32 %v3762, 0.01
        %v3915 = vmul.f32 %v3763, 0.01
        %v3916 = vmul.f32 %v3764, 0.01
        %v3917 = vmul.f32 %v3765, 0.01
        %v3918 = vmul.f32 %v3766, 0.01
        %v3919 = vmul.f32 %v3767, 0.01
        %v3920 = vmul.f32 %v3768, 0.01
        %v3921 = vmul.f32 %v3769, 0.01
        %v3922 = vmul.f32 %v3770, 0.01
        %v3923 = vmul.f32 %v3771, 0.01
        %v3924 = vmul.f32 %v3772, 0.01
        %v3925 = vmul.f32 %v3773, 0.01
        %v3926 = vmul.f32 %v3774, 0.01
        %v3927 = vmul.f32 %v3775, 0.01
        %v3928 = vmul.f32 %v3776, 0.01
        %v3929 = vmul.f32 %v3777, 0.01
        %v3930 = vmul.f32 %v3778, 0.01
        %v3931 = vmul.f32 %v3779, 0.01
        %v3932 = vmul.f32 %v3780, 0.01
        %v3933 = vmul.f32 %v3781, 0.01
        %v3934 = vmul.f32 %v3782, 0.01
        %v3935 = vmul.f32 %v3783, 0.01
        %v3936 = vmul.f32 %v3784, 0.01
        %v3937 = vmul.f32 %v3785, 0.01
        %v3938 = vmul.f32 %v3786, 0.01
        %v3939 = vmul.f32 %v3787, 0.01
        %v3940 = vmul.f32 %v3788, 0.01
        %v3941 = vmul.f32 %v3789, 0.01
        %v3942 = vmul.f32 %v3790, 0.01
        %v3943 = vmul.f32 %v3791, 0.01
        %v3944 = vmul.f32 %v3792, 0.01
        %v3945 = vmul.f32 %v3793, 0.01
        %v3946 = vmul.f32 %v3794, 0.01
        %v3947 = vmul.f32 %v3795, 0.01
        %v3948 = vmul.f32 %v3796, 0.01
        %v3949 = vmul.f32 %v3797, 0.01
        %v3950 = vmul.f32 %v3798, 0.01
        %v3951 = vmul.f32 %v3799, 0.01
        %v3952 = vmul.f32 %v3800, 0.01
        %v3953 = vmul.f32 %v3801, 0.01
        %v3954 = vmul.f32 %v3802, 0.01
        %v3955 = vmul.f32 %v3803, 0.01
        %v3956 = vmul.f32 %v3804, 0.01
        %v3957 = vmul.f32 %v3805, 0.01
        %v3958 = vmul.f32 %v3806, 0.01
        %v3959 = vmul.f32 %v3807, 0.01
        %v3960 = vmul.f32 %v3808, 0.01
        %v3961 = vmul.f32 %v3809, 0.01
        %v3962 = vmul.f32 %v3810, 0.01
        %v3963 = vmul.f32 %v3811, 0.01
        %v3964 = vmul.f32 %v3812, 0.01
        %v3965 = vmul.f32 %v3813, 0.01
        %v3966 = vmul.f32 %v3814, 0.01
        %v3967 = vmul.f32 %v3815, 0.01
        %v3968 = vmul.f32 %v3816, 0.01
        %v3969 = vmul.f32 %v3817, 0.01
        %v3970 = vmul.f32 %v3818, 0.01
        %v3971 = vmul.f32 %v3819, 0.01
        %v3972 = vmul.f32 %v3820, 0.01
        %v3973 = vmul.f32 %v3821, 0.01
        %v3974 = vmul.f32 %v3822, 0.01
        %v3975 = vmul.f32 %v3823, 0.01
        %v3976 = vmul.f32 %v3824, 0.01
        %v3977 = vmul.f32 %v3825, 0.01
        %v3978 = vmul.f32 %v3826, 0.01
        %v3979 = vmul.f32 %v3827, 0.01
        %v3980 = vmul.f32 %v3828, 0.01
        %v3981 = vmul.f32 %v3829, 0.01
        %v3982 = vmul.f32 %v3830, 0.01
        %v3983 = vmul.f32 %v3831, 0.01
        %v3984 = vmul.f32 %v3832, 0.01
        %v3985 = vmul.f32 %v3833, 0.01
        %v3986 = vmul.f32 %v3834, 0.01
        %v3987 = vmul.f32 %v3835, 0.01
        %v3988 = vmul.f32 %v3836, 0.01
        %v3989 = vmul.f32 %v3837, 0.01
        %v3990 = vmul.f32 %v3838, 0.01
        %v3991 = vmul.f32 %v3839, 0.01
        %v3992 = vmul.f32 %v3840, 0.01
        %v3993 = vmul.f32 %v3841, 0.01
        %v3994 = vmul.f32 %v3842, 0.01
        %v3995 = vmul.f32 %v3843, 0.01
        %v3996 = vmul.f32 %v3844, 0.01
        %v3997 = vmul.f32 %v3845, 0.01
        %v3998 = vmul.f32 %v3846, 0.01
        %v3999 = vmul.f32 %v3847, 0.01
        %v4000 = vmul.f32 %v3848, 0.01
        %v4001 = vmul.f32 %v3849, 0.01
        %v4002 = vmul.f32 %v3850, 0.01
        %v4003 = vmul.f32 %v3851, 0.01
        %v4004 = vmul.f32 %v3852, 0.01
        %v4005 = vmul.f32 %v3853, 0.01
        %v4006 = vmul.f32 %v3854, 0.01
        %v4007 = vmul.f32 %v3855, 0.01
        %v4008 = vmul.f32 %v3856, 0.01
        %v4009 = vmul.f32 %v3857, 0.01
        %v4010 = vmul.f32 %v3858, 0.01
        %v4011 = vmul.f32 %v3859, 0.01
        %v4012 = vmul.f32 %v3860, 0.01
        %v4013 = vmul.f32 %v3861, 0.01
        %v4014 = vmul.f32 %v3862, 0.01
        %v4015 = vmul.f32 %v3863, 0.01
        %v4016 = vmul.f32 %v3864, 0.01
        %v4017 = vmul.f32 %v3865, 0.01
        %v4018 = vmul.f32 %v3866, 0.01
        %v4019 = vmul.f32 %v3867, 0.01
        %v4020 = vmul.f32 %v3868, 0.01
        %v4021 = vmul.f32 %v3869, 0.01
        %v4022 = vmul.f32 %v3870, 0.01
        %v4023 = vmul.f32 %v3871, 0.01
        %v4024 = vmul.f32 %v3872, 0.01
        %v4025 = vmul.f32 %v3873, 0.01
        %v4026 = vmul.f32 %v3874, 0.01
        %v4027 = vmul.f32 %v3875, 0.01
        %v4028 = vmul.f32 %v3876, 0.01
        %v4029 = vmul.f32 %v3877, 0.01
        %v4030 = vmul.f32 %v3878, 0.01
        %v4031 = vmul.f32 %v3879, 0.01
        %v4032 = vmul.f32 %v3880, 0.01
        %v4033 = vmul.f32 %v3881, 0.01
        %v4034 = vmul.f32 %v3882, 0.01
        %v4035 = vmul.f32 %v3883, 0.01
        %v4036 = vmul.f32 %v3884, 0.01
        %v4037 = vmul.f32 %v3885, 0.01
        %v4038 = vmul.f32 %v3886, 0.01
        %v4039 = vmul.f32 %v3887, 0.01
        %v4040 = vmax.f32 %v3736, %v3888
        %v4041 = vmax.f32 %v3737, %v3889
        %v4042 = vmax.f32 %v3738, %v3890
        %v4043 = vmax.f32 %v3739, %v3891
        %v4044 = vmax.f32 %v3740, %v3892
        %v4045 = vmax.f32 %v3741, %v3893
        %v4046 = vmax.f32 %v3742, %v3894
        %v4047 = vmax.f32 %v3743, %v3895
        %v4048 = vmax.f32 %v3744, %v3896
        %v4049 = vmax.f32 %v3745, %v3897
        %v4050 = vmax.f32 %v3746, %v3898
        %v4051 = vmax.f32 %v3747, %v3899
        %v4052 = vmax.f32 %v3748, %v3900
        %v4053 = vmax.f32 %v3749, %v3901
        %v4054 = vmax.f32 %v3750, %v3902
        %v4055 = vmax.f32 %v3751, %v3903
        %v4056 = vmax.f32 %v3752, %v3904
        %v4057 = vmax.f32 %v3753, %v3905
        %v4058 = vmax.f32 %v3754, %v3906
        %v4059 = vmax.f32 %v3755, %v3907
        %v4060 = vmax.f32 %v3756, %v3908
        %v4061 = vmax.f32 %v3757, %v3909
        %v4062 = vmax.f32 %v3758, %v3910
        %v4063 = vmax.f32 %v3759, %v3911
        %v4064 = vmax.f32 %v3760, %v3912
        %v4065 = vmax.f32 %v3761, %v3913
        %v4066 = vmax.f32 %v3762, %v3914
        %v4067 = vmax.f32 %v3763, %v3915
        %v4068 = vmax.f32 %v3764, %v3916
        %v4069 = vmax.f32 %v3765, %v3917
        %v4070 = vmax.f32 %v3766, %v3918
        %v4071 = vmax.f32 %v3767, %v3919
        %v4072 = vmax.f32 %v3768, %v3920
        %v4073 = vmax.f32 %v3769, %v3921
        %v4074 = vmax.f32 %v3770, %v3922
        %v4075 = vmax.f32 %v3771, %v3923
        %v4076 = vmax.f32 %v3772, %v3924
        %v4077 = vmax.f32 %v3773, %v3925
        %v4078 = vmax.f32 %v3774, %v3926
        %v4079 = vmax.f32 %v3775, %v3927
        %v4080 = vmax.f32 %v3776, %v3928
        %v4081 = vmax.f32 %v3777, %v3929
        %v4082 = vmax.f32 %v3778, %v3930
        %v4083 = vmax.f32 %v3779, %v3931
        %v4084 = vmax.f32 %v3780, %v3932
        %v4085 = vmax.f32 %v3781, %v3933
        %v4086 = vmax.f32 %v3782, %v3934
        %v4087 = vmax.f32 %v3783, %v3935
        %v4088 = vmax.f32 %v3784, %v3936
        %v4089 = vmax.f32 %v3785, %v3937
        %v4090 = vmax.f32 %v3786, %v3938
        %v4091 = vmax.f32 %v3787, %v3939
        %v4092 = vmax.f32 %v3788, %v3940
        %v4093 = vmax.f32 %v3789, %v3941
        %v4094 = vmax.f32 %v3790, %v3942
        %v4095 = vmax.f32 %v3791, %v3943
        %v4096 = vmax.f32 %v3792, %v3944
        %v4097 = vmax.f32 %v3793, %v3945
        %v4098 = vmax.f32 %v3794, %v3946
        %v4099 = vmax.f32 %v3795, %v3947
        %v4100 = vmax.f32 %v3796, %v3948
        %v4101 = vmax.f32 %v3797, %v3949
        %v4102 = vmax.f32 %v3798, %v3950
        %v4103 = vmax.f32 %v3799, %v3951
        %v4104 = vmax.f32 %v3800, %v3952
        %v4105 = vmax.f32 %v3801, %v3953
        %v4106 = vmax.f32 %v3802, %v3954
        %v4107 = vmax.f32 %v3803, %v3955
        %v4108 = vmax.f32 %v3804, %v3956
        %v4109 = vmax.f32 %v3805, %v3957
        %v4110 = vmax.f32 %v3806, %v3958
        %v4111 = vmax.f32 %v3807, %v3959
        %v4112 = vmax.f32 %v3808, %v3960
        %v4113 = vmax.f32 %v3809, %v3961
        %v4114 = vmax.f32 %v3810, %v3962
        %v4115 = vmax.f32 %v3811, %v3963
        %v4116 = vmax.f32 %v3812, %v3964
        %v4117 = vmax.f32 %v3813, %v3965
        %v4118 = vmax.f32 %v3814, %v3966
        %v4119 = vmax.f32 %v3815, %v3967
        %v4120 = vmax.f32 %v3816, %v3968
        %v4121 = vmax.f32 %v3817, %v3969
        %v4122 = vmax.f32 %v3818, %v3970
        %v4123 = vmax.f32 %v3819, %v3971
        %v4124 = vmax.f32 %v3820, %v3972
        %v4125 = vmax.f32 %v3821, %v3973
        %v4126 = vmax.f32 %v3822, %v3974
        %v4127 = vmax.f32 %v3823, %v3975
        %v4128 = vmax.f32 %v3824, %v3976
        %v4129 = vmax.f32 %v3825, %v3977
        %v4130 = vmax.f32 %v3826, %v3978
        %v4131 = vmax.f32 %v3827, %v3979
        %v4132 = vmax.f32 %v3828, %v3980
        %v4133 = vmax.f32 %v3829, %v3981
        %v4134 = vmax.f32 %v3830, %v3982
        %v4135 = vmax.f32 %v3831, %v3983
        %v4136 = vmax.f32 %v3832, %v3984
        %v4137 = vmax.f32 %v3833, %v3985
        %v4138 = vmax.f32 %v3834, %v3986
        %v4139 = vmax.f32 %v3835, %v3987
        %v4140 = vmax.f32 %v3836, %v3988
        %v4141 = vmax.f32 %v3837, %v3989
        %v4142 = vmax.f32 %v3838, %v3990
        %v4143 = vmax.f32 %v3839, %v3991
        %v4144 = vmax.f32 %v3840, %v3992
        %v4145 = vmax.f32 %v3841, %v3993
        %v4146 = vmax.f32 %v3842, %v3994
        %v4147 = vmax.f32 %v3843, %v3995
        %v4148 = vmax.f32 %v3844, %v3996
        %v4149 = vmax.f32 %v3845, %v3997
        %v4150 = vmax.f32 %v3846, %v3998
        %v4151 = vmax.f32 %v3847, %v3999
        %v4152 = vmax.f32 %v3848, %v4000
        %v4153 = vmax.f32 %v3849, %v4001
        %v4154 = vmax.f32 %v3850, %v4002
        %v4155 = vmax.f32 %v3851, %v4003
        %v4156 = vmax.f32 %v3852, %v4004
        %v4157 = vmax.f32 %v3853, %v4005
        %v4158 = vmax.f32 %v3854, %v4006
        %v4159 = vmax.f32 %v3855, %v4007
        %v4160 = vmax.f32 %v3856, %v4008
        %v4161 = vmax.f32 %v3857, %v4009
        %v4162 = vmax.f32 %v3858, %v4010
        %v4163 = vmax.f32 %v3859, %v4011
        %v4164 = vmax.f32 %v3860, %v4012
        %v4165 = vmax.f32 %v3861, %v4013
        %v4166 = vmax.f32 %v3862, %v4014
        %v4167 = vmax.f32 %v3863, %v4015
        %v4168 = vmax.f32 %v3864, %v4016
        %v4169 = vmax.f32 %v3865, %v4017
        %v4170 = vmax.f32 %v3866, %v4018
        %v4171 = vmax.f32 %v3867, %v4019
        %v4172 = vmax.f32 %v3868, %v4020
        %v4173 = vmax.f32 %v3869, %v4021
        %v4174 = vmax.f32 %v3870, %v4022
        %v4175 = vmax.f32 %v3871, %v4023
        %v4176 = vmax.f32 %v3872, %v4024
        %v4177 = vmax.f32 %v3873, %v4025
        %v4178 = vmax.f32 %v3874, %v4026
        %v4179 = vmax.f32 %v3875, %v4027
        %v4180 = vmax.f32 %v3876, %v4028
        %v4181 = vmax.f32 %v3877, %v4029
        %v4182 = vmax.f32 %v3878, %v4030
        %v4183 = vmax.f32 %v3879, %v4031
        %v4184 = vmax.f32 %v3880, %v4032
        %v4185 = vmax.f32 %v3881, %v4033
        %v4186 = vmax.f32 %v3882, %v4034
        %v4187 = vmax.f32 %v3883, %v4035
        %v4188 = vmax.f32 %v3884, %v4036
        %v4189 = vmax.f32 %v3885, %v4037
        %v4190 = vmax.f32 %v3886, %v4038
        %v4191 = vmax.f32 %v3887, %v4039
        %v4192 = vpack.c.bf16 %v4044, %v4040
        %v4193 = vpack.c.bf16 %v4045, %v4041
        %v4194 = vpack.c.bf16 %v4046, %v4042
        %v4195 = vpack.c.bf16 %v4047, %v4043
        %v4196 = vpack.c.bf16 %v4052, %v4048
        %v4197 = vpack.c.bf16 %v4053, %v4049
        %v4198 = vpack.c.bf16 %v4054, %v4050
        %v4199 = vpack.c.bf16 %v4055, %v4051
        %v4200 = vpack.c.bf16 %v4060, %v4056
        %v4201 = vpack.c.bf16 %v4061, %v4057
        %v4202 = vpack.c.bf16 %v4062, %v4058
        %v4203 = vpack.c.bf16 %v4063, %v4059
        %v4204 = vpack.c.bf16 %v4068, %v4064
        %v4205 = vpack.c.bf16 %v4069, %v4065
        %v4206 = vpack.c.bf16 %v4070, %v4066
        %v4207 = vpack.c.bf16 %v4071, %v4067
        %v4208 = vpack.c.bf16 %v4076, %v4072
        %v4209 = vpack.c.bf16 %v4077, %v4073
        %v4210 = vpack.c.bf16 %v4078, %v4074
        %v4211 = vpack.c.bf16 %v4079, %v4075
        %v4212 = vpack.c.bf16 %v4084, %v4080
        %v4213 = vpack.c.bf16 %v4085, %v4081
        %v4214 = vpack.c.bf16 %v4086, %v4082
        %v4215 = vpack.c.bf16 %v4087, %v4083
        %v4216 = vpack.c.bf16 %v4092, %v4088
        %v4217 = vpack.c.bf16 %v4093, %v4089
        %v4218 = vpack.c.bf16 %v4094, %v4090
        %v4219 = vpack.c.bf16 %v4095, %v4091
        %v4220 = vpack.c.bf16 %v4100, %v4096
        %v4221 = vpack.c.bf16 %v4101, %v4097
        %v4222 = vpack.c.bf16 %v4102, %v4098
        %v4223 = vpack.c.bf16 %v4103, %v4099
        %v4224 = vpack.c.bf16 %v4108, %v4104
        %v4225 = vpack.c.bf16 %v4109, %v4105
        %v4226 = vpack.c.bf16 %v4110, %v4106
        %v4227 = vpack.c.bf16 %v4111, %v4107
        %v4228 = vpack.c.bf16 %v4116, %v4112
        %v4229 = vpack.c.bf16 %v4117, %v4113
        %v4230 = vpack.c.bf16 %v4118, %v4114
        %v4231 = vpack.c.bf16 %v4119, %v4115
        %v4232 = vpack.c.bf16 %v4124, %v4120
        %v4233 = vpack.c.bf16 %v4125, %v4121
        %v4234 = vpack.c.bf16 %v4126, %v4122
        %v4235 = vpack.c.bf16 %v4127, %v4123
        %v4236 = vpack.c.bf16 %v4132, %v4128
        %v4237 = vpack.c.bf16 %v4133, %v4129
        %v4238 = vpack.c.bf16 %v4134, %v4130
        %v4239 = vpack.c.bf16 %v4135, %v4131
        %v4240 = vpack.c.bf16 %v4140, %v4136
        %v4241 = vpack.c.bf16 %v4141, %v4137
        %v4242 = vpack.c.bf16 %v4142, %v4138
        %v4243 = vpack.c.bf16 %v4143, %v4139
        %v4244 = vpack.c.bf16 %v4148, %v4144
        %v4245 = vpack.c.bf16 %v4149, %v4145
        %v4246 = vpack.c.bf16 %v4150, %v4146
        %v4247 = vpack.c.bf16 %v4151, %v4147
        %v4248 = vpack.c.bf16 %v4156, %v4152
        %v4249 = vpack.c.bf16 %v4157, %v4153
        %v4250 = vpack.c.bf16 %v4158, %v4154
        %v4251 = vpack.c.bf16 %v4159, %v4155
        %v4252 = vpack.c.bf16 %v4164, %v4160
        %v4253 = vpack.c.bf16 %v4165, %v4161
        %v4254 = vpack.c.bf16 %v4166, %v4162
        %v4255 = vpack.c.bf16 %v4167, %v4163
        %v4256 = vpack.c.bf16 %v4172, %v4168
        %v4257 = vpack.c.bf16 %v4173, %v4169
        %v4258 = vpack.c.bf16 %v4174, %v4170
        %v4259 = vpack.c.bf16 %v4175, %v4171
        %v4260 = vpack.c.bf16 %v4180, %v4176
        %v4261 = vpack.c.bf16 %v4181, %v4177
        %v4262 = vpack.c.bf16 %v4182, %v4178
        %v4263 = vpack.c.bf16 %v4183, %v4179
        %v4264 = vpack.c.bf16 %v4188, %v4184
        %v4265 = vpack.c.bf16 %v4189, %v4185
        %v4266 = vpack.c.bf16 %v4190, %v4186
        %v4267 = vpack.c.bf16 %v4191, %v4187
        %v4268 = vld [vmem:[#allocation3] sm:$0xff]
        %v4269 = vld [vmem:[#allocation3 + $0x8] sm:$0xff]
        %v4270 = vld [vmem:[#allocation3 + $0x10] sm:$0xff]
        %v4271 = vld [vmem:[#allocation3 + $0x18] sm:$0xff]
        %v4272 = vld [vmem:[#allocation3 + $0x20] sm:$0xff]
        %v4273 = vld [vmem:[#allocation3 + $0x28] sm:$0xff]
        %v4274 = vld [vmem:[#allocation3 + $0x30] sm:$0xff]
        %v4275 = vld [vmem:[#allocation3 + $0x38] sm:$0xff]
        %v4276 = vld [vmem:[#allocation3 + $0x40] sm:$0xff]
        %v4277 = vld [vmem:[#allocation3 + $0x48] sm:$0xff]
        %v4278 = vld [vmem:[#allocation3 + $0x50] sm:$0xff]
        %v4279 = vld [vmem:[#allocation3 + $0x58] sm:$0xff]
        %v4280 = vld [vmem:[#allocation3 + $0x60] sm:$0xff]
        %v4281 = vld [vmem:[#allocation3 + $0x68] sm:$0xff]
        %v4282 = vld [vmem:[#allocation3 + $0x70] sm:$0xff]
        %v4283 = vld [vmem:[#allocation3 + $0x78] sm:$0xff]
        %v4284 = vld [vmem:[#allocation3 + $0x80] sm:$0xff]
        %v4285 = vld [vmem:[#allocation3 + $0x88] sm:$0xff]
        %v4286 = vld [vmem:[#allocation3 + $0x90] sm:$0xff]
        %v4287 = vld [vmem:[#allocation3 + $0x98] sm:$0xff]
        %v4288 = vld [vmem:[#allocation3 + $0xa0] sm:$0xff]
        %v4289 = vld [vmem:[#allocation3 + $0xa8] sm:$0xff]
        %v4290 = vld [vmem:[#allocation3 + $0xb0] sm:$0xff]
        %v4291 = vld [vmem:[#allocation3 + $0xb8] sm:$0xff]
        %v4292 = vld [vmem:[#allocation3 + $0xc0] sm:$0xff]
        %v4293 = vld [vmem:[#allocation3 + $0xc8] sm:$0xff]
        %v4294 = vld [vmem:[#allocation3 + $0xd0] sm:$0xff]
        %v4295 = vld [vmem:[#allocation3 + $0xd8] sm:$0xff]
        %v4296 = vld [vmem:[#allocation3 + $0xe0] sm:$0xff]
        %v4297 = vld [vmem:[#allocation3 + $0xe8] sm:$0xff]
        %v4298 = vld [vmem:[#allocation3 + $0xf0] sm:$0xff]
        %v4299 = vld [vmem:[#allocation3 + $0xf8] sm:$0xff]
        %v4300 = vld [vmem:[#allocation3 + $0x100] sm:$0xff]
        %v4301 = vld [vmem:[#allocation3 + $0x108] sm:$0xff]
        %v4302 = vld [vmem:[#allocation3 + $0x110] sm:$0xff]
        %v4303 = vld [vmem:[#allocation3 + $0x118] sm:$0xff]
        %v4304 = vld [vmem:[#allocation3 + $0x120] sm:$0xff]
        %v4305 = vld [vmem:[#allocation3 + $0x128] sm:$0xff]
        %v4306 = vld [vmem:[#allocation3 + $0x130] sm:$0xff]
        %v4307 = vld [vmem:[#allocation3 + $0x138] sm:$0xff]
        %v4308 = vld [vmem:[#allocation3 + $0x140] sm:$0xff]
        %v4309 = vld [vmem:[#allocation3 + $0x148] sm:$0xff]
        %v4310 = vld [vmem:[#allocation3 + $0x150] sm:$0xff]
        %v4311 = vld [vmem:[#allocation3 + $0x158] sm:$0xff]
        %v4312 = vld [vmem:[#allocation3 + $0x160] sm:$0xff]
        %v4313 = vld [vmem:[#allocation3 + $0x168] sm:$0xff]
        %v4314 = vld [vmem:[#allocation3 + $0x170] sm:$0xff]
        %v4315 = vld [vmem:[#allocation3 + $0x178] sm:$0xff]
        %v4316 = vld [vmem:[#allocation3 + $0x180] sm:$0xff]
        %v4317 = vld [vmem:[#allocation3 + $0x188] sm:$0xff]
        %v4318 = vld [vmem:[#allocation3 + $0x190] sm:$0xff]
        %v4319 = vld [vmem:[#allocation3 + $0x198] sm:$0xff]
        %v4320 = vld [vmem:[#allocation3 + $0x1a0] sm:$0xff]
        %v4321 = vld [vmem:[#allocation3 + $0x1a8] sm:$0xff]
        %v4322 = vld [vmem:[#allocation3 + $0x1b0] sm:$0xff]
        %v4323 = vld [vmem:[#allocation3 + $0x1b8] sm:$0xff]
        %v4324 = vld [vmem:[#allocation3 + $0x1c0] sm:$0xff]
        %v4325 = vld [vmem:[#allocation3 + $0x1c8] sm:$0xff]
        %v4326 = vld [vmem:[#allocation3 + $0x1d0] sm:$0xff]
        %v4327 = vld [vmem:[#allocation3 + $0x1d8] sm:$0xff]
        %v4328 = vld [vmem:[#allocation3 + $0x1e0] sm:$0xff]
        %v4329 = vld [vmem:[#allocation3 + $0x1e8] sm:$0xff]
        %v4330 = vld [vmem:[#allocation3 + $0x1f0] sm:$0xff]
        %v4331 = vld [vmem:[#allocation3 + $0x1f8] sm:$0xff]
        %v4332 = vld [vmem:[#allocation3 + $0x200] sm:$0xff]
        %v4333 = vld [vmem:[#allocation3 + $0x208] sm:$0xff]
        %v4334 = vld [vmem:[#allocation3 + $0x210] sm:$0xff]
        %v4335 = vld [vmem:[#allocation3 + $0x218] sm:$0xff]
        %v4336 = vld [vmem:[#allocation3 + $0x220] sm:$0xff]
        %v4337 = vld [vmem:[#allocation3 + $0x228] sm:$0xff]
        %v4338 = vld [vmem:[#allocation3 + $0x230] sm:$0xff]
        %v4339 = vld [vmem:[#allocation3 + $0x238] sm:$0xff]
        %v4340 = vld [vmem:[#allocation3 + $0x240] sm:$0xff]
        %v4341 = vld [vmem:[#allocation3 + $0x248] sm:$0xff]
        %v4342 = vld [vmem:[#allocation3 + $0x250] sm:$0xff]
        %v4343 = vld [vmem:[#allocation3 + $0x258] sm:$0xff]
        %v4344 = vld [vmem:[#allocation3 + $0x260] sm:$0xff]
        %v4345 = vld [vmem:[#allocation3 + $0x268] sm:$0xff]
        %v4346 = vld [vmem:[#allocation3 + $0x270] sm:$0xff]
        %v4347 = vld [vmem:[#allocation3 + $0x278] sm:$0xff]
        %v4348 = vld [vmem:[#allocation3 + $0x280] sm:$0xff]
        %v4349 = vld [vmem:[#allocation3 + $0x288] sm:$0xff]
        %v4350 = vld [vmem:[#allocation3 + $0x290] sm:$0xff]
        %v4351 = vld [vmem:[#allocation3 + $0x298] sm:$0xff]
        %v4352 = vld [vmem:[#allocation3 + $0x2a0] sm:$0xff]
        %v4353 = vld [vmem:[#allocation3 + $0x2a8] sm:$0xff]
        %v4354 = vld [vmem:[#allocation3 + $0x2b0] sm:$0xff]
        %v4355 = vld [vmem:[#allocation3 + $0x2b8] sm:$0xff]
        %v4356 = vld [vmem:[#allocation3 + $0x2c0] sm:$0xff]
        %v4357 = vld [vmem:[#allocation3 + $0x2c8] sm:$0xff]
        %v4358 = vld [vmem:[#allocation3 + $0x2d0] sm:$0xff]
        %v4359 = vld [vmem:[#allocation3 + $0x2d8] sm:$0xff]
        %v4360 = vld [vmem:[#allocation3 + $0x2e0] sm:$0xff]
        %v4361 = vld [vmem:[#allocation3 + $0x2e8] sm:$0xff]
        %v4362 = vld [vmem:[#allocation3 + $0x2f0] sm:$0xff]
        %v4363 = vld [vmem:[#allocation3 + $0x2f8] sm:$0xff]
        %v4364 = vld [vmem:[#allocation3 + $0x300] sm:$0xff]
        %v4365 = vld [vmem:[#allocation3 + $0x308] sm:$0xff]
        %v4366 = vld [vmem:[#allocation3 + $0x310] sm:$0xff]
        %v4367 = vld [vmem:[#allocation3 + $0x318] sm:$0xff]
        %v4368 = vld [vmem:[#allocation3 + $0x320] sm:$0xff]
        %v4369 = vld [vmem:[#allocation3 + $0x328] sm:$0xff]
        %v4370 = vld [vmem:[#allocation3 + $0x330] sm:$0xff]
        %v4371 = vld [vmem:[#allocation3 + $0x338] sm:$0xff]
        %v4372 = vld [vmem:[#allocation3 + $0x340] sm:$0xff]
        %v4373 = vld [vmem:[#allocation3 + $0x348] sm:$0xff]
        %v4374 = vld [vmem:[#allocation3 + $0x350] sm:$0xff]
        %v4375 = vld [vmem:[#allocation3 + $0x358] sm:$0xff]
        %v4376 = vld [vmem:[#allocation3 + $0x360] sm:$0xff]
        %v4377 = vld [vmem:[#allocation3 + $0x368] sm:$0xff]
        %v4378 = vld [vmem:[#allocation3 + $0x370] sm:$0xff]
        %v4379 = vld [vmem:[#allocation3 + $0x378] sm:$0xff]
        %v4380 = vld [vmem:[#allocation3 + $0x380] sm:$0xff]
        %v4381 = vld [vmem:[#allocation3 + $0x388] sm:$0xff]
        %v4382 = vld [vmem:[#allocation3 + $0x390] sm:$0xff]
        %v4383 = vld [vmem:[#allocation3 + $0x398] sm:$0xff]
        %v4384 = vld [vmem:[#allocation3 + $0x3a0] sm:$0xff]
        %v4385 = vld [vmem:[#allocation3 + $0x3a8] sm:$0xff]
        %v4386 = vld [vmem:[#allocation3 + $0x3b0] sm:$0xff]
        %v4387 = vld [vmem:[#allocation3 + $0x3b8] sm:$0xff]
        %v4388 = vld [vmem:[#allocation3 + $0x3c0] sm:$0xff]
        %v4389 = vld [vmem:[#allocation3 + $0x3c8] sm:$0xff]
        %v4390 = vld [vmem:[#allocation3 + $0x3d0] sm:$0xff]
        %v4391 = vld [vmem:[#allocation3 + $0x3d8] sm:$0xff]
        %v4392 = vld [vmem:[#allocation3 + $0x3e0] sm:$0xff]
        %v4393 = vld [vmem:[#allocation3 + $0x3e8] sm:$0xff]
        %v4394 = vld [vmem:[#allocation3 + $0x3f0] sm:$0xff]
        %v4395 = vld [vmem:[#allocation3 + $0x3f8] sm:$0xff]
        %v4396 = vld [vmem:[%s8] sm:$0xf]
        %v4398 = vlaneseq
        %v4399 = vshrl.u32 %v4398, 7
        %v4400 = vsub.s32 0, %v4399
        %v4401 = vrot.slane %v4396, %v4400
        %v4402 = vlaneseq
        %v4403 = vshrl.u32 %v4402, 7
        %v4404 = vsub.s32 1, %v4403
        %v4405 = vrot.slane %v4396, %v4404
        %v4406 = vlaneseq
        %v4407 = vshrl.u32 %v4406, 7
        %v4408 = vsub.s32 2, %v4407
        %v4409 = vrot.slane %v4396, %v4408
        %v4410 = vlaneseq
        %v4411 = vshrl.u32 %v4410, 7
        %v4412 = vsub.s32 3, %v4411
        %v4413 = vrot.slane %v4396, %v4412
        %v4546 = vunpack.c.l.b16 %v4268
        %v4547 = vunpack.c.h.b16 %v4268
        %v4548 = vunpack.c.l.b16 %v4269
        %v4549 = vunpack.c.h.b16 %v4269
        %v4550 = vunpack.c.l.b16 %v4270
        %v4551 = vunpack.c.h.b16 %v4270
        %v4552 = vunpack.c.l.b16 %v4271
        %v4553 = vunpack.c.h.b16 %v4271
        %v4554 = vunpack.c.l.b16 %v4272
        %v4555 = vunpack.c.h.b16 %v4272
        %v4556 = vunpack.c.l.b16 %v4273
        %v4557 = vunpack.c.h.b16 %v4273
        %v4558 = vunpack.c.l.b16 %v4274
        %v4559 = vunpack.c.h.b16 %v4274
        %v4560 = vunpack.c.l.b16 %v4275
        %v4561 = vunpack.c.h.b16 %v4275
        %v4562 = vunpack.c.l.b16 %v4276
        %v4563 = vunpack.c.h.b16 %v4276
        %v4564 = vunpack.c.l.b16 %v4277
        %v4565 = vunpack.c.h.b16 %v4277
        %v4566 = vunpack.c.l.b16 %v4278
        %v4567 = vunpack.c.h.b16 %v4278
        %v4568 = vunpack.c.l.b16 %v4279
        %v4569 = vunpack.c.h.b16 %v4279
        %v4570 = vunpack.c.l.b16 %v4280
        %v4571 = vunpack.c.h.b16 %v4280
        %v4572 = vunpack.c.l.b16 %v4281
        %v4573 = vunpack.c.h.b16 %v4281
        %v4574 = vunpack.c.l.b16 %v4282
        %v4575 = vunpack.c.h.b16 %v4282
        %v4576 = vunpack.c.l.b16 %v4283
        %v4577 = vunpack.c.h.b16 %v4283
        %v4578 = vunpack.c.l.b16 %v4284
        %v4579 = vunpack.c.h.b16 %v4284
        %v4580 = vunpack.c.l.b16 %v4285
        %v4581 = vunpack.c.h.b16 %v4285
        %v4582 = vunpack.c.l.b16 %v4286
        %v4583 = vunpack.c.h.b16 %v4286
        %v4584 = vunpack.c.l.b16 %v4287
        %v4585 = vunpack.c.h.b16 %v4287
        %v4586 = vunpack.c.l.b16 %v4288
        %v4587 = vunpack.c.h.b16 %v4288
        %v4588 = vunpack.c.l.b16 %v4289
        %v4589 = vunpack.c.h.b16 %v4289
        %v4590 = vunpack.c.l.b16 %v4290
        %v4591 = vunpack.c.h.b16 %v4290
        %v4592 = vunpack.c.l.b16 %v4291
        %v4593 = vunpack.c.h.b16 %v4291
        %v4594 = vunpack.c.l.b16 %v4292
        %v4595 = vunpack.c.h.b16 %v4292
        %v4596 = vunpack.c.l.b16 %v4293
        %v4597 = vunpack.c.h.b16 %v4293
        %v4598 = vunpack.c.l.b16 %v4294
        %v4599 = vunpack.c.h.b16 %v4294
        %v4600 = vunpack.c.l.b16 %v4295
        %v4601 = vunpack.c.h.b16 %v4295
        %v4602 = vunpack.c.l.b16 %v4296
        %v4603 = vunpack.c.h.b16 %v4296
        %v4604 = vunpack.c.l.b16 %v4297
        %v4605 = vunpack.c.h.b16 %v4297
        %v4606 = vunpack.c.l.b16 %v4298
        %v4607 = vunpack.c.h.b16 %v4298
        %v4608 = vunpack.c.l.b16 %v4299
        %v4609 = vunpack.c.h.b16 %v4299
        %v4610 = vunpack.c.l.b16 %v4300
        %v4611 = vunpack.c.h.b16 %v4300
        %v4612 = vunpack.c.l.b16 %v4301
        %v4613 = vunpack.c.h.b16 %v4301
        %v4614 = vunpack.c.l.b16 %v4302
        %v4615 = vunpack.c.h.b16 %v4302
        %v4616 = vunpack.c.l.b16 %v4303
        %v4617 = vunpack.c.h.b16 %v4303
        %v4618 = vunpack.c.l.b16 %v4304
        %v4619 = vunpack.c.h.b16 %v4304
        %v4620 = vunpack.c.l.b16 %v4305
        %v4621 = vunpack.c.h.b16 %v4305
        %v4622 = vunpack.c.l.b16 %v4306
        %v4623 = vunpack.c.h.b16 %v4306
        %v4624 = vunpack.c.l.b16 %v4307
        %v4625 = vunpack.c.h.b16 %v4307
        %v4626 = vunpack.c.l.b16 %v4308
        %v4627 = vunpack.c.h.b16 %v4308
        %v4628 = vunpack.c.l.b16 %v4309
        %v4629 = vunpack.c.h.b16 %v4309
        %v4630 = vunpack.c.l.b16 %v4310
        %v4631 = vunpack.c.h.b16 %v4310
        %v4632 = vunpack.c.l.b16 %v4311
        %v4633 = vunpack.c.h.b16 %v4311
        %v4634 = vunpack.c.l.b16 %v4312
        %v4635 = vunpack.c.h.b16 %v4312
        %v4636 = vunpack.c.l.b16 %v4313
        %v4637 = vunpack.c.h.b16 %v4313
        %v4638 = vunpack.c.l.b16 %v4314
        %v4639 = vunpack.c.h.b16 %v4314
        %v4640 = vunpack.c.l.b16 %v4315
        %v4641 = vunpack.c.h.b16 %v4315
        %v4642 = vunpack.c.l.b16 %v4316
        %v4643 = vunpack.c.h.b16 %v4316
        %v4644 = vunpack.c.l.b16 %v4317
        %v4645 = vunpack.c.h.b16 %v4317
        %v4646 = vunpack.c.l.b16 %v4318
        %v4647 = vunpack.c.h.b16 %v4318
        %v4648 = vunpack.c.l.b16 %v4319
        %v4649 = vunpack.c.h.b16 %v4319
        %v4650 = vunpack.c.l.b16 %v4320
        %v4651 = vunpack.c.h.b16 %v4320
        %v4652 = vunpack.c.l.b16 %v4321
        %v4653 = vunpack.c.h.b16 %v4321
        %v4654 = vunpack.c.l.b16 %v4322
        %v4655 = vunpack.c.h.b16 %v4322
        %v4656 = vunpack.c.l.b16 %v4323
        %v4657 = vunpack.c.h.b16 %v4323
        %v4658 = vunpack.c.l.b16 %v4324
        %v4659 = vunpack.c.h.b16 %v4324
        %v4660 = vunpack.c.l.b16 %v4325
        %v4661 = vunpack.c.h.b16 %v4325
        %v4662 = vunpack.c.l.b16 %v4326
        %v4663 = vunpack.c.h.b16 %v4326
        %v4664 = vunpack.c.l.b16 %v4327
        %v4665 = vunpack.c.h.b16 %v4327
        %v4666 = vunpack.c.l.b16 %v4328
        %v4667 = vunpack.c.h.b16 %v4328
        %v4668 = vunpack.c.l.b16 %v4329
        %v4669 = vunpack.c.h.b16 %v4329
        %v4670 = vunpack.c.l.b16 %v4330
        %v4671 = vunpack.c.h.b16 %v4330
        %v4672 = vunpack.c.l.b16 %v4331
        %v4673 = vunpack.c.h.b16 %v4331
        %v4674 = vunpack.c.l.b16 %v4332
        %v4675 = vunpack.c.h.b16 %v4332
        %v4676 = vunpack.c.l.b16 %v4333
        %v4677 = vunpack.c.h.b16 %v4333
        %v4678 = vunpack.c.l.b16 %v4334
        %v4679 = vunpack.c.h.b16 %v4334
        %v4680 = vunpack.c.l.b16 %v4335
        %v4681 = vunpack.c.h.b16 %v4335
        %v4682 = vunpack.c.l.b16 %v4336
        %v4683 = vunpack.c.h.b16 %v4336
        %v4684 = vunpack.c.l.b16 %v4337
        %v4685 = vunpack.c.h.b16 %v4337
        %v4686 = vunpack.c.l.b16 %v4338
        %v4687 = vunpack.c.h.b16 %v4338
        %v4688 = vunpack.c.l.b16 %v4339
        %v4689 = vunpack.c.h.b16 %v4339
        %v4690 = vunpack.c.l.b16 %v4340
        %v4691 = vunpack.c.h.b16 %v4340
        %v4692 = vunpack.c.l.b16 %v4341
        %v4693 = vunpack.c.h.b16 %v4341
        %v4694 = vunpack.c.l.b16 %v4342
        %v4695 = vunpack.c.h.b16 %v4342
        %v4696 = vunpack.c.l.b16 %v4343
        %v4697 = vunpack.c.h.b16 %v4343
        %v4698 = vunpack.c.l.b16 %v4344
        %v4699 = vunpack.c.h.b16 %v4344
        %v4700 = vunpack.c.l.b16 %v4345
        %v4701 = vunpack.c.h.b16 %v4345
        %v4702 = vunpack.c.l.b16 %v4346
        %v4703 = vunpack.c.h.b16 %v4346
        %v4704 = vunpack.c.l.b16 %v4347
        %v4705 = vunpack.c.h.b16 %v4347
        %v4706 = vunpack.c.l.b16 %v4348
        %v4707 = vunpack.c.h.b16 %v4348
        %v4708 = vunpack.c.l.b16 %v4349
        %v4709 = vunpack.c.h.b16 %v4349
        %v4710 = vunpack.c.l.b16 %v4350
        %v4711 = vunpack.c.h.b16 %v4350
        %v4712 = vunpack.c.l.b16 %v4351
        %v4713 = vunpack.c.h.b16 %v4351
        %v4714 = vunpack.c.l.b16 %v4352
        %v4715 = vunpack.c.h.b16 %v4352
        %v4716 = vunpack.c.l.b16 %v4353
        %v4717 = vunpack.c.h.b16 %v4353
        %v4718 = vunpack.c.l.b16 %v4354
        %v4719 = vunpack.c.h.b16 %v4354
        %v4720 = vunpack.c.l.b16 %v4355
        %v4721 = vunpack.c.h.b16 %v4355
        %v4722 = vunpack.c.l.b16 %v4356
        %v4723 = vunpack.c.h.b16 %v4356
        %v4724 = vunpack.c.l.b16 %v4357
        %v4725 = vunpack.c.h.b16 %v4357
        %v4726 = vunpack.c.l.b16 %v4358
        %v4727 = vunpack.c.h.b16 %v4358
        %v4728 = vunpack.c.l.b16 %v4359
        %v4729 = vunpack.c.h.b16 %v4359
        %v4730 = vunpack.c.l.b16 %v4360
        %v4731 = vunpack.c.h.b16 %v4360
        %v4732 = vunpack.c.l.b16 %v4361
        %v4733 = vunpack.c.h.b16 %v4361
        %v4734 = vunpack.c.l.b16 %v4362
        %v4735 = vunpack.c.h.b16 %v4362
        %v4736 = vunpack.c.l.b16 %v4363
        %v4737 = vunpack.c.h.b16 %v4363
        %v4738 = vunpack.c.l.b16 %v4364
        %v4739 = vunpack.c.h.b16 %v4364
        %v4740 = vunpack.c.l.b16 %v4365
        %v4741 = vunpack.c.h.b16 %v4365
        %v4742 = vunpack.c.l.b16 %v4366
        %v4743 = vunpack.c.h.b16 %v4366
        %v4744 = vunpack.c.l.b16 %v4367
        %v4745 = vunpack.c.h.b16 %v4367
        %v4746 = vunpack.c.l.b16 %v4368
        %v4747 = vunpack.c.h.b16 %v4368
        %v4748 = vunpack.c.l.b16 %v4369
        %v4749 = vunpack.c.h.b16 %v4369
        %v4750 = vunpack.c.l.b16 %v4370
        %v4751 = vunpack.c.h.b16 %v4370
        %v4752 = vunpack.c.l.b16 %v4371
        %v4753 = vunpack.c.h.b16 %v4371
        %v4754 = vunpack.c.l.b16 %v4372
        %v4755 = vunpack.c.h.b16 %v4372
        %v4756 = vunpack.c.l.b16 %v4373
        %v4757 = vunpack.c.h.b16 %v4373
        %v4758 = vunpack.c.l.b16 %v4374
        %v4759 = vunpack.c.h.b16 %v4374
        %v4760 = vunpack.c.l.b16 %v4375
        %v4761 = vunpack.c.h.b16 %v4375
        %v4762 = vunpack.c.l.b16 %v4376
        %v4763 = vunpack.c.h.b16 %v4376
        %v4764 = vunpack.c.l.b16 %v4377
        %v4765 = vunpack.c.h.b16 %v4377
        %v4766 = vunpack.c.l.b16 %v4378
        %v4767 = vunpack.c.h.b16 %v4378
        %v4768 = vunpack.c.l.b16 %v4379
        %v4769 = vunpack.c.h.b16 %v4379
        %v4770 = vunpack.c.l.b16 %v4380
        %v4771 = vunpack.c.h.b16 %v4380
        %v4772 = vunpack.c.l.b16 %v4381
        %v4773 = vunpack.c.h.b16 %v4381
        %v4774 = vunpack.c.l.b16 %v4382
        %v4775 = vunpack.c.h.b16 %v4382
        %v4776 = vunpack.c.l.b16 %v4383
        %v4777 = vunpack.c.h.b16 %v4383
        %v4778 = vunpack.c.l.b16 %v4384
        %v4779 = vunpack.c.h.b16 %v4384
        %v4780 = vunpack.c.l.b16 %v4385
        %v4781 = vunpack.c.h.b16 %v4385
        %v4782 = vunpack.c.l.b16 %v4386
        %v4783 = vunpack.c.h.b16 %v4386
        %v4784 = vunpack.c.l.b16 %v4387
        %v4785 = vunpack.c.h.b16 %v4387
        %v4786 = vunpack.c.l.b16 %v4388
        %v4787 = vunpack.c.h.b16 %v4388
        %v4788 = vunpack.c.l.b16 %v4389
        %v4789 = vunpack.c.h.b16 %v4389
        %v4790 = vunpack.c.l.b16 %v4390
        %v4791 = vunpack.c.h.b16 %v4390
        %v4792 = vunpack.c.l.b16 %v4391
        %v4793 = vunpack.c.h.b16 %v4391
        %v4794 = vunpack.c.l.b16 %v4392
        %v4795 = vunpack.c.h.b16 %v4392
        %v4796 = vunpack.c.l.b16 %v4393
        %v4797 = vunpack.c.h.b16 %v4393
        %v4798 = vunpack.c.l.b16 %v4394
        %v4799 = vunpack.c.h.b16 %v4394
        %v4800 = vunpack.c.l.b16 %v4395
        %v4801 = vunpack.c.h.b16 %v4395
        %v4802 = vpack.c.b16 %v4550, %v4546
        %v4803 = vpack.c.b16 %v4551, %v4547
        %v4804 = vpack.c.b16 %v4552, %v4548
        %v4805 = vpack.c.b16 %v4553, %v4549
        %v4806 = vpack.c.b16 %v4558, %v4554
        %v4807 = vpack.c.b16 %v4559, %v4555
        %v4808 = vpack.c.b16 %v4560, %v4556
        %v4809 = vpack.c.b16 %v4561, %v4557
        %v4810 = vpack.c.b16 %v4566, %v4562
        %v4811 = vpack.c.b16 %v4567, %v4563
        %v4812 = vpack.c.b16 %v4568, %v4564
        %v4813 = vpack.c.b16 %v4569, %v4565
        %v4814 = vpack.c.b16 %v4574, %v4570
        %v4815 = vpack.c.b16 %v4575, %v4571
        %v4816 = vpack.c.b16 %v4576, %v4572
        %v4817 = vpack.c.b16 %v4577, %v4573
        %v4818 = vpack.c.b16 %v4582, %v4578
        %v4819 = vpack.c.b16 %v4583, %v4579
        %v4820 = vpack.c.b16 %v4584, %v4580
        %v4821 = vpack.c.b16 %v4585, %v4581
        %v4822 = vpack.c.b16 %v4590, %v4586
        %v4823 = vpack.c.b16 %v4591, %v4587
        %v4824 = vpack.c.b16 %v4592, %v4588
        %v4825 = vpack.c.b16 %v4593, %v4589
        %v4826 = vpack.c.b16 %v4598, %v4594
        %v4827 = vpack.c.b16 %v4599, %v4595
        %v4828 = vpack.c.b16 %v4600, %v4596
        %v4829 = vpack.c.b16 %v4601, %v4597
        %v4830 = vpack.c.b16 %v4606, %v4602
        %v4831 = vpack.c.b16 %v4607, %v4603
        %v4832 = vpack.c.b16 %v4608, %v4604
        %v4833 = vpack.c.b16 %v4609, %v4605
        %v4834 = vpack.c.b16 %v4614, %v4610
        %v4835 = vpack.c.b16 %v4615, %v4611
        %v4836 = vpack.c.b16 %v4616, %v4612
        %v4837 = vpack.c.b16 %v4617, %v4613
        %v4838 = vpack.c.b16 %v4622, %v4618
        %v4839 = vpack.c.b16 %v4623, %v4619
        %v4840 = vpack.c.b16 %v4624, %v4620
        %v4841 = vpack.c.b16 %v4625, %v4621
        %v4842 = vpack.c.b16 %v4630, %v4626
        %v4843 = vpack.c.b16 %v4631, %v4627
        %v4844 = vpack.c.b16 %v4632, %v4628
        %v4845 = vpack.c.b16 %v4633, %v4629
        %v4846 = vpack.c.b16 %v4638, %v4634
        %v4847 = vpack.c.b16 %v4639, %v4635
        %v4848 = vpack.c.b16 %v4640, %v4636
        %v4849 = vpack.c.b16 %v4641, %v4637
        %v4850 = vpack.c.b16 %v4646, %v4642
        %v4851 = vpack.c.b16 %v4647, %v4643
        %v4852 = vpack.c.b16 %v4648, %v4644
        %v4853 = vpack.c.b16 %v4649, %v4645
        %v4854 = vpack.c.b16 %v4654, %v4650
        %v4855 = vpack.c.b16 %v4655, %v4651
        %v4856 = vpack.c.b16 %v4656, %v4652
        %v4857 = vpack.c.b16 %v4657, %v4653
        %v4858 = vpack.c.b16 %v4662, %v4658
        %v4859 = vpack.c.b16 %v4663, %v4659
        %v4860 = vpack.c.b16 %v4664, %v4660
        %v4861 = vpack.c.b16 %v4665, %v4661
        %v4862 = vpack.c.b16 %v4670, %v4666
        %v4863 = vpack.c.b16 %v4671, %v4667
        %v4864 = vpack.c.b16 %v4672, %v4668
        %v4865 = vpack.c.b16 %v4673, %v4669
        %v4866 = vpack.c.b16 %v4678, %v4674
        %v4867 = vpack.c.b16 %v4679, %v4675
        %v4868 = vpack.c.b16 %v4680, %v4676
        %v4869 = vpack.c.b16 %v4681, %v4677
        %v4870 = vpack.c.b16 %v4686, %v4682
        %v4871 = vpack.c.b16 %v4687, %v4683
        %v4872 = vpack.c.b16 %v4688, %v4684
        %v4873 = vpack.c.b16 %v4689, %v4685
        %v4874 = vpack.c.b16 %v4694, %v4690
        %v4875 = vpack.c.b16 %v4695, %v4691
        %v4876 = vpack.c.b16 %v4696, %v4692
        %v4877 = vpack.c.b16 %v4697, %v4693
        %v4878 = vpack.c.b16 %v4702, %v4698
        %v4879 = vpack.c.b16 %v4703, %v4699
        %v4880 = vpack.c.b16 %v4704, %v4700
        %v4881 = vpack.c.b16 %v4705, %v4701
        %v4882 = vpack.c.b16 %v4710, %v4706
        %v4883 = vpack.c.b16 %v4711, %v4707
        %v4884 = vpack.c.b16 %v4712, %v4708
        %v4885 = vpack.c.b16 %v4713, %v4709
        %v4886 = vpack.c.b16 %v4718, %v4714
        %v4887 = vpack.c.b16 %v4719, %v4715
        %v4888 = vpack.c.b16 %v4720, %v4716
        %v4889 = vpack.c.b16 %v4721, %v4717
        %v4890 = vpack.c.b16 %v4726, %v4722
        %v4891 = vpack.c.b16 %v4727, %v4723
        %v4892 = vpack.c.b16 %v4728, %v4724
        %v4893 = vpack.c.b16 %v4729, %v4725
        %v4894 = vpack.c.b16 %v4734, %v4730
        %v4895 = vpack.c.b16 %v4735, %v4731
        %v4896 = vpack.c.b16 %v4736, %v4732
        %v4897 = vpack.c.b16 %v4737, %v4733
        %v4898 = vpack.c.b16 %v4742, %v4738
        %v4899 = vpack.c.b16 %v4743, %v4739
        %v4900 = vpack.c.b16 %v4744, %v4740
        %v4901 = vpack.c.b16 %v4745, %v4741
        %v4902 = vpack.c.b16 %v4750, %v4746
        %v4903 = vpack.c.b16 %v4751, %v4747
        %v4904 = vpack.c.b16 %v4752, %v4748
        %v4905 = vpack.c.b16 %v4753, %v4749
        %v4906 = vpack.c.b16 %v4758, %v4754
        %v4907 = vpack.c.b16 %v4759, %v4755
        %v4908 = vpack.c.b16 %v4760, %v4756
        %v4909 = vpack.c.b16 %v4761, %v4757
        %v4910 = vpack.c.b16 %v4766, %v4762
        %v4911 = vpack.c.b16 %v4767, %v4763
        %v4912 = vpack.c.b16 %v4768, %v4764
        %v4913 = vpack.c.b16 %v4769, %v4765
        %v4914 = vpack.c.b16 %v4774, %v4770
        %v4915 = vpack.c.b16 %v4775, %v4771
        %v4916 = vpack.c.b16 %v4776, %v4772
        %v4917 = vpack.c.b16 %v4777, %v4773
        %v4918 = vpack.c.b16 %v4782, %v4778
        %v4919 = vpack.c.b16 %v4783, %v4779
        %v4920 = vpack.c.b16 %v4784, %v4780
        %v4921 = vpack.c.b16 %v4785, %v4781
        %v4922 = vpack.c.b16 %v4790, %v4786
        %v4923 = vpack.c.b16 %v4791, %v4787
        %v4924 = vpack.c.b16 %v4792, %v4788
        %v4925 = vpack.c.b16 %v4793, %v4789
        %v4926 = vpack.c.b16 %v4798, %v4794
        %v4927 = vpack.c.b16 %v4799, %v4795
        %v4928 = vpack.c.b16 %v4800, %v4796
        %v4929 = vpack.c.b16 %v4801, %v4797
        %5058 = vmatprep.subr.bf16.mxu0 %v4831
        %5059 = vmatpush1.bf16.msra.mxu0 %v4830
        %5060 = vmatprep.subr.bf16.mxu0 %v4827
        %5061 = vmatpush1.bf16.msra.mxu0 %v4826
        %5062 = vmatprep.subr.bf16.mxu0 %v4823
        %5063 = vmatpush1.bf16.msra.mxu0 %v4822
        %5064 = vmatprep.subr.bf16.mxu0 %v4819
        %5065 = vmatpush1.bf16.msra.mxu0 %v4818
        %5066 = vmatprep.subr.bf16.mxu0 %v4815
        %5067 = vmatpush1.bf16.msra.mxu0 %v4814
        %5068 = vmatprep.subr.bf16.mxu0 %v4811
        %5069 = vmatpush1.bf16.msra.mxu0 %v4810
        %5070 = vmatprep.subr.bf16.mxu0 %v4807
        %5071 = vmatpush1.bf16.msra.mxu0 %v4806
        %5072 = vmatprep.subr.bf16.mxu0 %v4803
        %5073 = vmatpush1.bf16.msra.mxu0 %v4802
        %5074 = vmatprep.subr.bf16.mxu0 %v4863
        %5075 = vmatpush2.bf16.msra.mxu0 %v4862
        %5076 = vmatprep.subr.bf16.mxu0 %v4859
        %5077 = vmatpush2.bf16.msra.mxu0 %v4858
        %5078 = vmatprep.subr.bf16.mxu0 %v4855
        %5079 = vmatpush2.bf16.msra.mxu0 %v4854
        %5080 = vmatprep.subr.bf16.mxu0 %v4851
        %5081 = vmatpush2.bf16.msra.mxu0 %v4850
        %5082 = vmatprep.subr.bf16.mxu0 %v4847
        %5083 = vmatpush2.bf16.msra.mxu0 %v4846
        %5084 = vmatprep.subr.bf16.mxu0 %v4843
        %5085 = vmatpush2.bf16.msra.mxu0 %v4842
        %5086 = vmatprep.subr.bf16.mxu0 %v4839
        %5087 = vmatpush2.bf16.msra.mxu0 %v4838
        %5088 = vmatprep.subr.bf16.mxu0 %v4835
        %5089 = vmatpush2.bf16.msra.mxu0 %v4834
        %5090 = vmatprep.mubr.bf16.mxu0 %v4193
        %5091 = vmatmul.mubr.bf16.gmra.mxu0 %v4192
        %v5092 = vpop.f32.mrf.mxu0
        %v5093 = vadd.f32 %v4401, %v5092
        %v5094 = vpop.f32.mrf.mxu0
        %v5095 = vadd.f32 %v4405, %v5094
        %v5096 = vpop.f32.mrf.mxu0
        %v5097 = vadd.f32 %v4401, %v5096
        %v5098 = vpop.f32.mrf.mxu0
        %v5099 = vadd.f32 %v4405, %v5098
        %5100 = vmatprep.mubr.bf16.mxu0 %v4197
        %5101 = vmatmul.mubr.bf16.gmra.mxu0 %v4196
        %v5102 = vpop.f32.mrf.mxu0
        %v5103 = vadd.f32 %v4401, %v5102
        %v5104 = vpop.f32.mrf.mxu0
        %v5105 = vadd.f32 %v4405, %v5104
        %v5106 = vpop.f32.mrf.mxu0
        %v5107 = vadd.f32 %v4401, %v5106
        %v5108 = vpop.f32.mrf.mxu0
        %v5109 = vadd.f32 %v4405, %v5108
        %5110 = vmatprep.mubr.bf16.mxu0 %v4201
        %5111 = vmatmul.mubr.bf16.gmra.mxu0 %v4200
        %v5112 = vpop.f32.mrf.mxu0
        %v5113 = vadd.f32 %v4401, %v5112
        %v5114 = vpop.f32.mrf.mxu0
        %v5115 = vadd.f32 %v4405, %v5114
        %v5116 = vpop.f32.mrf.mxu0
        %v5117 = vadd.f32 %v4401, %v5116
        %v5118 = vpop.f32.mrf.mxu0
        %v5119 = vadd.f32 %v4405, %v5118
        %5120 = vmatprep.mubr.bf16.mxu0 %v4205
        %5121 = vmatmul.mubr.bf16.gmra.mxu0 %v4204
        %v5122 = vpop.f32.mrf.mxu0
        %v5123 = vadd.f32 %v4401, %v5122
        %v5124 = vpop.f32.mrf.mxu0
        %v5125 = vadd.f32 %v4405, %v5124
        %v5126 = vpop.f32.mrf.mxu0
        %v5127 = vadd.f32 %v4401, %v5126
        %v5128 = vpop.f32.mrf.mxu0
        %v5129 = vadd.f32 %v4405, %v5128
        %5130 = vmatprep.mubr.bf16.mxu0 %v4209
        %5131 = vmatmul.mubr.bf16.gmra.mxu0 %v4208
        %v5132 = vpop.f32.mrf.mxu0
        %v5133 = vadd.f32 %v4401, %v5132
        %v5134 = vpop.f32.mrf.mxu0
        %v5135 = vadd.f32 %v4405, %v5134
        %v5136 = vpop.f32.mrf.mxu0
        %v5137 = vadd.f32 %v4401, %v5136
        %v5138 = vpop.f32.mrf.mxu0
        %v5139 = vadd.f32 %v4405, %v5138
        %5140 = vmatprep.mubr.bf16.mxu0 %v4213
        %5141 = vmatmul.mubr.bf16.gmra.mxu0 %v4212
        %v5142 = vpop.f32.mrf.mxu0
        %v5143 = vadd.f32 %v4401, %v5142
        %v5144 = vpop.f32.mrf.mxu0
        %v5145 = vadd.f32 %v4405, %v5144
        %v5146 = vpop.f32.mrf.mxu0
        %v5147 = vadd.f32 %v4401, %v5146
        %v5148 = vpop.f32.mrf.mxu0
        %v5149 = vadd.f32 %v4405, %v5148
        %5150 = vmatprep.mubr.bf16.mxu0 %v4217
        %5151 = vmatmul.mubr.bf16.gmra.mxu0 %v4216
        %v5152 = vpop.f32.mrf.mxu0
        %v5153 = vadd.f32 %v4401, %v5152
        %v5154 = vpop.f32.mrf.mxu0
        %v5155 = vadd.f32 %v4405, %v5154
        %v5156 = vpop.f32.mrf.mxu0
        %v5157 = vadd.f32 %v4401, %v5156
        %v5158 = vpop.f32.mrf.mxu0
        %v5159 = vadd.f32 %v4405, %v5158
        %5160 = vmatprep.mubr.bf16.mxu0 %v4221
        %5161 = vmatmul.mubr.bf16.gmra.mxu0 %v4220
        %v5162 = vpop.f32.mrf.mxu0
        %v5163 = vadd.f32 %v4401, %v5162
        %v5164 = vpop.f32.mrf.mxu0
        %v5165 = vadd.f32 %v4405, %v5164
        %v5166 = vpop.f32.mrf.mxu0
        %v5167 = vadd.f32 %v4401, %v5166
        %v5168 = vpop.f32.mrf.mxu0
        %v5169 = vadd.f32 %v4405, %v5168
        %5170 = vmatprep.mubr.bf16.mxu0 %v4225
        %5171 = vmatmul.mubr.bf16.gmra.mxu0 %v4224
        %v5172 = vpop.f32.mrf.mxu0
        %v5173 = vadd.f32 %v4401, %v5172
        %v5174 = vpop.f32.mrf.mxu0
        %v5175 = vadd.f32 %v4405, %v5174
        %v5176 = vpop.f32.mrf.mxu0
        %v5177 = vadd.f32 %v4401, %v5176
        %v5178 = vpop.f32.mrf.mxu0
        %v5179 = vadd.f32 %v4405, %v5178
        %5180 = vmatprep.mubr.bf16.mxu0 %v4229
        %5181 = vmatmul.mubr.bf16.gmra.mxu0 %v4228
        %v5182 = vpop.f32.mrf.mxu0
        %v5183 = vadd.f32 %v4401, %v5182
        %v5184 = vpop.f32.mrf.mxu0
        %v5185 = vadd.f32 %v4405, %v5184
        %v5186 = vpop.f32.mrf.mxu0
        %v5187 = vadd.f32 %v4401, %v5186
        %v5188 = vpop.f32.mrf.mxu0
        %v5189 = vadd.f32 %v4405, %v5188
        %5190 = vmatprep.mubr.bf16.mxu0 %v4233
        %5191 = vmatmul.mubr.bf16.gmra.mxu0 %v4232
        %v5192 = vpop.f32.mrf.mxu0
        %v5193 = vadd.f32 %v4401, %v5192
        %v5194 = vpop.f32.mrf.mxu0
        %v5195 = vadd.f32 %v4405, %v5194
        %v5196 = vpop.f32.mrf.mxu0
        %v5197 = vadd.f32 %v4401, %v5196
        %v5198 = vpop.f32.mrf.mxu0
        %v5199 = vadd.f32 %v4405, %v5198
        %5200 = vmatprep.mubr.bf16.mxu0 %v4237
        %5201 = vmatmul.mubr.bf16.gmra.mxu0 %v4236
        %v5202 = vpop.f32.mrf.mxu0
        %v5203 = vadd.f32 %v4401, %v5202
        %v5204 = vpop.f32.mrf.mxu0
        %v5205 = vadd.f32 %v4405, %v5204
        %v5206 = vpop.f32.mrf.mxu0
        %v5207 = vadd.f32 %v4401, %v5206
        %v5208 = vpop.f32.mrf.mxu0
        %v5209 = vadd.f32 %v4405, %v5208
        %5210 = vmatprep.mubr.bf16.mxu0 %v4241
        %5211 = vmatmul.mubr.bf16.gmra.mxu0 %v4240
        %v5212 = vpop.f32.mrf.mxu0
        %v5213 = vadd.f32 %v4401, %v5212
        %v5214 = vpop.f32.mrf.mxu0
        %v5215 = vadd.f32 %v4405, %v5214
        %v5216 = vpop.f32.mrf.mxu0
        %v5217 = vadd.f32 %v4401, %v5216
        %v5218 = vpop.f32.mrf.mxu0
        %v5219 = vadd.f32 %v4405, %v5218
        %5220 = vmatprep.mubr.bf16.mxu0 %v4245
        %5221 = vmatmul.mubr.bf16.gmra.mxu0 %v4244
        %v5222 = vpop.f32.mrf.mxu0
        %v5223 = vadd.f32 %v4401, %v5222
        %v5224 = vpop.f32.mrf.mxu0
        %v5225 = vadd.f32 %v4405, %v5224
        %v5226 = vpop.f32.mrf.mxu0
        %v5227 = vadd.f32 %v4401, %v5226
        %v5228 = vpop.f32.mrf.mxu0
        %v5229 = vadd.f32 %v4405, %v5228
        %5230 = vmatprep.mubr.bf16.mxu0 %v4249
        %5231 = vmatmul.mubr.bf16.gmra.mxu0 %v4248
        %v5232 = vpop.f32.mrf.mxu0
        %v5233 = vadd.f32 %v4401, %v5232
        %v5234 = vpop.f32.mrf.mxu0
        %v5235 = vadd.f32 %v4405, %v5234
        %v5236 = vpop.f32.mrf.mxu0
        %v5237 = vadd.f32 %v4401, %v5236
        %v5238 = vpop.f32.mrf.mxu0
        %v5239 = vadd.f32 %v4405, %v5238
        %5240 = vmatprep.mubr.bf16.mxu0 %v4253
        %5241 = vmatmul.mubr.bf16.gmra.mxu0 %v4252
        %v5242 = vpop.f32.mrf.mxu0
        %v5243 = vadd.f32 %v4401, %v5242
        %v5244 = vpop.f32.mrf.mxu0
        %v5245 = vadd.f32 %v4405, %v5244
        %v5246 = vpop.f32.mrf.mxu0
        %v5247 = vadd.f32 %v4401, %v5246
        %v5248 = vpop.f32.mrf.mxu0
        %v5249 = vadd.f32 %v4405, %v5248
        %5250 = vmatprep.mubr.bf16.mxu0 %v4257
        %5251 = vmatmul.mubr.bf16.gmra.mxu0 %v4256
        %v5252 = vpop.f32.mrf.mxu0
        %v5253 = vadd.f32 %v4401, %v5252
        %v5254 = vpop.f32.mrf.mxu0
        %v5255 = vadd.f32 %v4405, %v5254
        %v5256 = vpop.f32.mrf.mxu0
        %v5257 = vadd.f32 %v4401, %v5256
        %v5258 = vpop.f32.mrf.mxu0
        %v5259 = vadd.f32 %v4405, %v5258
        %5260 = vmatprep.mubr.bf16.mxu0 %v4261
        %5261 = vmatmul.mubr.bf16.gmra.mxu0 %v4260
        %v5262 = vpop.f32.mrf.mxu0
        %v5263 = vadd.f32 %v4401, %v5262
        %v5264 = vpop.f32.mrf.mxu0
        %v5265 = vadd.f32 %v4405, %v5264
        %v5266 = vpop.f32.mrf.mxu0
        %v5267 = vadd.f32 %v4401, %v5266
        %v5268 = vpop.f32.mrf.mxu0
        %v5269 = vadd.f32 %v4405, %v5268
        %5270 = vmatprep.mubr.bf16.mxu0 %v4265
        %5271 = vmatmul.mubr.bf16.gmra.mxu0 %v4264
        %v5272 = vpop.f32.mrf.mxu0
        %v5273 = vadd.f32 %v4401, %v5272
        %v5274 = vpop.f32.mrf.mxu0
        %v5275 = vadd.f32 %v4405, %v5274
        %v5276 = vpop.f32.mrf.mxu0
        %v5277 = vadd.f32 %v4401, %v5276
        %v5278 = vpop.f32.mrf.mxu0
        %v5279 = vadd.f32 %v4405, %v5278
        %5280 = vdwg.mxu0
        %5281 = vmatprep.subr.bf16.mxu0 %v4895
        %5282 = vmatpush1.bf16.msra.mxu0 %v4894
        %5283 = vmatprep.subr.bf16.mxu0 %v4891
        %5284 = vmatpush1.bf16.msra.mxu0 %v4890
        %5285 = vmatprep.subr.bf16.mxu0 %v4887
        %5286 = vmatpush1.bf16.msra.mxu0 %v4886
        %5287 = vmatprep.subr.bf16.mxu0 %v4883
        %5288 = vmatpush1.bf16.msra.mxu0 %v4882
        %5289 = vmatprep.subr.bf16.mxu0 %v4879
        %5290 = vmatpush1.bf16.msra.mxu0 %v4878
        %5291 = vmatprep.subr.bf16.mxu0 %v4875
        %5292 = vmatpush1.bf16.msra.mxu0 %v4874
        %5293 = vmatprep.subr.bf16.mxu0 %v4871
        %5294 = vmatpush1.bf16.msra.mxu0 %v4870
        %5295 = vmatprep.subr.bf16.mxu0 %v4867
        %5296 = vmatpush1.bf16.msra.mxu0 %v4866
        %5297 = vmatprep.subr.bf16.mxu0 %v4927
        %5298 = vmatpush2.bf16.msra.mxu0 %v4926
        %5299 = vmatprep.subr.bf16.mxu0 %v4923
        %5300 = vmatpush2.bf16.msra.mxu0 %v4922
        %5301 = vmatprep.subr.bf16.mxu0 %v4919
        %5302 = vmatpush2.bf16.msra.mxu0 %v4918
        %5303 = vmatprep.subr.bf16.mxu0 %v4915
        %5304 = vmatpush2.bf16.msra.mxu0 %v4914
        %5305 = vmatprep.subr.bf16.mxu0 %v4911
        %5306 = vmatpush2.bf16.msra.mxu0 %v4910
        %5307 = vmatprep.subr.bf16.mxu0 %v4907
        %5308 = vmatpush2.bf16.msra.mxu0 %v4906
        %5309 = vmatprep.subr.bf16.mxu0 %v4903
        %5310 = vmatpush2.bf16.msra.mxu0 %v4902
        %5311 = vmatprep.subr.bf16.mxu0 %v4899
        %5312 = vmatpush2.bf16.msra.mxu0 %v4898
        %5313 = vmatprep.mubr.bf16.mxu0 %v4195
        %5314 = vmatmul.mubr.bf16.gmra.mxu0 %v4194
        %v5315 = vpop.f32.mrf.mxu0
        %v5316 = vadd.f32 %v5093, %v5315
        %v5317 = vpop.f32.mrf.mxu0
        %v5318 = vadd.f32 %v5095, %v5317
        %v5319 = vpop.f32.mrf.mxu0
        %v5320 = vadd.f32 %v5097, %v5319
        %v5321 = vpop.f32.mrf.mxu0
        %v5322 = vadd.f32 %v5099, %v5321
        %5323 = vmatprep.mubr.bf16.mxu0 %v4199
        %5324 = vmatmul.mubr.bf16.gmra.mxu0 %v4198
        %v5325 = vpop.f32.mrf.mxu0
        %v5326 = vadd.f32 %v5103, %v5325
        %v5327 = vpop.f32.mrf.mxu0
        %v5328 = vadd.f32 %v5105, %v5327
        %v5329 = vpop.f32.mrf.mxu0
        %v5330 = vadd.f32 %v5107, %v5329
        %v5331 = vpop.f32.mrf.mxu0
        %v5332 = vadd.f32 %v5109, %v5331
        %5333 = vmatprep.mubr.bf16.mxu0 %v4203
        %5334 = vmatmul.mubr.bf16.gmra.mxu0 %v4202
        %v5335 = vpop.f32.mrf.mxu0
        %v5336 = vadd.f32 %v5113, %v5335
        %v5337 = vpop.f32.mrf.mxu0
        %v5338 = vadd.f32 %v5115, %v5337
        %v5339 = vpop.f32.mrf.mxu0
        %v5340 = vadd.f32 %v5117, %v5339
        %v5341 = vpop.f32.mrf.mxu0
        %v5342 = vadd.f32 %v5119, %v5341
        %5343 = vmatprep.mubr.bf16.mxu0 %v4207
        %5344 = vmatmul.mubr.bf16.gmra.mxu0 %v4206
        %v5345 = vpop.f32.mrf.mxu0
        %v5346 = vadd.f32 %v5123, %v5345
        %v5347 = vpop.f32.mrf.mxu0
        %v5348 = vadd.f32 %v5125, %v5347
        %v5349 = vpop.f32.mrf.mxu0
        %v5350 = vadd.f32 %v5127, %v5349
        %v5351 = vpop.f32.mrf.mxu0
        %v5352 = vadd.f32 %v5129, %v5351
        %5353 = vmatprep.mubr.bf16.mxu0 %v4211
        %5354 = vmatmul.mubr.bf16.gmra.mxu0 %v4210
        %v5355 = vpop.f32.mrf.mxu0
        %v5356 = vadd.f32 %v5133, %v5355
        %v5357 = vpop.f32.mrf.mxu0
        %v5358 = vadd.f32 %v5135, %v5357
        %v5359 = vpop.f32.mrf.mxu0
        %v5360 = vadd.f32 %v5137, %v5359
        %v5361 = vpop.f32.mrf.mxu0
        %v5362 = vadd.f32 %v5139, %v5361
        %5363 = vmatprep.mubr.bf16.mxu0 %v4215
        %5364 = vmatmul.mubr.bf16.gmra.mxu0 %v4214
        %v5365 = vpop.f32.mrf.mxu0
        %v5366 = vadd.f32 %v5143, %v5365
        %v5367 = vpop.f32.mrf.mxu0
        %v5368 = vadd.f32 %v5145, %v5367
        %v5369 = vpop.f32.mrf.mxu0
        %v5370 = vadd.f32 %v5147, %v5369
        %v5371 = vpop.f32.mrf.mxu0
        %v5372 = vadd.f32 %v5149, %v5371
        %5373 = vmatprep.mubr.bf16.mxu0 %v4219
        %5374 = vmatmul.mubr.bf16.gmra.mxu0 %v4218
        %v5375 = vpop.f32.mrf.mxu0
        %v5376 = vadd.f32 %v5153, %v5375
        %v5377 = vpop.f32.mrf.mxu0
        %v5378 = vadd.f32 %v5155, %v5377
        %v5379 = vpop.f32.mrf.mxu0
        %v5380 = vadd.f32 %v5157, %v5379
        %v5381 = vpop.f32.mrf.mxu0
        %v5382 = vadd.f32 %v5159, %v5381
        %5383 = vmatprep.mubr.bf16.mxu0 %v4223
        %5384 = vmatmul.mubr.bf16.gmra.mxu0 %v4222
        %v5385 = vpop.f32.mrf.mxu0
        %v5386 = vadd.f32 %v5163, %v5385
        %v5387 = vpop.f32.mrf.mxu0
        %v5388 = vadd.f32 %v5165, %v5387
        %v5389 = vpop.f32.mrf.mxu0
        %v5390 = vadd.f32 %v5167, %v5389
        %v5391 = vpop.f32.mrf.mxu0
        %v5392 = vadd.f32 %v5169, %v5391
        %5393 = vmatprep.mubr.bf16.mxu0 %v4227
        %5394 = vmatmul.mubr.bf16.gmra.mxu0 %v4226
        %v5395 = vpop.f32.mrf.mxu0
        %v5396 = vadd.f32 %v5173, %v5395
        %v5397 = vpop.f32.mrf.mxu0
        %v5398 = vadd.f32 %v5175, %v5397
        %v5399 = vpop.f32.mrf.mxu0
        %v5400 = vadd.f32 %v5177, %v5399
        %v5401 = vpop.f32.mrf.mxu0
        %v5402 = vadd.f32 %v5179, %v5401
        %5403 = vmatprep.mubr.bf16.mxu0 %v4231
        %5404 = vmatmul.mubr.bf16.gmra.mxu0 %v4230
        %v5405 = vpop.f32.mrf.mxu0
        %v5406 = vadd.f32 %v5183, %v5405
        %v5407 = vpop.f32.mrf.mxu0
        %v5408 = vadd.f32 %v5185, %v5407
        %v5409 = vpop.f32.mrf.mxu0
        %v5410 = vadd.f32 %v5187, %v5409
        %v5411 = vpop.f32.mrf.mxu0
        %v5412 = vadd.f32 %v5189, %v5411
        %5413 = vmatprep.mubr.bf16.mxu0 %v4235
        %5414 = vmatmul.mubr.bf16.gmra.mxu0 %v4234
        %v5415 = vpop.f32.mrf.mxu0
        %v5416 = vadd.f32 %v5193, %v5415
        %v5417 = vpop.f32.mrf.mxu0
        %v5418 = vadd.f32 %v5195, %v5417
        %v5419 = vpop.f32.mrf.mxu0
        %v5420 = vadd.f32 %v5197, %v5419
        %v5421 = vpop.f32.mrf.mxu0
        %v5422 = vadd.f32 %v5199, %v5421
        %5423 = vmatprep.mubr.bf16.mxu0 %v4239
        %5424 = vmatmul.mubr.bf16.gmra.mxu0 %v4238
        %v5425 = vpop.f32.mrf.mxu0
        %v5426 = vadd.f32 %v5203, %v5425
        %v5427 = vpop.f32.mrf.mxu0
        %v5428 = vadd.f32 %v5205, %v5427
        %v5429 = vpop.f32.mrf.mxu0
        %v5430 = vadd.f32 %v5207, %v5429
        %v5431 = vpop.f32.mrf.mxu0
        %v5432 = vadd.f32 %v5209, %v5431
        %5433 = vmatprep.mubr.bf16.mxu0 %v4243
        %5434 = vmatmul.mubr.bf16.gmra.mxu0 %v4242
        %v5435 = vpop.f32.mrf.mxu0
        %v5436 = vadd.f32 %v5213, %v5435
        %v5437 = vpop.f32.mrf.mxu0
        %v5438 = vadd.f32 %v5215, %v5437
        %v5439 = vpop.f32.mrf.mxu0
        %v5440 = vadd.f32 %v5217, %v5439
        %v5441 = vpop.f32.mrf.mxu0
        %v5442 = vadd.f32 %v5219, %v5441
        %5443 = vmatprep.mubr.bf16.mxu0 %v4247
        %5444 = vmatmul.mubr.bf16.gmra.mxu0 %v4246
        %v5445 = vpop.f32.mrf.mxu0
        %v5446 = vadd.f32 %v5223, %v5445
        %v5447 = vpop.f32.mrf.mxu0
        %v5448 = vadd.f32 %v5225, %v5447
        %v5449 = vpop.f32.mrf.mxu0
        %v5450 = vadd.f32 %v5227, %v5449
        %v5451 = vpop.f32.mrf.mxu0
        %v5452 = vadd.f32 %v5229, %v5451
        %5453 = vmatprep.mubr.bf16.mxu0 %v4251
        %5454 = vmatmul.mubr.bf16.gmra.mxu0 %v4250
        %v5455 = vpop.f32.mrf.mxu0
        %v5456 = vadd.f32 %v5233, %v5455
        %v5457 = vpop.f32.mrf.mxu0
        %v5458 = vadd.f32 %v5235, %v5457
        %v5459 = vpop.f32.mrf.mxu0
        %v5460 = vadd.f32 %v5237, %v5459
        %v5461 = vpop.f32.mrf.mxu0
        %v5462 = vadd.f32 %v5239, %v5461
        %5463 = vmatprep.mubr.bf16.mxu0 %v4255
        %5464 = vmatmul.mubr.bf16.gmra.mxu0 %v4254
        %v5465 = vpop.f32.mrf.mxu0
        %v5466 = vadd.f32 %v5243, %v5465
        %v5467 = vpop.f32.mrf.mxu0
        %v5468 = vadd.f32 %v5245, %v5467
        %v5469 = vpop.f32.mrf.mxu0
        %v5470 = vadd.f32 %v5247, %v5469
        %v5471 = vpop.f32.mrf.mxu0
        %v5472 = vadd.f32 %v5249, %v5471
        %5473 = vmatprep.mubr.bf16.mxu0 %v4259
        %5474 = vmatmul.mubr.bf16.gmra.mxu0 %v4258
        %v5475 = vpop.f32.mrf.mxu0
        %v5476 = vadd.f32 %v5253, %v5475
        %v5477 = vpop.f32.mrf.mxu0
        %v5478 = vadd.f32 %v5255, %v5477
        %v5479 = vpop.f32.mrf.mxu0
        %v5480 = vadd.f32 %v5257, %v5479
        %v5481 = vpop.f32.mrf.mxu0
        %v5482 = vadd.f32 %v5259, %v5481
        %5483 = vmatprep.mubr.bf16.mxu0 %v4263
        %5484 = vmatmul.mubr.bf16.gmra.mxu0 %v4262
        %v5485 = vpop.f32.mrf.mxu0
        %v5486 = vadd.f32 %v5263, %v5485
        %v5487 = vpop.f32.mrf.mxu0
        %v5488 = vadd.f32 %v5265, %v5487
        %v5489 = vpop.f32.mrf.mxu0
        %v5490 = vadd.f32 %v5267, %v5489
        %v5491 = vpop.f32.mrf.mxu0
        %v5492 = vadd.f32 %v5269, %v5491
        %5493 = vmatprep.mubr.bf16.mxu0 %v4267
        %5494 = vmatmul.mubr.bf16.gmra.mxu0 %v4266
        %v5495 = vpop.f32.mrf.mxu0
        %v5496 = vadd.f32 %v5273, %v5495
        %v5497 = vpop.f32.mrf.mxu0
        %v5498 = vadd.f32 %v5275, %v5497
        %v5499 = vpop.f32.mrf.mxu0
        %v5500 = vadd.f32 %v5277, %v5499
        %v5501 = vpop.f32.mrf.mxu0
        %v5502 = vadd.f32 %v5279, %v5501
        %5503 = vdwg.mxu0
        %5504 = vmatprep.subr.bf16.mxu0 %v4833
        %5505 = vmatpush1.bf16.msra.mxu0 %v4832
        %5506 = vmatprep.subr.bf16.mxu0 %v4829
        %5507 = vmatpush1.bf16.msra.mxu0 %v4828
        %5508 = vmatprep.subr.bf16.mxu0 %v4825
        %5509 = vmatpush1.bf16.msra.mxu0 %v4824
        %5510 = vmatprep.subr.bf16.mxu0 %v4821
        %5511 = vmatpush1.bf16.msra.mxu0 %v4820
        %5512 = vmatprep.subr.bf16.mxu0 %v4817
        %5513 = vmatpush1.bf16.msra.mxu0 %v4816
        %5514 = vmatprep.subr.bf16.mxu0 %v4813
        %5515 = vmatpush1.bf16.msra.mxu0 %v4812
        %5516 = vmatprep.subr.bf16.mxu0 %v4809
        %5517 = vmatpush1.bf16.msra.mxu0 %v4808
        %5518 = vmatprep.subr.bf16.mxu0 %v4805
        %5519 = vmatpush1.bf16.msra.mxu0 %v4804
        %5520 = vmatprep.subr.bf16.mxu0 %v4865
        %5521 = vmatpush2.bf16.msra.mxu0 %v4864
        %5522 = vmatprep.subr.bf16.mxu0 %v4861
        %5523 = vmatpush2.bf16.msra.mxu0 %v4860
        %5524 = vmatprep.subr.bf16.mxu0 %v4857
        %5525 = vmatpush2.bf16.msra.mxu0 %v4856
        %5526 = vmatprep.subr.bf16.mxu0 %v4853
        %5527 = vmatpush2.bf16.msra.mxu0 %v4852
        %5528 = vmatprep.subr.bf16.mxu0 %v4849
        %5529 = vmatpush2.bf16.msra.mxu0 %v4848
        %5530 = vmatprep.subr.bf16.mxu0 %v4845
        %5531 = vmatpush2.bf16.msra.mxu0 %v4844
        %5532 = vmatprep.subr.bf16.mxu0 %v4841
        %5533 = vmatpush2.bf16.msra.mxu0 %v4840
        %5534 = vmatprep.subr.bf16.mxu0 %v4837
        %5535 = vmatpush2.bf16.msra.mxu0 %v4836
        %5536 = vmatprep.mubr.bf16.mxu0 %v4193
        %5537 = vmatmul.mubr.bf16.gmra.mxu0 %v4192
        %v5538 = vpop.f32.mrf.mxu0
        %v5539 = vadd.f32 %v4409, %v5538
        %v5540 = vpop.f32.mrf.mxu0
        %v5541 = vadd.f32 %v4413, %v5540
        %v5542 = vpop.f32.mrf.mxu0
        %v5543 = vadd.f32 %v4409, %v5542
        %v5544 = vpop.f32.mrf.mxu0
        %v5545 = vadd.f32 %v4413, %v5544
        %5546 = vmatprep.mubr.bf16.mxu0 %v4197
        %5547 = vmatmul.mubr.bf16.gmra.mxu0 %v4196
        %v5548 = vpop.f32.mrf.mxu0
        %v5549 = vadd.f32 %v4409, %v5548
        %v5550 = vpop.f32.mrf.mxu0
        %v5551 = vadd.f32 %v4413, %v5550
        %v5552 = vpop.f32.mrf.mxu0
        %v5553 = vadd.f32 %v4409, %v5552
        %v5554 = vpop.f32.mrf.mxu0
        %v5555 = vadd.f32 %v4413, %v5554
        %5556 = vmatprep.mubr.bf16.mxu0 %v4201
        %5557 = vmatmul.mubr.bf16.gmra.mxu0 %v4200
        %v5558 = vpop.f32.mrf.mxu0
        %v5559 = vadd.f32 %v4409, %v5558
        %v5560 = vpop.f32.mrf.mxu0
        %v5561 = vadd.f32 %v4413, %v5560
        %v5562 = vpop.f32.mrf.mxu0
        %v5563 = vadd.f32 %v4409, %v5562
        %v5564 = vpop.f32.mrf.mxu0
        %v5565 = vadd.f32 %v4413, %v5564
        %5566 = vmatprep.mubr.bf16.mxu0 %v4205
        %5567 = vmatmul.mubr.bf16.gmra.mxu0 %v4204
        %v5568 = vpop.f32.mrf.mxu0
        %v5569 = vadd.f32 %v4409, %v5568
        %v5570 = vpop.f32.mrf.mxu0
        %v5571 = vadd.f32 %v4413, %v5570
        %v5572 = vpop.f32.mrf.mxu0
        %v5573 = vadd.f32 %v4409, %v5572
        %v5574 = vpop.f32.mrf.mxu0
        %v5575 = vadd.f32 %v4413, %v5574
        %5576 = vmatprep.mubr.bf16.mxu0 %v4209
        %5577 = vmatmul.mubr.bf16.gmra.mxu0 %v4208
        %v5578 = vpop.f32.mrf.mxu0
        %v5579 = vadd.f32 %v4409, %v5578
        %v5580 = vpop.f32.mrf.mxu0
        %v5581 = vadd.f32 %v4413, %v5580
        %v5582 = vpop.f32.mrf.mxu0
        %v5583 = vadd.f32 %v4409, %v5582
        %v5584 = vpop.f32.mrf.mxu0
        %v5585 = vadd.f32 %v4413, %v5584
        %5586 = vmatprep.mubr.bf16.mxu0 %v4213
        %5587 = vmatmul.mubr.bf16.gmra.mxu0 %v4212
        %v5588 = vpop.f32.mrf.mxu0
        %v5589 = vadd.f32 %v4409, %v5588
        %v5590 = vpop.f32.mrf.mxu0
        %v5591 = vadd.f32 %v4413, %v5590
        %v5592 = vpop.f32.mrf.mxu0
        %v5593 = vadd.f32 %v4409, %v5592
        %v5594 = vpop.f32.mrf.mxu0
        %v5595 = vadd.f32 %v4413, %v5594
        %5596 = vmatprep.mubr.bf16.mxu0 %v4217
        %5597 = vmatmul.mubr.bf16.gmra.mxu0 %v4216
        %v5598 = vpop.f32.mrf.mxu0
        %v5599 = vadd.f32 %v4409, %v5598
        %v5600 = vpop.f32.mrf.mxu0
        %v5601 = vadd.f32 %v4413, %v5600
        %v5602 = vpop.f32.mrf.mxu0
        %v5603 = vadd.f32 %v4409, %v5602
        %v5604 = vpop.f32.mrf.mxu0
        %v5605 = vadd.f32 %v4413, %v5604
        %5606 = vmatprep.mubr.bf16.mxu0 %v4221
        %5607 = vmatmul.mubr.bf16.gmra.mxu0 %v4220
        %v5608 = vpop.f32.mrf.mxu0
        %v5609 = vadd.f32 %v4409, %v5608
        %v5610 = vpop.f32.mrf.mxu0
        %v5611 = vadd.f32 %v4413, %v5610
        %v5612 = vpop.f32.mrf.mxu0
        %v5613 = vadd.f32 %v4409, %v5612
        %v5614 = vpop.f32.mrf.mxu0
        %v5615 = vadd.f32 %v4413, %v5614
        %5616 = vmatprep.mubr.bf16.mxu0 %v4225
        %5617 = vmatmul.mubr.bf16.gmra.mxu0 %v4224
        %v5618 = vpop.f32.mrf.mxu0
        %v5619 = vadd.f32 %v4409, %v5618
        %v5620 = vpop.f32.mrf.mxu0
        %v5621 = vadd.f32 %v4413, %v5620
        %v5622 = vpop.f32.mrf.mxu0
        %v5623 = vadd.f32 %v4409, %v5622
        %v5624 = vpop.f32.mrf.mxu0
        %v5625 = vadd.f32 %v4413, %v5624
        %5626 = vmatprep.mubr.bf16.mxu0 %v4229
        %5627 = vmatmul.mubr.bf16.gmra.mxu0 %v4228
        %v5628 = vpop.f32.mrf.mxu0
        %v5629 = vadd.f32 %v4409, %v5628
        %v5630 = vpop.f32.mrf.mxu0
        %v5631 = vadd.f32 %v4413, %v5630
        %v5632 = vpop.f32.mrf.mxu0
        %v5633 = vadd.f32 %v4409, %v5632
        %v5634 = vpop.f32.mrf.mxu0
        %v5635 = vadd.f32 %v4413, %v5634
        %5636 = vmatprep.mubr.bf16.mxu0 %v4233
        %5637 = vmatmul.mubr.bf16.gmra.mxu0 %v4232
        %v5638 = vpop.f32.mrf.mxu0
        %v5639 = vadd.f32 %v4409, %v5638
        %v5640 = vpop.f32.mrf.mxu0
        %v5641 = vadd.f32 %v4413, %v5640
        %v5642 = vpop.f32.mrf.mxu0
        %v5643 = vadd.f32 %v4409, %v5642
        %v5644 = vpop.f32.mrf.mxu0
        %v5645 = vadd.f32 %v4413, %v5644
        %5646 = vmatprep.mubr.bf16.mxu0 %v4237
        %5647 = vmatmul.mubr.bf16.gmra.mxu0 %v4236
        %v5648 = vpop.f32.mrf.mxu0
        %v5649 = vadd.f32 %v4409, %v5648
        %v5650 = vpop.f32.mrf.mxu0
        %v5651 = vadd.f32 %v4413, %v5650
        %v5652 = vpop.f32.mrf.mxu0
        %v5653 = vadd.f32 %v4409, %v5652
        %v5654 = vpop.f32.mrf.mxu0
        %v5655 = vadd.f32 %v4413, %v5654
        %5656 = vmatprep.mubr.bf16.mxu0 %v4241
        %5657 = vmatmul.mubr.bf16.gmra.mxu0 %v4240
        %v5658 = vpop.f32.mrf.mxu0
        %v5659 = vadd.f32 %v4409, %v5658
        %v5660 = vpop.f32.mrf.mxu0
        %v5661 = vadd.f32 %v4413, %v5660
        %v5662 = vpop.f32.mrf.mxu0
        %v5663 = vadd.f32 %v4409, %v5662
        %v5664 = vpop.f32.mrf.mxu0
        %v5665 = vadd.f32 %v4413, %v5664
        %5666 = vmatprep.mubr.bf16.mxu0 %v4245
        %5667 = vmatmul.mubr.bf16.gmra.mxu0 %v4244
        %v5668 = vpop.f32.mrf.mxu0
        %v5669 = vadd.f32 %v4409, %v5668
        %v5670 = vpop.f32.mrf.mxu0
        %v5671 = vadd.f32 %v4413, %v5670
        %v5672 = vpop.f32.mrf.mxu0
        %v5673 = vadd.f32 %v4409, %v5672
        %v5674 = vpop.f32.mrf.mxu0
        %v5675 = vadd.f32 %v4413, %v5674
        %5676 = vmatprep.mubr.bf16.mxu0 %v4249
        %5677 = vmatmul.mubr.bf16.gmra.mxu0 %v4248
        %v5678 = vpop.f32.mrf.mxu0
        %v5679 = vadd.f32 %v4409, %v5678
        %v5680 = vpop.f32.mrf.mxu0
        %v5681 = vadd.f32 %v4413, %v5680
        %v5682 = vpop.f32.mrf.mxu0
        %v5683 = vadd.f32 %v4409, %v5682
        %v5684 = vpop.f32.mrf.mxu0
        %v5685 = vadd.f32 %v4413, %v5684
        %5686 = vmatprep.mubr.bf16.mxu0 %v4253
        %5687 = vmatmul.mubr.bf16.gmra.mxu0 %v4252
        %v5688 = vpop.f32.mrf.mxu0
        %v5689 = vadd.f32 %v4409, %v5688
        %v5690 = vpop.f32.mrf.mxu0
        %v5691 = vadd.f32 %v4413, %v5690
        %v5692 = vpop.f32.mrf.mxu0
        %v5693 = vadd.f32 %v4409, %v5692
        %v5694 = vpop.f32.mrf.mxu0
        %v5695 = vadd.f32 %v4413, %v5694
        %5696 = vmatprep.mubr.bf16.mxu0 %v4257
        %5697 = vmatmul.mubr.bf16.gmra.mxu0 %v4256
        %v5698 = vpop.f32.mrf.mxu0
        %v5699 = vadd.f32 %v4409, %v5698
        %v5700 = vpop.f32.mrf.mxu0
        %v5701 = vadd.f32 %v4413, %v5700
        %v5702 = vpop.f32.mrf.mxu0
        %v5703 = vadd.f32 %v4409, %v5702
        %v5704 = vpop.f32.mrf.mxu0
        %v5705 = vadd.f32 %v4413, %v5704
        %5706 = vmatprep.mubr.bf16.mxu0 %v4261
        %5707 = vmatmul.mubr.bf16.gmra.mxu0 %v4260
        %v5708 = vpop.f32.mrf.mxu0
        %v5709 = vadd.f32 %v4409, %v5708
        %v5710 = vpop.f32.mrf.mxu0
        %v5711 = vadd.f32 %v4413, %v5710
        %v5712 = vpop.f32.mrf.mxu0
        %v5713 = vadd.f32 %v4409, %v5712
        %v5714 = vpop.f32.mrf.mxu0
        %v5715 = vadd.f32 %v4413, %v5714
        %5716 = vmatprep.mubr.bf16.mxu0 %v4265
        %5717 = vmatmul.mubr.bf16.gmra.mxu0 %v4264
        %v5718 = vpop.f32.mrf.mxu0
        %v5719 = vadd.f32 %v4409, %v5718
        %v5720 = vpop.f32.mrf.mxu0
        %v5721 = vadd.f32 %v4413, %v5720
        %v5722 = vpop.f32.mrf.mxu0
        %v5723 = vadd.f32 %v4409, %v5722
        %v5724 = vpop.f32.mrf.mxu0
        %v5725 = vadd.f32 %v4413, %v5724
        %5726 = vdwg.mxu0
        %5727 = vmatprep.subr.bf16.mxu0 %v4897
        %5728 = vmatpush1.bf16.msra.mxu0 %v4896
        %5729 = vmatprep.subr.bf16.mxu0 %v4893
        %5730 = vmatpush1.bf16.msra.mxu0 %v4892
        %5731 = vmatprep.subr.bf16.mxu0 %v4889
        %5732 = vmatpush1.bf16.msra.mxu0 %v4888
        %5733 = vmatprep.subr.bf16.mxu0 %v4885
        %5734 = vmatpush1.bf16.msra.mxu0 %v4884
        %5735 = vmatprep.subr.bf16.mxu0 %v4881
        %5736 = vmatpush1.bf16.msra.mxu0 %v4880
        %5737 = vmatprep.subr.bf16.mxu0 %v4877
        %5738 = vmatpush1.bf16.msra.mxu0 %v4876
        %5739 = vmatprep.subr.bf16.mxu0 %v4873
        %5740 = vmatpush1.bf16.msra.mxu0 %v4872
        %5741 = vmatprep.subr.bf16.mxu0 %v4869
        %5742 = vmatpush1.bf16.msra.mxu0 %v4868
        %5743 = vmatprep.subr.bf16.mxu0 %v4929
        %5744 = vmatpush2.bf16.msra.mxu0 %v4928
        %5745 = vmatprep.subr.bf16.mxu0 %v4925
        %5746 = vmatpush2.bf16.msra.mxu0 %v4924
        %5747 = vmatprep.subr.bf16.mxu0 %v4921
        %5748 = vmatpush2.bf16.msra.mxu0 %v4920
        %5749 = vmatprep.subr.bf16.mxu0 %v4917
        %5750 = vmatpush2.bf16.msra.mxu0 %v4916
        %5751 = vmatprep.subr.bf16.mxu0 %v4913
        %5752 = vmatpush2.bf16.msra.mxu0 %v4912
        %5753 = vmatprep.subr.bf16.mxu0 %v4909
        %5754 = vmatpush2.bf16.msra.mxu0 %v4908
        %5755 = vmatprep.subr.bf16.mxu0 %v4905
        %5756 = vmatpush2.bf16.msra.mxu0 %v4904
        %5757 = vmatprep.subr.bf16.mxu0 %v4901
        %5758 = vmatpush2.bf16.msra.mxu0 %v4900
        %5759 = vmatprep.mubr.bf16.mxu0 %v4195
        %5760 = vmatmul.mubr.bf16.gmra.mxu0 %v4194
        %v5761 = vpop.f32.mrf.mxu0
        %v5762 = vadd.f32 %v5539, %v5761
        %v5763 = vpop.f32.mrf.mxu0
        %v5764 = vadd.f32 %v5541, %v5763
        %v5765 = vpop.f32.mrf.mxu0
        %v5766 = vadd.f32 %v5543, %v5765
        %v5767 = vpop.f32.mrf.mxu0
        %v5768 = vadd.f32 %v5545, %v5767
        %5769 = vmatprep.mubr.bf16.mxu0 %v4199
        %5770 = vmatmul.mubr.bf16.gmra.mxu0 %v4198
        %v5771 = vpop.f32.mrf.mxu0
        %v5772 = vadd.f32 %v5549, %v5771
        %v5773 = vpop.f32.mrf.mxu0
        %v5774 = vadd.f32 %v5551, %v5773
        %v5775 = vpop.f32.mrf.mxu0
        %v5776 = vadd.f32 %v5553, %v5775
        %v5777 = vpop.f32.mrf.mxu0
        %v5778 = vadd.f32 %v5555, %v5777
        %5779 = vmatprep.mubr.bf16.mxu0 %v4203
        %5780 = vmatmul.mubr.bf16.gmra.mxu0 %v4202
        %v5781 = vpop.f32.mrf.mxu0
        %v5782 = vadd.f32 %v5559, %v5781
        %v5783 = vpop.f32.mrf.mxu0
        %v5784 = vadd.f32 %v5561, %v5783
        %v5785 = vpop.f32.mrf.mxu0
        %v5786 = vadd.f32 %v5563, %v5785
        %v5787 = vpop.f32.mrf.mxu0
        %v5788 = vadd.f32 %v5565, %v5787
        %5789 = vmatprep.mubr.bf16.mxu0 %v4207
        %5790 = vmatmul.mubr.bf16.gmra.mxu0 %v4206
        %v5791 = vpop.f32.mrf.mxu0
        %v5792 = vadd.f32 %v5569, %v5791
        %v5793 = vpop.f32.mrf.mxu0
        %v5794 = vadd.f32 %v5571, %v5793
        %v5795 = vpop.f32.mrf.mxu0
        %v5796 = vadd.f32 %v5573, %v5795
        %v5797 = vpop.f32.mrf.mxu0
        %v5798 = vadd.f32 %v5575, %v5797
        %5799 = vmatprep.mubr.bf16.mxu0 %v4211
        %5800 = vmatmul.mubr.bf16.gmra.mxu0 %v4210
        %v5801 = vpop.f32.mrf.mxu0
        %v5802 = vadd.f32 %v5579, %v5801
        %v5803 = vpop.f32.mrf.mxu0
        %v5804 = vadd.f32 %v5581, %v5803
        %v5805 = vpop.f32.mrf.mxu0
        %v5806 = vadd.f32 %v5583, %v5805
        %v5807 = vpop.f32.mrf.mxu0
        %v5808 = vadd.f32 %v5585, %v5807
        %5809 = vmatprep.mubr.bf16.mxu0 %v4215
        %5810 = vmatmul.mubr.bf16.gmra.mxu0 %v4214
        %v5811 = vpop.f32.mrf.mxu0
        %v5812 = vadd.f32 %v5589, %v5811
        %v5813 = vpop.f32.mrf.mxu0
        %v5814 = vadd.f32 %v5591, %v5813
        %v5815 = vpop.f32.mrf.mxu0
        %v5816 = vadd.f32 %v5593, %v5815
        %v5817 = vpop.f32.mrf.mxu0
        %v5818 = vadd.f32 %v5595, %v5817
        %5819 = vmatprep.mubr.bf16.mxu0 %v4219
        %5820 = vmatmul.mubr.bf16.gmra.mxu0 %v4218
        %v5821 = vpop.f32.mrf.mxu0
        %v5822 = vadd.f32 %v5599, %v5821
        %v5823 = vpop.f32.mrf.mxu0
        %v5824 = vadd.f32 %v5601, %v5823
        %v5825 = vpop.f32.mrf.mxu0
        %v5826 = vadd.f32 %v5603, %v5825
        %v5827 = vpop.f32.mrf.mxu0
        %v5828 = vadd.f32 %v5605, %v5827
        %5829 = vmatprep.mubr.bf16.mxu0 %v4223
        %5830 = vmatmul.mubr.bf16.gmra.mxu0 %v4222
        %v5831 = vpop.f32.mrf.mxu0
        %v5832 = vadd.f32 %v5609, %v5831
        %v5833 = vpop.f32.mrf.mxu0
        %v5834 = vadd.f32 %v5611, %v5833
        %v5835 = vpop.f32.mrf.mxu0
        %v5836 = vadd.f32 %v5613, %v5835
        %v5837 = vpop.f32.mrf.mxu0
        %v5838 = vadd.f32 %v5615, %v5837
        %5839 = vmatprep.mubr.bf16.mxu0 %v4227
        %5840 = vmatmul.mubr.bf16.gmra.mxu0 %v4226
        %v5841 = vpop.f32.mrf.mxu0
        %v5842 = vadd.f32 %v5619, %v5841
        %v5843 = vpop.f32.mrf.mxu0
        %v5844 = vadd.f32 %v5621, %v5843
        %v5845 = vpop.f32.mrf.mxu0
        %v5846 = vadd.f32 %v5623, %v5845
        %v5847 = vpop.f32.mrf.mxu0
        %v5848 = vadd.f32 %v5625, %v5847
        %5849 = vmatprep.mubr.bf16.mxu0 %v4231
        %5850 = vmatmul.mubr.bf16.gmra.mxu0 %v4230
        %v5851 = vpop.f32.mrf.mxu0
        %v5852 = vadd.f32 %v5629, %v5851
        %v5853 = vpop.f32.mrf.mxu0
        %v5854 = vadd.f32 %v5631, %v5853
        %v5855 = vpop.f32.mrf.mxu0
        %v5856 = vadd.f32 %v5633, %v5855
        %v5857 = vpop.f32.mrf.mxu0
        %v5858 = vadd.f32 %v5635, %v5857
        %5859 = vmatprep.mubr.bf16.mxu0 %v4235
        %5860 = vmatmul.mubr.bf16.gmra.mxu0 %v4234
        %v5861 = vpop.f32.mrf.mxu0
        %v5862 = vadd.f32 %v5639, %v5861
        %v5863 = vpop.f32.mrf.mxu0
        %v5864 = vadd.f32 %v5641, %v5863
        %v5865 = vpop.f32.mrf.mxu0
        %v5866 = vadd.f32 %v5643, %v5865
        %v5867 = vpop.f32.mrf.mxu0
        %v5868 = vadd.f32 %v5645, %v5867
        %5869 = vmatprep.mubr.bf16.mxu0 %v4239
        %5870 = vmatmul.mubr.bf16.gmra.mxu0 %v4238
        %v5871 = vpop.f32.mrf.mxu0
        %v5872 = vadd.f32 %v5649, %v5871
        %v5873 = vpop.f32.mrf.mxu0
        %v5874 = vadd.f32 %v5651, %v5873
        %v5875 = vpop.f32.mrf.mxu0
        %v5876 = vadd.f32 %v5653, %v5875
        %v5877 = vpop.f32.mrf.mxu0
        %v5878 = vadd.f32 %v5655, %v5877
        %5879 = vmatprep.mubr.bf16.mxu0 %v4243
        %5880 = vmatmul.mubr.bf16.gmra.mxu0 %v4242
        %v5881 = vpop.f32.mrf.mxu0
        %v5882 = vadd.f32 %v5659, %v5881
        %v5883 = vpop.f32.mrf.mxu0
        %v5884 = vadd.f32 %v5661, %v5883
        %v5885 = vpop.f32.mrf.mxu0
        %v5886 = vadd.f32 %v5663, %v5885
        %v5887 = vpop.f32.mrf.mxu0
        %v5888 = vadd.f32 %v5665, %v5887
        %5889 = vmatprep.mubr.bf16.mxu0 %v4247
        %5890 = vmatmul.mubr.bf16.gmra.mxu0 %v4246
        %v5891 = vpop.f32.mrf.mxu0
        %v5892 = vadd.f32 %v5669, %v5891
        %v5893 = vpop.f32.mrf.mxu0
        %v5894 = vadd.f32 %v5671, %v5893
        %v5895 = vpop.f32.mrf.mxu0
        %v5896 = vadd.f32 %v5673, %v5895
        %v5897 = vpop.f32.mrf.mxu0
        %v5898 = vadd.f32 %v5675, %v5897
        %5899 = vmatprep.mubr.bf16.mxu0 %v4251
        %5900 = vmatmul.mubr.bf16.gmra.mxu0 %v4250
        %v5901 = vpop.f32.mrf.mxu0
        %v5902 = vadd.f32 %v5679, %v5901
        %v5903 = vpop.f32.mrf.mxu0
        %v5904 = vadd.f32 %v5681, %v5903
        %v5905 = vpop.f32.mrf.mxu0
        %v5906 = vadd.f32 %v5683, %v5905
        %v5907 = vpop.f32.mrf.mxu0
        %v5908 = vadd.f32 %v5685, %v5907
        %5909 = vmatprep.mubr.bf16.mxu0 %v4255
        %5910 = vmatmul.mubr.bf16.gmra.mxu0 %v4254
        %v5911 = vpop.f32.mrf.mxu0
        %v5912 = vadd.f32 %v5689, %v5911
        %v5913 = vpop.f32.mrf.mxu0
        %v5914 = vadd.f32 %v5691, %v5913
        %v5915 = vpop.f32.mrf.mxu0
        %v5916 = vadd.f32 %v5693, %v5915
        %v5917 = vpop.f32.mrf.mxu0
        %v5918 = vadd.f32 %v5695, %v5917
        %5919 = vmatprep.mubr.bf16.mxu0 %v4259
        %5920 = vmatmul.mubr.bf16.gmra.mxu0 %v4258
        %v5921 = vpop.f32.mrf.mxu0
        %v5922 = vadd.f32 %v5699, %v5921
        %v5923 = vpop.f32.mrf.mxu0
        %v5924 = vadd.f32 %v5701, %v5923
        %v5925 = vpop.f32.mrf.mxu0
        %v5926 = vadd.f32 %v5703, %v5925
        %v5927 = vpop.f32.mrf.mxu0
        %v5928 = vadd.f32 %v5705, %v5927
        %5929 = vmatprep.mubr.bf16.mxu0 %v4263
        %5930 = vmatmul.mubr.bf16.gmra.mxu0 %v4262
        %v5931 = vpop.f32.mrf.mxu0
        %v5932 = vadd.f32 %v5709, %v5931
        %v5933 = vpop.f32.mrf.mxu0
        %v5934 = vadd.f32 %v5711, %v5933
        %v5935 = vpop.f32.mrf.mxu0
        %v5936 = vadd.f32 %v5713, %v5935
        %v5937 = vpop.f32.mrf.mxu0
        %v5938 = vadd.f32 %v5715, %v5937
        %5939 = vmatprep.mubr.bf16.mxu0 %v4267
        %5940 = vmatmul.mubr.bf16.gmra.mxu0 %v4266
        %v5941 = vpop.f32.mrf.mxu0
        %v5942 = vadd.f32 %v5719, %v5941
        %v5943 = vpop.f32.mrf.mxu0
        %v5944 = vadd.f32 %v5721, %v5943
        %v5945 = vpop.f32.mrf.mxu0
        %v5946 = vadd.f32 %v5723, %v5945
        %v5947 = vpop.f32.mrf.mxu0
        %v5948 = vadd.f32 %v5725, %v5947
        %5949 = vdwg.mxu0
        %v5950 = vmul.f32 %v5316, 0.01
        %v5951 = vmul.f32 %v5318, 0.01
        %v5952 = vmul.f32 %v5762, 0.01
        %v5953 = vmul.f32 %v5764, 0.01
        %v5954 = vmul.f32 %v5320, 0.01
        %v5955 = vmul.f32 %v5322, 0.01
        %v5956 = vmul.f32 %v5766, 0.01
        %v5957 = vmul.f32 %v5768, 0.01
        %v5958 = vmul.f32 %v5326, 0.01
        %v5959 = vmul.f32 %v5328, 0.01
        %v5960 = vmul.f32 %v5772, 0.01
        %v5961 = vmul.f32 %v5774, 0.01
        %v5962 = vmul.f32 %v5330, 0.01
        %v5963 = vmul.f32 %v5332, 0.01
        %v5964 = vmul.f32 %v5776, 0.01
        %v5965 = vmul.f32 %v5778, 0.01
        %v5966 = vmul.f32 %v5336, 0.01
        %v5967 = vmul.f32 %v5338, 0.01
        %v5968 = vmul.f32 %v5782, 0.01
        %v5969 = vmul.f32 %v5784, 0.01
        %v5970 = vmul.f32 %v5340, 0.01
        %v5971 = vmul.f32 %v5342, 0.01
        %v5972 = vmul.f32 %v5786, 0.01
        %v5973 = vmul.f32 %v5788, 0.01
        %v5974 = vmul.f32 %v5346, 0.01
        %v5975 = vmul.f32 %v5348, 0.01
        %v5976 = vmul.f32 %v5792, 0.01
        %v5977 = vmul.f32 %v5794, 0.01
        %v5978 = vmul.f32 %v5350, 0.01
        %v5979 = vmul.f32 %v5352, 0.01
        %v5980 = vmul.f32 %v5796, 0.01
        %v5981 = vmul.f32 %v5798, 0.01
        %v5982 = vmul.f32 %v5356, 0.01
        %v5983 = vmul.f32 %v5358, 0.01
        %v5984 = vmul.f32 %v5802, 0.01
        %v5985 = vmul.f32 %v5804, 0.01
        %v5986 = vmul.f32 %v5360, 0.01
        %v5987 = vmul.f32 %v5362, 0.01
        %v5988 = vmul.f32 %v5806, 0.01
        %v5989 = vmul.f32 %v5808, 0.01
        %v5990 = vmul.f32 %v5366, 0.01
        %v5991 = vmul.f32 %v5368, 0.01
        %v5992 = vmul.f32 %v5812, 0.01
        %v5993 = vmul.f32 %v5814, 0.01
        %v5994 = vmul.f32 %v5370, 0.01
        %v5995 = vmul.f32 %v5372, 0.01
        %v5996 = vmul.f32 %v5816, 0.01
        %v5997 = vmul.f32 %v5818, 0.01
        %v5998 = vmul.f32 %v5376, 0.01
        %v5999 = vmul.f32 %v5378, 0.01
        %v6000 = vmul.f32 %v5822, 0.01
        %v6001 = vmul.f32 %v5824, 0.01
        %v6002 = vmul.f32 %v5380, 0.01
        %v6003 = vmul.f32 %v5382, 0.01
        %v6004 = vmul.f32 %v5826, 0.01
        %v6005 = vmul.f32 %v5828, 0.01
        %v6006 = vmul.f32 %v5386, 0.01
        %v6007 = vmul.f32 %v5388, 0.01
        %v6008 = vmul.f32 %v5832, 0.01
        %v6009 = vmul.f32 %v5834, 0.01
        %v6010 = vmul.f32 %v5390, 0.01
        %v6011 = vmul.f32 %v5392, 0.01
        %v6012 = vmul.f32 %v5836, 0.01
        %v6013 = vmul.f32 %v5838, 0.01
        %v6014 = vmul.f32 %v5396, 0.01
        %v6015 = vmul.f32 %v5398, 0.01
        %v6016 = vmul.f32 %v5842, 0.01
        %v6017 = vmul.f32 %v5844, 0.01
        %v6018 = vmul.f32 %v5400, 0.01
        %v6019 = vmul.f32 %v5402, 0.01
        %v6020 = vmul.f32 %v5846, 0.01
        %v6021 = vmul.f32 %v5848, 0.01
        %v6022 = vmul.f32 %v5406, 0.01
        %v6023 = vmul.f32 %v5408, 0.01
        %v6024 = vmul.f32 %v5852, 0.01
        %v6025 = vmul.f32 %v5854, 0.01
        %v6026 = vmul.f32 %v5410, 0.01
        %v6027 = vmul.f32 %v5412, 0.01
        %v6028 = vmul.f32 %v5856, 0.01
        %v6029 = vmul.f32 %v5858, 0.01
        %v6030 = vmul.f32 %v5416, 0.01
        %v6031 = vmul.f32 %v5418, 0.01
        %v6032 = vmul.f32 %v5862, 0.01
        %v6033 = vmul.f32 %v5864, 0.01
        %v6034 = vmul.f32 %v5420, 0.01
        %v6035 = vmul.f32 %v5422, 0.01
        %v6036 = vmul.f32 %v5866, 0.01
        %v6037 = vmul.f32 %v5868, 0.01
        %v6038 = vmul.f32 %v5426, 0.01
        %v6039 = vmul.f32 %v5428, 0.01
        %v6040 = vmul.f32 %v5872, 0.01
        %v6041 = vmul.f32 %v5874, 0.01
        %v6042 = vmul.f32 %v5430, 0.01
        %v6043 = vmul.f32 %v5432, 0.01
        %v6044 = vmul.f32 %v5876, 0.01
        %v6045 = vmul.f32 %v5878, 0.01
        %v6046 = vmul.f32 %v5436, 0.01
        %v6047 = vmul.f32 %v5438, 0.01
        %v6048 = vmul.f32 %v5882, 0.01
        %v6049 = vmul.f32 %v5884, 0.01
        %v6050 = vmul.f32 %v5440, 0.01
        %v6051 = vmul.f32 %v5442, 0.01
        %v6052 = vmul.f32 %v5886, 0.01
        %v6053 = vmul.f32 %v5888, 0.01
        %v6054 = vmul.f32 %v5446, 0.01
        %v6055 = vmul.f32 %v5448, 0.01
        %v6056 = vmul.f32 %v5892, 0.01
        %v6057 = vmul.f32 %v5894, 0.01
        %v6058 = vmul.f32 %v5450, 0.01
        %v6059 = vmul.f32 %v5452, 0.01
        %v6060 = vmul.f32 %v5896, 0.01
        %v6061 = vmul.f32 %v5898, 0.01
        %v6062 = vmul.f32 %v5456, 0.01
        %v6063 = vmul.f32 %v5458, 0.01
        %v6064 = vmul.f32 %v5902, 0.01
        %v6065 = vmul.f32 %v5904, 0.01
        %v6066 = vmul.f32 %v5460, 0.01
        %v6067 = vmul.f32 %v5462, 0.01
        %v6068 = vmul.f32 %v5906, 0.01
        %v6069 = vmul.f32 %v5908, 0.01
        %v6070 = vmul.f32 %v5466, 0.01
        %v6071 = vmul.f32 %v5468, 0.01
        %v6072 = vmul.f32 %v5912, 0.01
        %v6073 = vmul.f32 %v5914, 0.01
        %v6074 = vmul.f32 %v5470, 0.01
        %v6075 = vmul.f32 %v5472, 0.01
        %v6076 = vmul.f32 %v5916, 0.01
        %v6077 = vmul.f32 %v5918, 0.01
        %v6078 = vmul.f32 %v5476, 0.01
        %v6079 = vmul.f32 %v5478, 0.01
        %v6080 = vmul.f32 %v5922, 0.01
        %v6081 = vmul.f32 %v5924, 0.01
        %v6082 = vmul.f32 %v5480, 0.01
        %v6083 = vmul.f32 %v5482, 0.01
        %v6084 = vmul.f32 %v5926, 0.01
        %v6085 = vmul.f32 %v5928, 0.01
        %v6086 = vmul.f32 %v5486, 0.01
        %v6087 = vmul.f32 %v5488, 0.01
        %v6088 = vmul.f32 %v5932, 0.01
        %v6089 = vmul.f32 %v5934, 0.01
        %v6090 = vmul.f32 %v5490, 0.01
        %v6091 = vmul.f32 %v5492, 0.01
        %v6092 = vmul.f32 %v5936, 0.01
        %v6093 = vmul.f32 %v5938, 0.01
        %v6094 = vmul.f32 %v5496, 0.01
        %v6095 = vmul.f32 %v5498, 0.01
        %v6096 = vmul.f32 %v5942, 0.01
        %v6097 = vmul.f32 %v5944, 0.01
        %v6098 = vmul.f32 %v5500, 0.01
        %v6099 = vmul.f32 %v5502, 0.01
        %v6100 = vmul.f32 %v5946, 0.01
        %v6101 = vmul.f32 %v5948, 0.01
        %v6102 = vmax.f32 %v5316, %v5950
        %v6103 = vmax.f32 %v5318, %v5951
        %v6104 = vmax.f32 %v5762, %v5952
        %v6105 = vmax.f32 %v5764, %v5953
        %v6106 = vmax.f32 %v5320, %v5954
        %v6107 = vmax.f32 %v5322, %v5955
        %v6108 = vmax.f32 %v5766, %v5956
        %v6109 = vmax.f32 %v5768, %v5957
        %v6110 = vmax.f32 %v5326, %v5958
        %v6111 = vmax.f32 %v5328, %v5959
        %v6112 = vmax.f32 %v5772, %v5960
        %v6113 = vmax.f32 %v5774, %v5961
        %v6114 = vmax.f32 %v5330, %v5962
        %v6115 = vmax.f32 %v5332, %v5963
        %v6116 = vmax.f32 %v5776, %v5964
        %v6117 = vmax.f32 %v5778, %v5965
        %v6118 = vmax.f32 %v5336, %v5966
        %v6119 = vmax.f32 %v5338, %v5967
        %v6120 = vmax.f32 %v5782, %v5968
        %v6121 = vmax.f32 %v5784, %v5969
        %v6122 = vmax.f32 %v5340, %v5970
        %v6123 = vmax.f32 %v5342, %v5971
        %v6124 = vmax.f32 %v5786, %v5972
        %v6125 = vmax.f32 %v5788, %v5973
        %v6126 = vmax.f32 %v5346, %v5974
        %v6127 = vmax.f32 %v5348, %v5975
        %v6128 = vmax.f32 %v5792, %v5976
        %v6129 = vmax.f32 %v5794, %v5977
        %v6130 = vmax.f32 %v5350, %v5978
        %v6131 = vmax.f32 %v5352, %v5979
        %v6132 = vmax.f32 %v5796, %v5980
        %v6133 = vmax.f32 %v5798, %v5981
        %v6134 = vmax.f32 %v5356, %v5982
        %v6135 = vmax.f32 %v5358, %v5983
        %v6136 = vmax.f32 %v5802, %v5984
        %v6137 = vmax.f32 %v5804, %v5985
        %v6138 = vmax.f32 %v5360, %v5986
        %v6139 = vmax.f32 %v5362, %v5987
        %v6140 = vmax.f32 %v5806, %v5988
        %v6141 = vmax.f32 %v5808, %v5989
        %v6142 = vmax.f32 %v5366, %v5990
        %v6143 = vmax.f32 %v5368, %v5991
        %v6144 = vmax.f32 %v5812, %v5992
        %v6145 = vmax.f32 %v5814, %v5993
        %v6146 = vmax.f32 %v5370, %v5994
        %v6147 = vmax.f32 %v5372, %v5995
        %v6148 = vmax.f32 %v5816, %v5996
        %v6149 = vmax.f32 %v5818, %v5997
        %v6150 = vmax.f32 %v5376, %v5998
        %v6151 = vmax.f32 %v5378, %v5999
        %v6152 = vmax.f32 %v5822, %v6000
        %v6153 = vmax.f32 %v5824, %v6001
        %v6154 = vmax.f32 %v5380, %v6002
        %v6155 = vmax.f32 %v5382, %v6003
        %v6156 = vmax.f32 %v5826, %v6004
        %v6157 = vmax.f32 %v5828, %v6005
        %v6158 = vmax.f32 %v5386, %v6006
        %v6159 = vmax.f32 %v5388, %v6007
        %v6160 = vmax.f32 %v5832, %v6008
        %v6161 = vmax.f32 %v5834, %v6009
        %v6162 = vmax.f32 %v5390, %v6010
        %v6163 = vmax.f32 %v5392, %v6011
        %v6164 = vmax.f32 %v5836, %v6012
        %v6165 = vmax.f32 %v5838, %v6013
        %v6166 = vmax.f32 %v5396, %v6014
        %v6167 = vmax.f32 %v5398, %v6015
        %v6168 = vmax.f32 %v5842, %v6016
        %v6169 = vmax.f32 %v5844, %v6017
        %v6170 = vmax.f32 %v5400, %v6018
        %v6171 = vmax.f32 %v5402, %v6019
        %v6172 = vmax.f32 %v5846, %v6020
        %v6173 = vmax.f32 %v5848, %v6021
        %v6174 = vmax.f32 %v5406, %v6022
        %v6175 = vmax.f32 %v5408, %v6023
        %v6176 = vmax.f32 %v5852, %v6024
        %v6177 = vmax.f32 %v5854, %v6025
        %v6178 = vmax.f32 %v5410, %v6026
        %v6179 = vmax.f32 %v5412, %v6027
        %v6180 = vmax.f32 %v5856, %v6028
        %v6181 = vmax.f32 %v5858, %v6029
        %v6182 = vmax.f32 %v5416, %v6030
        %v6183 = vmax.f32 %v5418, %v6031
        %v6184 = vmax.f32 %v5862, %v6032
        %v6185 = vmax.f32 %v5864, %v6033
        %v6186 = vmax.f32 %v5420, %v6034
        %v6187 = vmax.f32 %v5422, %v6035
        %v6188 = vmax.f32 %v5866, %v6036
        %v6189 = vmax.f32 %v5868, %v6037
        %v6190 = vmax.f32 %v5426, %v6038
        %v6191 = vmax.f32 %v5428, %v6039
        %v6192 = vmax.f32 %v5872, %v6040
        %v6193 = vmax.f32 %v5874, %v6041
        %v6194 = vmax.f32 %v5430, %v6042
        %v6195 = vmax.f32 %v5432, %v6043
        %v6196 = vmax.f32 %v5876, %v6044
        %v6197 = vmax.f32 %v5878, %v6045
        %v6198 = vmax.f32 %v5436, %v6046
        %v6199 = vmax.f32 %v5438, %v6047
        %v6200 = vmax.f32 %v5882, %v6048
        %v6201 = vmax.f32 %v5884, %v6049
        %v6202 = vmax.f32 %v5440, %v6050
        %v6203 = vmax.f32 %v5442, %v6051
        %v6204 = vmax.f32 %v5886, %v6052
        %v6205 = vmax.f32 %v5888, %v6053
        %v6206 = vmax.f32 %v5446, %v6054
        %v6207 = vmax.f32 %v5448, %v6055
        %v6208 = vmax.f32 %v5892, %v6056
        %v6209 = vmax.f32 %v5894, %v6057
        %v6210 = vmax.f32 %v5450, %v6058
        %v6211 = vmax.f32 %v5452, %v6059
        %v6212 = vmax.f32 %v5896, %v6060
        %v6213 = vmax.f32 %v5898, %v6061
        %v6214 = vmax.f32 %v5456, %v6062
        %v6215 = vmax.f32 %v5458, %v6063
        %v6216 = vmax.f32 %v5902, %v6064
        %v6217 = vmax.f32 %v5904, %v6065
        %v6218 = vmax.f32 %v5460, %v6066
        %v6219 = vmax.f32 %v5462, %v6067
        %v6220 = vmax.f32 %v5906, %v6068
        %v6221 = vmax.f32 %v5908, %v6069
        %v6222 = vmax.f32 %v5466, %v6070
        %v6223 = vmax.f32 %v5468, %v6071
        %v6224 = vmax.f32 %v5912, %v6072
        %v6225 = vmax.f32 %v5914, %v6073
        %v6226 = vmax.f32 %v5470, %v6074
        %v6227 = vmax.f32 %v5472, %v6075
        %v6228 = vmax.f32 %v5916, %v6076
        %v6229 = vmax.f32 %v5918, %v6077
        %v6230 = vmax.f32 %v5476, %v6078
        %v6231 = vmax.f32 %v5478, %v6079
        %v6232 = vmax.f32 %v5922, %v6080
        %v6233 = vmax.f32 %v5924, %v6081
        %v6234 = vmax.f32 %v5480, %v6082
        %v6235 = vmax.f32 %v5482, %v6083
        %v6236 = vmax.f32 %v5926, %v6084
        %v6237 = vmax.f32 %v5928, %v6085
        %v6238 = vmax.f32 %v5486, %v6086
        %v6239 = vmax.f32 %v5488, %v6087
        %v6240 = vmax.f32 %v5932, %v6088
        %v6241 = vmax.f32 %v5934, %v6089
        %v6242 = vmax.f32 %v5490, %v6090
        %v6243 = vmax.f32 %v5492, %v6091
        %v6244 = vmax.f32 %v5936, %v6092
        %v6245 = vmax.f32 %v5938, %v6093
        %v6246 = vmax.f32 %v5496, %v6094
        %v6247 = vmax.f32 %v5498, %v6095
        %v6248 = vmax.f32 %v5942, %v6096
        %v6249 = vmax.f32 %v5944, %v6097
        %v6250 = vmax.f32 %v5500, %v6098
        %v6251 = vmax.f32 %v5502, %v6099
        %v6252 = vmax.f32 %v5946, %v6100
        %v6253 = vmax.f32 %v5948, %v6101
        %v6254 = vld [vmem:[%s9] sm:$0xf]
        %v6256 = vlaneseq
        %v6257 = vshrl.u32 %v6256, 7
        %v6258 = vsub.s32 0, %v6257
        %v6259 = vrot.slane %v6254, %v6258
        %v6260 = vlaneseq
        %v6261 = vshrl.u32 %v6260, 7
        %v6262 = vsub.s32 1, %v6261
        %v6263 = vrot.slane %v6254, %v6262
        %v6264 = vlaneseq
        %v6265 = vshrl.u32 %v6264, 7
        %v6266 = vsub.s32 2, %v6265
        %v6267 = vrot.slane %v6254, %v6266
        %v6268 = vlaneseq
        %v6269 = vshrl.u32 %v6268, 7
        %v6270 = vsub.s32 3, %v6269
        %v6271 = vrot.slane %v6254, %v6270
        %v6276 = vmul.f32 %v6102, %v6259
        %v6277 = vmul.f32 %v6103, %v6263
        %v6278 = vmul.f32 %v6104, %v6267
        %v6279 = vmul.f32 %v6105, %v6271
        %v6280 = vmul.f32 %v6106, %v6259
        %v6281 = vmul.f32 %v6107, %v6263
        %v6282 = vmul.f32 %v6108, %v6267
        %v6283 = vmul.f32 %v6109, %v6271
        %v6284 = vmul.f32 %v6110, %v6259
        %v6285 = vmul.f32 %v6111, %v6263
        %v6286 = vmul.f32 %v6112, %v6267
        %v6287 = vmul.f32 %v6113, %v6271
        %v6288 = vmul.f32 %v6114, %v6259
        %v6289 = vmul.f32 %v6115, %v6263
        %v6290 = vmul.f32 %v6116, %v6267
        %v6291 = vmul.f32 %v6117, %v6271
        %v6292 = vmul.f32 %v6118, %v6259
        %v6293 = vmul.f32 %v6119, %v6263
        %v6294 = vmul.f32 %v6120, %v6267
        %v6295 = vmul.f32 %v6121, %v6271
        %v6296 = vmul.f32 %v6122, %v6259
        %v6297 = vmul.f32 %v6123, %v6263
        %v6298 = vmul.f32 %v6124, %v6267
        %v6299 = vmul.f32 %v6125, %v6271
        %v6300 = vmul.f32 %v6126, %v6259
        %v6301 = vmul.f32 %v6127, %v6263
        %v6302 = vmul.f32 %v6128, %v6267
        %v6303 = vmul.f32 %v6129, %v6271
        %v6304 = vmul.f32 %v6130, %v6259
        %v6305 = vmul.f32 %v6131, %v6263
        %v6306 = vmul.f32 %v6132, %v6267
        %v6307 = vmul.f32 %v6133, %v6271
        %v6308 = vmul.f32 %v6134, %v6259
        %v6309 = vmul.f32 %v6135, %v6263
        %v6310 = vmul.f32 %v6136, %v6267
        %v6311 = vmul.f32 %v6137, %v6271
        %v6312 = vmul.f32 %v6138, %v6259
        %v6313 = vmul.f32 %v6139, %v6263
        %v6314 = vmul.f32 %v6140, %v6267
        %v6315 = vmul.f32 %v6141, %v6271
        %v6316 = vmul.f32 %v6142, %v6259
        %v6317 = vmul.f32 %v6143, %v6263
        %v6318 = vmul.f32 %v6144, %v6267
        %v6319 = vmul.f32 %v6145, %v6271
        %v6320 = vmul.f32 %v6146, %v6259
        %v6321 = vmul.f32 %v6147, %v6263
        %v6322 = vmul.f32 %v6148, %v6267
        %v6323 = vmul.f32 %v6149, %v6271
        %v6324 = vmul.f32 %v6150, %v6259
        %v6325 = vmul.f32 %v6151, %v6263
        %v6326 = vmul.f32 %v6152, %v6267
        %v6327 = vmul.f32 %v6153, %v6271
        %v6328 = vmul.f32 %v6154, %v6259
        %v6329 = vmul.f32 %v6155, %v6263
        %v6330 = vmul.f32 %v6156, %v6267
        %v6331 = vmul.f32 %v6157, %v6271
        %v6332 = vmul.f32 %v6158, %v6259
        %v6333 = vmul.f32 %v6159, %v6263
        %v6334 = vmul.f32 %v6160, %v6267
        %v6335 = vmul.f32 %v6161, %v6271
        %v6336 = vmul.f32 %v6162, %v6259
        %v6337 = vmul.f32 %v6163, %v6263
        %v6338 = vmul.f32 %v6164, %v6267
        %v6339 = vmul.f32 %v6165, %v6271
        %v6340 = vmul.f32 %v6166, %v6259
        %v6341 = vmul.f32 %v6167, %v6263
        %v6342 = vmul.f32 %v6168, %v6267
        %v6343 = vmul.f32 %v6169, %v6271
        %v6344 = vmul.f32 %v6170, %v6259
        %v6345 = vmul.f32 %v6171, %v6263
        %v6346 = vmul.f32 %v6172, %v6267
        %v6347 = vmul.f32 %v6173, %v6271
        %v6348 = vmul.f32 %v6174, %v6259
        %v6349 = vmul.f32 %v6175, %v6263
        %v6350 = vmul.f32 %v6176, %v6267
        %v6351 = vmul.f32 %v6177, %v6271
        %v6352 = vmul.f32 %v6178, %v6259
        %v6353 = vmul.f32 %v6179, %v6263
        %v6354 = vmul.f32 %v6180, %v6267
        %v6355 = vmul.f32 %v6181, %v6271
        %v6356 = vmul.f32 %v6182, %v6259
        %v6357 = vmul.f32 %v6183, %v6263
        %v6358 = vmul.f32 %v6184, %v6267
        %v6359 = vmul.f32 %v6185, %v6271
        %v6360 = vmul.f32 %v6186, %v6259
        %v6361 = vmul.f32 %v6187, %v6263
        %v6362 = vmul.f32 %v6188, %v6267
        %v6363 = vmul.f32 %v6189, %v6271
        %v6364 = vmul.f32 %v6190, %v6259
        %v6365 = vmul.f32 %v6191, %v6263
        %v6366 = vmul.f32 %v6192, %v6267
        %v6367 = vmul.f32 %v6193, %v6271
        %v6368 = vmul.f32 %v6194, %v6259
        %v6369 = vmul.f32 %v6195, %v6263
        %v6370 = vmul.f32 %v6196, %v6267
        %v6371 = vmul.f32 %v6197, %v6271
        %v6372 = vmul.f32 %v6198, %v6259
        %v6373 = vmul.f32 %v6199, %v6263
        %v6374 = vmul.f32 %v6200, %v6267
        %v6375 = vmul.f32 %v6201, %v6271
        %v6376 = vmul.f32 %v6202, %v6259
        %v6377 = vmul.f32 %v6203, %v6263
        %v6378 = vmul.f32 %v6204, %v6267
        %v6379 = vmul.f32 %v6205, %v6271
        %v6380 = vmul.f32 %v6206, %v6259
        %v6381 = vmul.f32 %v6207, %v6263
        %v6382 = vmul.f32 %v6208, %v6267
        %v6383 = vmul.f32 %v6209, %v6271
        %v6384 = vmul.f32 %v6210, %v6259
        %v6385 = vmul.f32 %v6211, %v6263
        %v6386 = vmul.f32 %v6212, %v6267
        %v6387 = vmul.f32 %v6213, %v6271
        %v6388 = vmul.f32 %v6214, %v6259
        %v6389 = vmul.f32 %v6215, %v6263
        %v6390 = vmul.f32 %v6216, %v6267
        %v6391 = vmul.f32 %v6217, %v6271
        %v6392 = vmul.f32 %v6218, %v6259
        %v6393 = vmul.f32 %v6219, %v6263
        %v6394 = vmul.f32 %v6220, %v6267
        %v6395 = vmul.f32 %v6221, %v6271
        %v6396 = vmul.f32 %v6222, %v6259
        %v6397 = vmul.f32 %v6223, %v6263
        %v6398 = vmul.f32 %v6224, %v6267
        %v6399 = vmul.f32 %v6225, %v6271
        %v6400 = vmul.f32 %v6226, %v6259
        %v6401 = vmul.f32 %v6227, %v6263
        %v6402 = vmul.f32 %v6228, %v6267
        %v6403 = vmul.f32 %v6229, %v6271
        %v6404 = vmul.f32 %v6230, %v6259
        %v6405 = vmul.f32 %v6231, %v6263
        %v6406 = vmul.f32 %v6232, %v6267
        %v6407 = vmul.f32 %v6233, %v6271
        %v6408 = vmul.f32 %v6234, %v6259
        %v6409 = vmul.f32 %v6235, %v6263
        %v6410 = vmul.f32 %v6236, %v6267
        %v6411 = vmul.f32 %v6237, %v6271
        %v6412 = vmul.f32 %v6238, %v6259
        %v6413 = vmul.f32 %v6239, %v6263
        %v6414 = vmul.f32 %v6240, %v6267
        %v6415 = vmul.f32 %v6241, %v6271
        %v6416 = vmul.f32 %v6242, %v6259
        %v6417 = vmul.f32 %v6243, %v6263
        %v6418 = vmul.f32 %v6244, %v6267
        %v6419 = vmul.f32 %v6245, %v6271
        %v6420 = vmul.f32 %v6246, %v6259
        %v6421 = vmul.f32 %v6247, %v6263
        %v6422 = vmul.f32 %v6248, %v6267
        %v6423 = vmul.f32 %v6249, %v6271
        %v6424 = vmul.f32 %v6250, %v6259
        %v6425 = vmul.f32 %v6251, %v6263
        %v6426 = vmul.f32 %v6252, %v6267
        %v6427 = vmul.f32 %v6253, %v6271
        %v6428 = vadd.f32 %v6276, %v6277
        %v6429 = vadd.f32 %v6428, %v6278
        %v6430 = vadd.f32 %v6429, %v6279
        %6431 = vadd.xlane.f32.xlu0 %v6430
        %v6432 = vpop.xlane.xlu0 %6431
        %v6433 = vadd.f32 %v6280, %v6281
        %v6434 = vadd.f32 %v6433, %v6282
        %v6435 = vadd.f32 %v6434, %v6283
        %6436 = vadd.xlane.f32.xlu0 %v6435
        %v6437 = vpop.xlane.xlu0 %6436
        %v6438 = vadd.f32 %v6284, %v6285
        %v6439 = vadd.f32 %v6438, %v6286
        %v6440 = vadd.f32 %v6439, %v6287
        %6441 = vadd.xlane.f32.xlu0 %v6440
        %v6442 = vpop.xlane.xlu0 %6441
        %v6443 = vadd.f32 %v6288, %v6289
        %v6444 = vadd.f32 %v6443, %v6290
        %v6445 = vadd.f32 %v6444, %v6291
        %6446 = vadd.xlane.f32.xlu0 %v6445
        %v6447 = vpop.xlane.xlu0 %6446
        %v6448 = vadd.f32 %v6292, %v6293
        %v6449 = vadd.f32 %v6448, %v6294
        %v6450 = vadd.f32 %v6449, %v6295
        %6451 = vadd.xlane.f32.xlu0 %v6450
        %v6452 = vpop.xlane.xlu0 %6451
        %v6453 = vadd.f32 %v6296, %v6297
        %v6454 = vadd.f32 %v6453, %v6298
        %v6455 = vadd.f32 %v6454, %v6299
        %6456 = vadd.xlane.f32.xlu0 %v6455
        %v6457 = vpop.xlane.xlu0 %6456
        %v6458 = vadd.f32 %v6300, %v6301
        %v6459 = vadd.f32 %v6458, %v6302
        %v6460 = vadd.f32 %v6459, %v6303
        %6461 = vadd.xlane.f32.xlu0 %v6460
        %v6462 = vpop.xlane.xlu0 %6461
        %v6463 = vadd.f32 %v6304, %v6305
        %v6464 = vadd.f32 %v6463, %v6306
        %v6465 = vadd.f32 %v6464, %v6307
        %6466 = vadd.xlane.f32.xlu0 %v6465
        %v6467 = vpop.xlane.xlu0 %6466
        %v6468 = vadd.f32 %v6308, %v6309
        %v6469 = vadd.f32 %v6468, %v6310
        %v6470 = vadd.f32 %v6469, %v6311
        %6471 = vadd.xlane.f32.xlu0 %v6470
        %v6472 = vpop.xlane.xlu0 %6471
        %v6473 = vadd.f32 %v6312, %v6313
        %v6474 = vadd.f32 %v6473, %v6314
        %v6475 = vadd.f32 %v6474, %v6315
        %6476 = vadd.xlane.f32.xlu0 %v6475
        %v6477 = vpop.xlane.xlu0 %6476
        %v6478 = vadd.f32 %v6316, %v6317
        %v6479 = vadd.f32 %v6478, %v6318
        %v6480 = vadd.f32 %v6479, %v6319
        %6481 = vadd.xlane.f32.xlu0 %v6480
        %v6482 = vpop.xlane.xlu0 %6481
        %v6483 = vadd.f32 %v6320, %v6321
        %v6484 = vadd.f32 %v6483, %v6322
        %v6485 = vadd.f32 %v6484, %v6323
        %6486 = vadd.xlane.f32.xlu0 %v6485
        %v6487 = vpop.xlane.xlu0 %6486
        %v6488 = vadd.f32 %v6324, %v6325
        %v6489 = vadd.f32 %v6488, %v6326
        %v6490 = vadd.f32 %v6489, %v6327
        %6491 = vadd.xlane.f32.xlu0 %v6490
        %v6492 = vpop.xlane.xlu0 %6491
        %v6493 = vadd.f32 %v6328, %v6329
        %v6494 = vadd.f32 %v6493, %v6330
        %v6495 = vadd.f32 %v6494, %v6331
        %6496 = vadd.xlane.f32.xlu0 %v6495
        %v6497 = vpop.xlane.xlu0 %6496
        %v6498 = vadd.f32 %v6332, %v6333
        %v6499 = vadd.f32 %v6498, %v6334
        %v6500 = vadd.f32 %v6499, %v6335
        %6501 = vadd.xlane.f32.xlu0 %v6500
        %v6502 = vpop.xlane.xlu0 %6501
        %v6503 = vadd.f32 %v6336, %v6337
        %v6504 = vadd.f32 %v6503, %v6338
        %v6505 = vadd.f32 %v6504, %v6339
        %6506 = vadd.xlane.f32.xlu0 %v6505
        %v6507 = vpop.xlane.xlu0 %6506
        %v6508 = vadd.f32 %v6340, %v6341
        %v6509 = vadd.f32 %v6508, %v6342
        %v6510 = vadd.f32 %v6509, %v6343
        %6511 = vadd.xlane.f32.xlu0 %v6510
        %v6512 = vpop.xlane.xlu0 %6511
        %v6513 = vadd.f32 %v6344, %v6345
        %v6514 = vadd.f32 %v6513, %v6346
        %v6515 = vadd.f32 %v6514, %v6347
        %6516 = vadd.xlane.f32.xlu0 %v6515
        %v6517 = vpop.xlane.xlu0 %6516
        %v6518 = vadd.f32 %v6348, %v6349
        %v6519 = vadd.f32 %v6518, %v6350
        %v6520 = vadd.f32 %v6519, %v6351
        %6521 = vadd.xlane.f32.xlu0 %v6520
        %v6522 = vpop.xlane.xlu0 %6521
        %v6523 = vadd.f32 %v6352, %v6353
        %v6524 = vadd.f32 %v6523, %v6354
        %v6525 = vadd.f32 %v6524, %v6355
        %6526 = vadd.xlane.f32.xlu0 %v6525
        %v6527 = vpop.xlane.xlu0 %6526
        %v6528 = vadd.f32 %v6356, %v6357
        %v6529 = vadd.f32 %v6528, %v6358
        %v6530 = vadd.f32 %v6529, %v6359
        %6531 = vadd.xlane.f32.xlu0 %v6530
        %v6532 = vpop.xlane.xlu0 %6531
        %v6533 = vadd.f32 %v6360, %v6361
        %v6534 = vadd.f32 %v6533, %v6362
        %v6535 = vadd.f32 %v6534, %v6363
        %6536 = vadd.xlane.f32.xlu0 %v6535
        %v6537 = vpop.xlane.xlu0 %6536
        %v6538 = vadd.f32 %v6364, %v6365
        %v6539 = vadd.f32 %v6538, %v6366
        %v6540 = vadd.f32 %v6539, %v6367
        %6541 = vadd.xlane.f32.xlu0 %v6540
        %v6542 = vpop.xlane.xlu0 %6541
        %v6543 = vadd.f32 %v6368, %v6369
        %v6544 = vadd.f32 %v6543, %v6370
        %v6545 = vadd.f32 %v6544, %v6371
        %6546 = vadd.xlane.f32.xlu0 %v6545
        %v6547 = vpop.xlane.xlu0 %6546
        %v6548 = vadd.f32 %v6372, %v6373
        %v6549 = vadd.f32 %v6548, %v6374
        %v6550 = vadd.f32 %v6549, %v6375
        %6551 = vadd.xlane.f32.xlu0 %v6550
        %v6552 = vpop.xlane.xlu0 %6551
        %v6553 = vadd.f32 %v6376, %v6377
        %v6554 = vadd.f32 %v6553, %v6378
        %v6555 = vadd.f32 %v6554, %v6379
        %6556 = vadd.xlane.f32.xlu0 %v6555
        %v6557 = vpop.xlane.xlu0 %6556
        %v6558 = vadd.f32 %v6380, %v6381
        %v6559 = vadd.f32 %v6558, %v6382
        %v6560 = vadd.f32 %v6559, %v6383
        %6561 = vadd.xlane.f32.xlu0 %v6560
        %v6562 = vpop.xlane.xlu0 %6561
        %v6563 = vadd.f32 %v6384, %v6385
        %v6564 = vadd.f32 %v6563, %v6386
        %v6565 = vadd.f32 %v6564, %v6387
        %6566 = vadd.xlane.f32.xlu0 %v6565
        %v6567 = vpop.xlane.xlu0 %6566
        %v6568 = vadd.f32 %v6388, %v6389
        %v6569 = vadd.f32 %v6568, %v6390
        %v6570 = vadd.f32 %v6569, %v6391
        %6571 = vadd.xlane.f32.xlu0 %v6570
        %v6572 = vpop.xlane.xlu0 %6571
        %v6573 = vadd.f32 %v6392, %v6393
        %v6574 = vadd.f32 %v6573, %v6394
        %v6575 = vadd.f32 %v6574, %v6395
        %6576 = vadd.xlane.f32.xlu0 %v6575
        %v6577 = vpop.xlane.xlu0 %6576
        %v6578 = vadd.f32 %v6396, %v6397
        %v6579 = vadd.f32 %v6578, %v6398
        %v6580 = vadd.f32 %v6579, %v6399
        %6581 = vadd.xlane.f32.xlu0 %v6580
        %v6582 = vpop.xlane.xlu0 %6581
        %v6583 = vadd.f32 %v6400, %v6401
        %v6584 = vadd.f32 %v6583, %v6402
        %v6585 = vadd.f32 %v6584, %v6403
        %6586 = vadd.xlane.f32.xlu0 %v6585
        %v6587 = vpop.xlane.xlu0 %6586
        %v6588 = vadd.f32 %v6404, %v6405
        %v6589 = vadd.f32 %v6588, %v6406
        %v6590 = vadd.f32 %v6589, %v6407
        %6591 = vadd.xlane.f32.xlu0 %v6590
        %v6592 = vpop.xlane.xlu0 %6591
        %v6593 = vadd.f32 %v6408, %v6409
        %v6594 = vadd.f32 %v6593, %v6410
        %v6595 = vadd.f32 %v6594, %v6411
        %6596 = vadd.xlane.f32.xlu0 %v6595
        %v6597 = vpop.xlane.xlu0 %6596
        %v6598 = vadd.f32 %v6412, %v6413
        %v6599 = vadd.f32 %v6598, %v6414
        %v6600 = vadd.f32 %v6599, %v6415
        %6601 = vadd.xlane.f32.xlu0 %v6600
        %v6602 = vpop.xlane.xlu0 %6601
        %v6603 = vadd.f32 %v6416, %v6417
        %v6604 = vadd.f32 %v6603, %v6418
        %v6605 = vadd.f32 %v6604, %v6419
        %6606 = vadd.xlane.f32.xlu0 %v6605
        %v6607 = vpop.xlane.xlu0 %6606
        %v6608 = vadd.f32 %v6420, %v6421
        %v6609 = vadd.f32 %v6608, %v6422
        %v6610 = vadd.f32 %v6609, %v6423
        %6611 = vadd.xlane.f32.xlu0 %v6610
        %v6612 = vpop.xlane.xlu0 %6611
        %v6613 = vadd.f32 %v6424, %v6425
        %v6614 = vadd.f32 %v6613, %v6426
        %v6615 = vadd.f32 %v6614, %v6427
        %6616 = vadd.xlane.f32.xlu0 %v6615
        %v6617 = vpop.xlane.xlu0 %6616
        %v6618 = vld [vmem:[#allocation2] sm:$0x1]
        %v6620 = vlaneseq
        %v6621 = vshrl.u32 %v6620, 7
        %v6622 = vsub.s32 0, %v6621
        %v6623 = vrot.slane %v6618, %v6622
        %v6625 = vadd.f32 %v6432, %v6623
        %v6626 = vadd.f32 %v6437, %v6623
        %v6627 = vadd.f32 %v6442, %v6623
        %v6628 = vadd.f32 %v6447, %v6623
        %v6629 = vadd.f32 %v6452, %v6623
        %v6630 = vadd.f32 %v6457, %v6623
        %v6631 = vadd.f32 %v6462, %v6623
        %v6632 = vadd.f32 %v6467, %v6623
        %v6633 = vadd.f32 %v6472, %v6623
        %v6634 = vadd.f32 %v6477, %v6623
        %v6635 = vadd.f32 %v6482, %v6623
        %v6636 = vadd.f32 %v6487, %v6623
        %v6637 = vadd.f32 %v6492, %v6623
        %v6638 = vadd.f32 %v6497, %v6623
        %v6639 = vadd.f32 %v6502, %v6623
        %v6640 = vadd.f32 %v6507, %v6623
        %v6641 = vadd.f32 %v6512, %v6623
        %v6642 = vadd.f32 %v6517, %v6623
        %v6643 = vadd.f32 %v6522, %v6623
        %v6644 = vadd.f32 %v6527, %v6623
        %v6645 = vadd.f32 %v6532, %v6623
        %v6646 = vadd.f32 %v6537, %v6623
        %v6647 = vadd.f32 %v6542, %v6623
        %v6648 = vadd.f32 %v6547, %v6623
        %v6649 = vadd.f32 %v6552, %v6623
        %v6650 = vadd.f32 %v6557, %v6623
        %v6651 = vadd.f32 %v6562, %v6623
        %v6652 = vadd.f32 %v6567, %v6623
        %v6653 = vadd.f32 %v6572, %v6623
        %v6654 = vadd.f32 %v6577, %v6623
        %v6655 = vadd.f32 %v6582, %v6623
        %v6656 = vadd.f32 %v6587, %v6623
        %v6657 = vadd.f32 %v6592, %v6623
        %v6658 = vadd.f32 %v6597, %v6623
        %v6659 = vadd.f32 %v6602, %v6623
        %v6660 = vadd.f32 %v6607, %v6623
        %v6661 = vadd.f32 %v6612, %v6623
        %v6662 = vadd.f32 %v6617, %v6623
        %vm6663 = vcmask 7168
        %6664 = vst.msk [vmem:[%s427] sm:$0xff] %vm6663, %v6625
        %6665 = vst.msk [vmem:[%s427 + $0x8] sm:$0xff] %vm6663, %v6626
        %6666 = vst.msk [vmem:[%s427 + $0x10] sm:$0xff] %vm6663, %v6627
        %6667 = vst.msk [vmem:[%s427 + $0x18] sm:$0xff] %vm6663, %v6628
        %6668 = vst.msk [vmem:[%s427 + $0x20] sm:$0xff] %vm6663, %v6629
        %6669 = vst.msk [vmem:[%s427 + $0x28] sm:$0xff] %vm6663, %v6630
        %6670 = vst.msk [vmem:[%s427 + $0x30] sm:$0xff] %vm6663, %v6631
        %6671 = vst.msk [vmem:[%s427 + $0x38] sm:$0xff] %vm6663, %v6632
        %6672 = vst.msk [vmem:[%s427 + $0x40] sm:$0xff] %vm6663, %v6633
        %6673 = vst.msk [vmem:[%s427 + $0x48] sm:$0xff] %vm6663, %v6634
        %6674 = vst.msk [vmem:[%s427 + $0x50] sm:$0xff] %vm6663, %v6635
        %6675 = vst.msk [vmem:[%s427 + $0x58] sm:$0xff] %vm6663, %v6636
        %6676 = vst.msk [vmem:[%s427 + $0x60] sm:$0xff] %vm6663, %v6637
        %6677 = vst.msk [vmem:[%s427 + $0x68] sm:$0xff] %vm6663, %v6638
        %6678 = vst.msk [vmem:[%s427 + $0x70] sm:$0xff] %vm6663, %v6639
        %6679 = vst.msk [vmem:[%s427 + $0x78] sm:$0xff] %vm6663, %v6640
        %6680 = vst.msk [vmem:[%s427 + $0x80] sm:$0xff] %vm6663, %v6641
        %6681 = vst.msk [vmem:[%s427 + $0x88] sm:$0xff] %vm6663, %v6642
        %6682 = vst.msk [vmem:[%s427 + $0x90] sm:$0xff] %vm6663, %v6643
        %6683 = vst.msk [vmem:[%s427 + $0x98] sm:$0xff] %vm6663, %v6644
        %6684 = vst.msk [vmem:[%s427 + $0xa0] sm:$0xff] %vm6663, %v6645
        %6685 = vst.msk [vmem:[%s427 + $0xa8] sm:$0xff] %vm6663, %v6646
        %6686 = vst.msk [vmem:[%s427 + $0xb0] sm:$0xff] %vm6663, %v6647
        %6687 = vst.msk [vmem:[%s427 + $0xb8] sm:$0xff] %vm6663, %v6648
        %6688 = vst.msk [vmem:[%s427 + $0xc0] sm:$0xff] %vm6663, %v6649
        %6689 = vst.msk [vmem:[%s427 + $0xc8] sm:$0xff] %vm6663, %v6650
        %6690 = vst.msk [vmem:[%s427 + $0xd0] sm:$0xff] %vm6663, %v6651
        %6691 = vst.msk [vmem:[%s427 + $0xd8] sm:$0xff] %vm6663, %v6652
        %6692 = vst.msk [vmem:[%s427 + $0xe0] sm:$0xff] %vm6663, %v6653
        %6693 = vst.msk [vmem:[%s427 + $0xe8] sm:$0xff] %vm6663, %v6654
        %6694 = vst.msk [vmem:[%s427 + $0xf0] sm:$0xff] %vm6663, %v6655
        %6695 = vst.msk [vmem:[%s427 + $0xf8] sm:$0xff] %vm6663, %v6656
        %6696 = vst.msk [vmem:[%s427 + $0x100] sm:$0xff] %vm6663, %v6657
        %6697 = vst.msk [vmem:[%s427 + $0x108] sm:$0xff] %vm6663, %v6658
        %6698 = vst.msk [vmem:[%s427 + $0x110] sm:$0xff] %vm6663, %v6659
        %6699 = vst.msk [vmem:[%s427 + $0x118] sm:$0xff] %vm6663, %v6660
        %6700 = vst.msk [vmem:[%s427 + $0x120] sm:$0xff] %vm6663, %v6661
        %6701 = vst.msk [vmem:[%s427 + $0x128] sm:$0xff] %vm6663, %v6662
        %s6702 = smul.u32 38, %s25
        %p6703 = scmp.lt.s32.totalorder %s6702, 75
        %s6704 = scalar_select %p6703, %s6702, 75
        %s6705 = smul.addr %s6704, 8
        %s6706 = scalar_lea.vmem %s11, %s6705
        // Predicated region
        $region69: #{tpu_custom_call.1} parent=63 // pred_check
          %p6707 = pneg %p284
        $region70: #{tpu_custom_call.1} parent=63 // pred_check_branch
          %6709 = sbr.rel (%p6707) target = $region72
        $region71: #{tpu_custom_call.1} parent=63 // pred_region
          %s6710 = smul.u32 38, %s25
        $region72: #{tpu_custom_call.1} parent=63 // pred_fallthru
          _
      $region64: #{tpu_custom_call.1} parent=5 // pred_fallthru
        _
      %p6711 = scmp.le.s32.totalorder 2, %s20
      // Predicated region
      $region73: #{tpu_custom_call.1} parent=5 // pred_check
        %p6712 = pneg %p6711
      $region74: #{tpu_custom_call.1} parent=5 // pred_check_branch
        %6714 = sbr.rel (%p6712) target = $region76
      $region75: #{tpu_custom_call.1} parent=5 // pred_region
        %s6715 = ssub.s32 %s20, 2
        // Predicated region
        $region77: #{tpu_custom_call.1} parent=75 // pred_check
          %p6716 = pneg %p290
        $region78: #{tpu_custom_call.1} parent=75 // pred_check_branch
          %6718 = sbr.rel (%p6716) target = $region80
        $region79: #{tpu_custom_call.1} parent=75 // pred_region
          %s6719 = smul.u32 38, %s26
          %p6720 = scmp.lt.s32.totalorder %s6719, 75
          %s6721 = scalar_select %p6720, %s6719, 75
          %s6722 = smul.addr %s6721, 8
          %s6723 = scalar_lea.vmem %s11, %s6722
        $region80: #{tpu_custom_call.1} parent=75 // pred_fallthru
          _
      $region76: #{tpu_custom_call.1} parent=5 // pred_fallthru
        _
    $region6: #{tpu_custom_call.1} parent=1 // loop_footer
      %s24 = sadd.s32 1, %s20
    $region7: #{tpu_custom_call.1} parent=1 // loop_footer_branch
      %19 = sbr.rel target = $region3
    $region8: #{tpu_custom_call.1} parent=1 // loop_exit
      _
    %6724 = vsyncpa [#allocation4], 1
    %s6725 = scalar_lea.sflag [#allocation4], 1
    %6726 = vsyncpa %s6725, 1

</llo_original>
